<compile_context>
chip_gen: v7x
topology: tpu7x:2x2x1
jax: 0.10.0
libtpu: 0.0.40
codegen_flags: <defaults>
</compile_context>

<pallas_src>
import jax
import jax.numpy as jnp
from jax.experimental import pallas as pl
from jax.experimental.pallas import tpu as pltpu


def _round_up(x, m):
    return (x + m - 1) // m * m


def _pick_m_tile(m, tile_max=512):
    """Lane-axis tile: multiple of 128; >=2 grid steps when possible (v7x megacore)."""
    m_pad = _round_up(m, 128)
    if m_pad <= 128:
        return m_pad, m_pad
    tm = max(128, min(tile_max, (m_pad // 2) // 128 * 128))
    return tm, _round_up(m_pad, tm)


def _pick_b_tile(n, tile_max=128):
    """Batch (sublane) tile: multiple of 8; >=2 grid steps when batch is non-trivial."""
    n_pad = _round_up(n, 8)
    if n_pad <= 16:
        return n_pad, n_pad
    tb = max(8, min(tile_max, (n_pad // 2) // 8 * 8))
    return tb, _round_up(n_pad, tb)


# ------------- fused conv3x3(pad=1) + bias + ReLU + maxpool(2,2), channel-major -------------

def _conv_pool_kernel(p_ref, w_ref, b_ref, o_ref):
    # p_ref: (16*Cin, TM) bf16 -- 4x4 input patch per pool cell (columns = pool cells).
    # w_ref: (4*Cout, 16*Cin) bf16 -- 4 pool-phase weight matrices stacked on rows.
    # b_ref: (Cout, 1) f32.  o_ref: (Cout, TM) bf16 (lane-dense: TM is a multiple of 128).
    cout = o_ref.shape[0]
    # One MXU pass: patches stay resident against all 4 phase weights.
    d = jnp.dot(w_ref[...], p_ref[...], preferred_element_type=jnp.float32)   # (4*Cout, TM)
    # maxpool(2,2) = elementwise tree-max over the 4 phase row groups (sublane-aligned slices).
    m = jnp.maximum(jnp.maximum(d[0:cout], d[cout:2 * cout]),
                    jnp.maximum(d[2 * cout:3 * cout], d[3 * cout:]))
    # max_t relu(x_t + b) == relu(max_t x_t + b): bias-add and ReLU are monotonic.
    o_ref[...] = jnp.maximum(m + b_ref[...], 0.0).astype(o_ref.dtype)


def conv3x3_relu_pool(x_cnhw, w4, b, *, tile_m=512):
    """nn.Conv2d(Cin, Cout, 3, padding=1) + ReLU + nn.MaxPool2d(2, 2), channel-major.

    x_cnhw: (Cin, N, H, W) bf16.
    w4:     (4*Cout, 16*Cin) bf16 pool-phase weights (rows = phase-major x Cout,
            cols ordered (r, s, cin) over the 4x4 patch).
    b:      (Cout,) f32.
    Returns (Cout, N, H//2, W//2) bf16.
    """
    Cin, N, H, W = x_cnhw.shape
    K4 = 16 * Cin
    Cout = w4.shape[0] // 4
    Ho, Wo = H // 2, W // 2
    M = N * Ho * Wo

    xp = jnp.pad(x_cnhw, ((0, 0), (0, 0), (1, 1), (1, 1)))
    # Each pool cell (ho, wo) depends on the 4x4 padded-input window starting at
    # (2*ho, 2*wo).  16 strided slices stack straight into (K4, M) -- no transpose.
    # TODO(synk): move this tap gather in-kernel to avoid the 4x HBM duplication.
    taps = jnp.stack(
        [xp[:, :, r::2, s::2][:, :, :Ho, :Wo] for r in range(4) for s in range(4)],
        axis=0)                                   # (16, Cin, N, Ho, Wo)
    patches = taps.reshape(K4, M)                 # rows = (r, s, cin); cols = (n, ho, wo)

    tm, m_pad = _pick_m_tile(M, tile_m)
    if m_pad != M:
        patches = jnp.pad(patches, ((0, 0), (0, m_pad - M)))
    b2 = b.reshape(Cout, 1).astype(jnp.float32)

    flops = 2 * (4 * Cout) * K4 * m_pad
    bytes_accessed = (patches.size + w4.size + Cout * m_pad) * 2 + b2.size * 4

    out = pl.pallas_call(
        _conv_pool_kernel,
        out_shape=jax.ShapeDtypeStruct((Cout, m_pad), jnp.bfloat16),
        grid=(m_pad // tm,),
        in_specs=[
            pl.BlockSpec((K4, tm), lambda i: (0, i)),
            pl.BlockSpec((4 * Cout, K4), lambda i: (0, 0)),
            pl.BlockSpec((Cout, 1), lambda i: (0, 0)),
        ],
        out_specs=pl.BlockSpec((Cout, tm), lambda i: (0, i)),
        compiler_params=pltpu.CompilerParams(
            dimension_semantics=("parallel",),
            vmem_limit_bytes=32 * 1024 * 1024,
        ),
        cost_estimate=pl.CostEstimate(
            flops=flops, transcendentals=0, bytes_accessed=bytes_accessed),
    )(patches, w4, b2)
    return out[:, :M].reshape(Cout, N, Ho, Wo)


# --------------------- fused fc1 + ReLU + (dropout=identity) + fc2 ---------------------

def _mlp_kernel(x_ref, w1_ref, b1_ref, w2_ref, b2_ref, o_ref):
    h = jnp.dot(x_ref[...], w1_ref[...], preferred_element_type=jnp.float32)
    h = jnp.maximum(h + b1_ref[...], 0.0)
    # nn.Dropout(0.5) is identity at inference time.
    o = jnp.dot(h.astype(w2_ref.dtype), w2_ref[...], preferred_element_type=jnp.float32)
    o_ref[...] = (o + b2_ref[...]).astype(o_ref.dtype)


def mlp_fused(x, w1, b1, w2, b2, *, tile_b=128):
    """relu(x @ w1 + b1) @ w2 + b2 in one pallas_call (fc2 pre-padded to 128 lanes)."""
    N, K1 = x.shape
    H1 = w1.shape[1]
    C = w2.shape[1]                      # 128 (padded), lane-dense output
    tb, n_pad = _pick_b_tile(N, tile_b)
    xb = x.astype(jnp.bfloat16)
    if n_pad != N:
        xb = jnp.pad(xb, ((0, n_pad - N), (0, 0)))
    b1r = b1.reshape(1, H1).astype(jnp.float32)
    b2r = b2.reshape(1, C).astype(jnp.float32)

    flops = 2 * n_pad * (K1 * H1 + H1 * C)
    bytes_accessed = (xb.size + w1.size + w2.size) * 2 + (b1r.size + b2r.size + n_pad * C) * 4

    out = pl.pallas_call(
        _mlp_kernel,
        out_shape=jax.ShapeDtypeStruct((n_pad, C), jnp.float32),
        grid=(n_pad // tb,),
        in_specs=[
            pl.BlockSpec((tb, K1), lambda i: (i, 0)),
            pl.BlockSpec((K1, H1), lambda i: (0, 0)),
            pl.BlockSpec((1, H1), lambda i: (0, 0)),
            pl.BlockSpec((H1, C), lambda i: (0, 0)),
            pl.BlockSpec((1, C), lambda i: (0, 0)),
        ],
        out_specs=pl.BlockSpec((tb, C), lambda i: (i, 0)),
        compiler_params=pltpu.CompilerParams(
            dimension_semantics=("parallel",),
            vmem_limit_bytes=32 * 1024 * 1024,
        ),
        cost_estimate=pl.CostEstimate(
            flops=flops, transcendentals=0, bytes_accessed=bytes_accessed),
    )(xb, w1, b1r, w2, b2r)
    return out[:N]                      # (N, 128)


# ------------------------------ params & forward ------------------------------

def init_params(key, num_classes=11):
    """Parameters in the original PyTorch layouts."""
    ks = jax.random.split(key, 8)
    s = 0.05
    return {
        "conv1_w": s * jax.random.normal(ks[0], (32, 1, 3, 3), jnp.float32),
        "conv1_b": s * jax.random.normal(ks[1], (32,), jnp.float32),
        "conv2_w": s * jax.random.normal(ks[2], (64, 32, 3, 3), jnp.float32),
        "conv2_b": s * jax.random.normal(ks[3], (64,), jnp.float32),
        "fc1_w": s * jax.random.normal(ks[4], (128, 64 * 7 * 7), jnp.float32),
        "fc1_b": s * jax.random.normal(ks[5], (128,), jnp.float32),
        "fc2_w": s * jax.random.normal(ks[6], (num_classes, 128), jnp.float32),
        "fc2_b": s * jax.random.normal(ks[7], (num_classes,), jnp.float32),
    }


def prepare_params(p, num_classes=11):
    """One-time layout prep so the forward pass has no per-call weight transposes:
      * conv weights -> 4 pool-phase (Cout, 16*Cin) matrices stacked to (4*Cout, 16*Cin):
        phase (a,b) holds the 3x3 kernel at offset (a,b) inside a 4x4 window (zeros
        elsewhere), so conv + maxpool becomes one GEMM + row-group max in the kernel.
      * fc1 -> (3136, 128); torch's (c,h,w) flatten order is produced natively by the
        channel-major conv pipeline, so no row permutation is needed.
      * fc2 transposed and zero-padded to 128 output columns (lane-dense final store)."""
    def conv_phase_mat(w_oihw):
        cout, cin = w_oihw.shape[0], w_oihw.shape[1]
        w = jnp.transpose(w_oihw, (2, 3, 1, 0))               # (kh, kw, cin, cout)
        mats = []
        for a in range(2):
            for b in range(2):
                w4 = jnp.zeros((4, 4, cin, cout), w.dtype)
                w4 = w4.at[a:a + 3, b:b + 3].set(w)
                mats.append(w4.reshape(16 * cin, cout).T)     # (cout, 16*cin)
        return jnp.concatenate(mats, axis=0).astype(jnp.bfloat16)   # (4*cout, 16*cin)

    fc2_w = jnp.zeros((128, 128), jnp.float32).at[:, :num_classes].set(p["fc2_w"].T)
    fc2_b = jnp.zeros((128,), jnp.float32).at[:num_classes].set(p["fc2_b"])
    return {
        "conv1_w4": conv_phase_mat(p["conv1_w"]), "conv1_b": p["conv1_b"],
        "conv2_w4": conv_phase_mat(p["conv2_w"]), "conv2_b": p["conv2_b"],
        "fc1_w": jnp.transpose(p["fc1_w"]).astype(jnp.bfloat16), "fc1_b": p["fc1_b"],
        "fc2_w": fc2_w.astype(jnp.bfloat16), "fc2_b": fc2_b,
    }


def simple_cnn_forward(x_nchw, prep, num_classes=11):
    # x_nchw: (N, 1, 28, 28) float32 (matches the PyTorch module's input).
    N = x_nchw.shape[0]
    x = jnp.transpose(x_nchw.astype(jnp.bfloat16), (1, 0, 2, 3))     # channel-major (1,N,28,28)
    x = conv3x3_relu_pool(x, prep["conv1_w4"], prep["conv1_b"])      # (32, N, 14, 14) bf16
    x = conv3x3_relu_pool(x, prep["conv2_w4"], prep["conv2_b"])      # (64, N,  7,  7) bf16
    # torch's x.view(-1, 64*7*7) flattens (c, h, w); the conv output is already
    # channel-major, so this is one small (N x 3136) relayout and no fc1 permutation.
    x = jnp.transpose(x.reshape(64, N, 49), (1, 0, 2)).reshape(N, 64 * 49)
    logits = mlp_fused(x, prep["fc1_w"], prep["fc1_b"], prep["fc2_w"], prep["fc2_b"])
    return logits[:, :num_classes]


if __name__ == "__main__":
    key = jax.random.PRNGKey(0)
    k_in, k_p = jax.random.split(key)
    # Smallest shape consistent with fc1 = Linear(64*7*7, 128): 28x28 input, batch=2.
    x = jax.random.normal(k_in, (2, 1, 28, 28), jnp.float32)
    params = init_params(k_p, num_classes=11)
    prep = prepare_params(params, num_classes=11)   # one-time weight layout prep (outside jit)

    fwd = jax.jit(simple_cnn_forward)
    out = jax.block_until_ready(fwd(x, prep))
    assert out.shape == (2, 11), out.shape
    assert out.dtype == jnp.float32
    print("KERNEL_OK")
</pallas_src>

<mosaic_0001>
module attributes {stable_mosaic.version = 11 : i64} {
  func.func @_conv_pool_kernel(%arg0: i32, %arg1: memref<16x256xbf16, #tpu.memory_space<vmem>>, %arg2: memref<128x16xbf16, #tpu.memory_space<vmem>>, %arg3: memref<32x1xf32, #tpu.memory_space<vmem>>, %arg4: memref<32x256xbf16, #tpu.memory_space<vmem>>) attributes {dimension_semantics = [#tpu.dimension_semantics<parallel>], iteration_bounds = array<i64: 2>, scalar_prefetch = 0 : i64, scratch_operands = 0 : i64, tpu.core_type = #tpu.core_type<tc>, window_params = [{transform_indices = @transform_0, window_bounds = array<i64: 16, 256>}, {pipeline_mode = #tpu.pipeline_mode<synchronous>, transform_indices = @transform_1, window_bounds = array<i64: 128, 16>}, {pipeline_mode = #tpu.pipeline_mode<synchronous>, transform_indices = @transform_2, window_bounds = array<i64: 32, 1>}, {transform_indices = @transform_3, window_bounds = array<i64: 32, 256>}]} {
    %c0 = arith.constant 0 : index
    %c0_0 = arith.constant 0 : index
    %0 = vector.load %arg2[%c0, %c0_0] : memref<128x16xbf16, #tpu.memory_space<vmem>>, vector<128x16xbf16>
    %c0_1 = arith.constant 0 : index
    %c0_2 = arith.constant 0 : index
    %1 = vector.load %arg1[%c0_1, %c0_2] : memref<16x256xbf16, #tpu.memory_space<vmem>>, vector<16x256xbf16>
    %cst = arith.constant dense<0.000000e+00> : vector<128x256xf32>
    %2 = tpu.matmul %0, %1, %cst {dimension_numbers = #tpu.dot_dimension_numbers<[1], [0], [0], [1], [0, 0, 1, 1], [], []>} : vector<128x16xbf16>, vector<16x256xbf16>, vector<128x256xf32> -> vector<128x256xf32>
    %3 = vector.extract_strided_slice %2 {offsets = [0, 0], sizes = [32, 256], strides = [1, 1]} : vector<128x256xf32> to vector<32x256xf32>
    %4 = vector.extract_strided_slice %2 {offsets = [32, 0], sizes = [32, 256], strides = [1, 1]} : vector<128x256xf32> to vector<32x256xf32>
    %5 = arith.maximumf %3, %4 : vector<32x256xf32>
    %6 = vector.extract_strided_slice %2 {offsets = [64, 0], sizes = [32, 256], strides = [1, 1]} : vector<128x256xf32> to vector<32x256xf32>
    %7 = vector.extract_strided_slice %2 {offsets = [96, 0], sizes = [32, 256], strides = [1, 1]} : vector<128x256xf32> to vector<32x256xf32>
    %8 = arith.maximumf %6, %7 : vector<32x256xf32>
    %9 = arith.maximumf %5, %8 : vector<32x256xf32>
    %c0_3 = arith.constant 0 : index
    %c0_4 = arith.constant 0 : index
    %10 = vector.load %arg3[%c0_3, %c0_4] : memref<32x1xf32, #tpu.memory_space<vmem>>, vector<32x1xf32>
    %11 = vector.broadcast %10 : vector<32x1xf32> to vector<32x256xf32>
    %12 = arith.addf %9, %11 : vector<32x256xf32>
    %cst_5 = arith.constant 0.000000e+00 : f32
    %13 = vector.broadcast %cst_5 : f32 to vector<32x256xf32>
    %14 = arith.maximumf %12, %13 : vector<32x256xf32>
    %15 = arith.truncf %14 : vector<32x256xf32> to vector<32x256xbf16>
    %c0_6 = arith.constant 0 : index
    %c0_7 = arith.constant 0 : index
    %16 = vector.load %arg4[%c0_6, %c0_7] : memref<32x256xbf16, #tpu.memory_space<vmem>>, vector<32x256xbf16>
    tpu.vector_store %arg4[%c0_6, %c0_7], %15 {strides = array<i32>} : memref<32x256xbf16, #tpu.memory_space<vmem>>, vector<32x256xbf16>,
    return
  }
  func.func @transform_0(%arg0: i32) -> (i32, i32) {
    %c0_i32 = arith.constant 0 : i32
    %c0_i32_0 = arith.constant 0 : i32
    return %c0_i32, %arg0 : i32, i32
  }
  func.func @transform_1(%arg0: i32) -> (i32, i32) {
    %c0_i32 = arith.constant 0 : i32
    %c0_i32_0 = arith.constant 0 : i32
    %c0_i32_1 = arith.constant 0 : i32
    return %c0_i32, %c0_i32_0 : i32, i32
  }
  func.func @transform_2(%arg0: i32) -> (i32, i32) {
    %c0_i32 = arith.constant 0 : i32
    %c0_i32_0 = arith.constant 0 : i32
    %c0_i32_1 = arith.constant 0 : i32
    return %c0_i32, %c0_i32_0 : i32, i32
  }
  func.func @transform_3(%arg0: i32) -> (i32, i32) {
    %c0_i32 = arith.constant 0 : i32
    %c0_i32_0 = arith.constant 0 : i32
    return %c0_i32, %arg0 : i32, i32
  }
}

module attributes {stable_mosaic.version = 11 : i64} {
  func.func @_conv_pool_kernel(%arg0: i32, %arg1: memref<512x128xbf16, #tpu.memory_space<vmem>>, %arg2: memref<256x512xbf16, #tpu.memory_space<vmem>>, %arg3: memref<64x1xf32, #tpu.memory_space<vmem>>, %arg4: memref<64x128xbf16, #tpu.memory_space<vmem>>) attributes {dimension_semantics = [#tpu.dimension_semantics<parallel>], iteration_bounds = array<i64: 1>, scalar_prefetch = 0 : i64, scratch_operands = 0 : i64, tpu.core_type = #tpu.core_type<tc>, window_params = [{transform_indices = @transform_0, window_bounds = array<i64: 512, 128>}, {pipeline_mode = #tpu.pipeline_mode<synchronous>, transform_indices = @transform_1, window_bounds = array<i64: 256, 512>}, {pipeline_mode = #tpu.pipeline_mode<synchronous>, transform_indices = @transform_2, window_bounds = array<i64: 64, 1>}, {transform_indices = @transform_3, window_bounds = array<i64: 64, 128>}]} {
    %c0 = arith.constant 0 : index
    %c0_0 = arith.constant 0 : index
    %0 = vector.load %arg2[%c0, %c0_0] : memref<256x512xbf16, #tpu.memory_space<vmem>>, vector<256x512xbf16>
    %c0_1 = arith.constant 0 : index
    %c0_2 = arith.constant 0 : index
    %1 = vector.load %arg1[%c0_1, %c0_2] : memref<512x128xbf16, #tpu.memory_space<vmem>>, vector<512x128xbf16>
    %cst = arith.constant dense<0.000000e+00> : vector<256x128xf32>
    %2 = tpu.matmul %0, %1, %cst {dimension_numbers = #tpu.dot_dimension_numbers<[1], [0], [0], [1], [0, 0, 1, 1], [], []>} : vector<256x512xbf16>, vector<512x128xbf16>, vector<256x128xf32> -> vector<256x128xf32>
    %3 = vector.extract_strided_slice %2 {offsets = [0, 0], sizes = [64, 128], strides = [1, 1]} : vector<256x128xf32> to vector<64x128xf32>
    %4 = vector.extract_strided_slice %2 {offsets = [64, 0], sizes = [64, 128], strides = [1, 1]} : vector<256x128xf32> to vector<64x128xf32>
    %5 = arith.maximumf %3, %4 : vector<64x128xf32>
    %6 = vector.extract_strided_slice %2 {offsets = [128, 0], sizes = [64, 128], strides = [1, 1]} : vector<256x128xf32> to vector<64x128xf32>
    %7 = vector.extract_strided_slice %2 {offsets = [192, 0], sizes = [64, 128], strides = [1, 1]} : vector<256x128xf32> to vector<64x128xf32>
    %8 = arith.maximumf %6, %7 : vector<64x128xf32>
    %9 = arith.maximumf %5, %8 : vector<64x128xf32>
    %c0_3 = arith.constant 0 : index
    %c0_4 = arith.constant 0 : index
    %10 = vector.load %arg3[%c0_3, %c0_4] : memref<64x1xf32, #tpu.memory_space<vmem>>, vector<64x1xf32>
    %11 = vector.broadcast %10 : vector<64x1xf32> to vector<64x128xf32>
    %12 = arith.addf %9, %11 : vector<64x128xf32>
    %cst_5 = arith.constant 0.000000e+00 : f32
    %13 = vector.broadcast %cst_5 : f32 to vector<64x128xf32>
    %14 = arith.maximumf %12, %13 : vector<64x128xf32>
    %15 = arith.truncf %14 : vector<64x128xf32> to vector<64x128xbf16>
    %c0_6 = arith.constant 0 : index
    %c0_7 = arith.constant 0 : index
    %16 = vector.load %arg4[%c0_6, %c0_7] : memref<64x128xbf16, #tpu.memory_space<vmem>>, vector<64x128xbf16>
    tpu.vector_store %arg4[%c0_6, %c0_7], %15 {strides = array<i32>} : memref<64x128xbf16, #tpu.memory_space<vmem>>, vector<64x128xbf16>,
    return
  }
  func.func @transform_0(%arg0: i32) -> (i32, i32) {
    %c0_i32 = arith.constant 0 : i32
    %c0_i32_0 = arith.constant 0 : i32
    return %c0_i32, %arg0 : i32, i32
  }
  func.func @transform_1(%arg0: i32) -> (i32, i32) {
    %c0_i32 = arith.constant 0 : i32
    %c0_i32_0 = arith.constant 0 : i32
    %c0_i32_1 = arith.constant 0 : i32
    return %c0_i32, %c0_i32_0 : i32, i32
  }
  func.func @transform_2(%arg0: i32) -> (i32, i32) {
    %c0_i32 = arith.constant 0 : i32
    %c0_i32_0 = arith.constant 0 : i32
    %c0_i32_1 = arith.constant 0 : i32
    return %c0_i32, %c0_i32_0 : i32, i32
  }
  func.func @transform_3(%arg0: i32) -> (i32, i32) {
    %c0_i32 = arith.constant 0 : i32
    %c0_i32_0 = arith.constant 0 : i32
    return %c0_i32, %arg0 : i32, i32
  }
}

module attributes {stable_mosaic.version = 11 : i64} {
  func.func @_mlp_kernel(%arg0: i32, %arg1: memref<8x3136xbf16, #tpu.memory_space<vmem>>, %arg2: memref<3136x128xbf16, #tpu.memory_space<vmem>>, %arg3: memref<1x128xf32, #tpu.memory_space<vmem>>, %arg4: memref<128x128xbf16, #tpu.memory_space<vmem>>, %arg5: memref<1x128xf32, #tpu.memory_space<vmem>>, %arg6: memref<8x128xf32, #tpu.memory_space<vmem>>) attributes {dimension_semantics = [#tpu.dimension_semantics<parallel>], iteration_bounds = array<i64: 1>, scalar_prefetch = 0 : i64, scratch_operands = 0 : i64, tpu.core_type = #tpu.core_type<tc>, window_params = [{transform_indices = @transform_0, window_bounds = array<i64: 8, 3136>}, {pipeline_mode = #tpu.pipeline_mode<synchronous>, transform_indices = @transform_1, window_bounds = array<i64: 3136, 128>}, {pipeline_mode = #tpu.pipeline_mode<synchronous>, transform_indices = @transform_2, window_bounds = array<i64: 1, 128>}, {pipeline_mode = #tpu.pipeline_mode<synchronous>, transform_indices = @transform_3, window_bounds = array<i64: 128, 128>}, {pipeline_mode = #tpu.pipeline_mode<synchronous>, transform_indices = @transform_4, window_bounds = array<i64: 1, 128>}, {transform_indices = @transform_5, window_bounds = array<i64: 8, 128>}]} {
    %c0 = arith.constant 0 : index
    %c0_0 = arith.constant 0 : index
    %0 = vector.load %arg1[%c0, %c0_0] : memref<8x3136xbf16, #tpu.memory_space<vmem>>, vector<8x3136xbf16>
    %c0_1 = arith.constant 0 : index
    %c0_2 = arith.constant 0 : index
    %1 = vector.load %arg2[%c0_1, %c0_2] : memref<3136x128xbf16, #tpu.memory_space<vmem>>, vector<3136x128xbf16>
    %cst = arith.constant dense<0.000000e+00> : vector<8x128xf32>
    %2 = tpu.matmul %0, %1, %cst {dimension_numbers = #tpu.dot_dimension_numbers<[1], [0], [0], [1], [0, 0, 1, 1], [], []>} : vector<8x3136xbf16>, vector<3136x128xbf16>, vector<8x128xf32> -> vector<8x128xf32>
    %c0_3 = arith.constant 0 : index
    %c0_4 = arith.constant 0 : index
    %3 = vector.load %arg3[%c0_3, %c0_4] : memref<1x128xf32, #tpu.memory_space<vmem>>, vector<1x128xf32>
    %4 = vector.broadcast %3 : vector<1x128xf32> to vector<8x128xf32>
    %5 = arith.addf %2, %4 : vector<8x128xf32>
    %cst_5 = arith.constant 0.000000e+00 : f32
    %6 = vector.broadcast %cst_5 : f32 to vector<8x128xf32>
    %7 = arith.maximumf %5, %6 : vector<8x128xf32>
    %8 = arith.truncf %7 : vector<8x128xf32> to vector<8x128xbf16>
    %c0_6 = arith.constant 0 : index
    %c0_7 = arith.constant 0 : index
    %9 = vector.load %arg4[%c0_6, %c0_7] : memref<128x128xbf16, #tpu.memory_space<vmem>>, vector<128x128xbf16>
    %cst_8 = arith.constant dense<0.000000e+00> : vector<8x128xf32>
    %10 = tpu.matmul %8, %9, %cst_8 {dimension_numbers = #tpu.dot_dimension_numbers<[1], [0], [0], [1], [0, 0, 1, 1], [], []>} : vector<8x128xbf16>, vector<128x128xbf16>, vector<8x128xf32> -> vector<8x128xf32>
    %c0_9 = arith.constant 0 : index
    %c0_10 = arith.constant 0 : index
    %11 = vector.load %arg5[%c0_9, %c0_10] : memref<1x128xf32, #tpu.memory_space<vmem>>, vector<1x128xf32>
    %12 = vector.broadcast %11 : vector<1x128xf32> to vector<8x128xf32>
    %13 = arith.addf %10, %12 : vector<8x128xf32>
    %c0_11 = arith.constant 0 : index
    %c0_12 = arith.constant 0 : index
    %14 = vector.load %arg6[%c0_11, %c0_12] : memref<8x128xf32, #tpu.memory_space<vmem>>, vector<8x128xf32>
    tpu.vector_store %arg6[%c0_11, %c0_12], %13 {strides = array<i32>} : memref<8x128xf32, #tpu.memory_space<vmem>>, vector<8x128xf32>,
    return
  }
  func.func @transform_0(%arg0: i32) -> (i32, i32) {
    %c0_i32 = arith.constant 0 : i32
    %c0_i32_0 = arith.constant 0 : i32
    return %arg0, %c0_i32 : i32, i32
  }
  func.func @transform_1(%arg0: i32) -> (i32, i32) {
    %c0_i32 = arith.constant 0 : i32
    %c0_i32_0 = arith.constant 0 : i32
    %c0_i32_1 = arith.constant 0 : i32
    return %c0_i32, %c0_i32_0 : i32, i32
  }
  func.func @transform_2(%arg0: i32) -> (i32, i32) {
    %c0_i32 = arith.constant 0 : i32
    %c0_i32_0 = arith.constant 0 : i32
    %c0_i32_1 = arith.constant 0 : i32
    return %c0_i32, %c0_i32_0 : i32, i32
  }
  func.func @transform_3(%arg0: i32) -> (i32, i32) {
    %c0_i32 = arith.constant 0 : i32
    %c0_i32_0 = arith.constant 0 : i32
    %c0_i32_1 = arith.constant 0 : i32
    return %c0_i32, %c0_i32_0 : i32, i32
  }
  func.func @transform_4(%arg0: i32) -> (i32, i32) {
    %c0_i32 = arith.constant 0 : i32
    %c0_i32_0 = arith.constant 0 : i32
    %c0_i32_1 = arith.constant 0 : i32
    return %c0_i32, %c0_i32_0 : i32, i32
  }
  func.func @transform_5(%arg0: i32) -> (i32, i32) {
    %c0_i32 = arith.constant 0 : i32
    %c0_i32_0 = arith.constant 0 : i32
    return %arg0, %c0_i32 : i32, i32
  }
}

</mosaic_0001>

<llo_original>
// kernel: simple_cnn_forward.3
$region0: #{simple_cnn_forward.3}
  #allocation0 [shape = 'u32[]', space=smem, size = 0x4, offset = 0x4, fixed_abs, tag = 'smem constant byte address 0x4 - core index']
  #allocation1 [shape = 'u32[144,128]{1,0:T(1,128)}', space=vmem, size = 0x12000, scoped, tag = 'internal scratch']
  %s0 = inlined_call_operand.vmem [shape: bf16[16,512], index: 0, kind: input, shape index: {}]
  %s1 = inlined_call_operand.vmem [shape: bf16[128,16], index: 1, kind: input, shape index: {}]
  %s2 = inlined_call_operand.vmem [shape: f32[32,1], index: 2, kind: input, shape index: {}]
  %s3 = inlined_call_operand.vmem [shape: bf16[32,512], index: 3, kind: output, shape index: {}]
  %s4 = sld [smem:[#allocation0]]
  $region117: #{simple_cnn_forward.3} parent=0
    _
  %s6 = ssub.s32 1, %s4
  %s7 = scalar_select 0, %s6, %s4
  $region1: #{simple_cnn_forward.3} parent=0
    #allocation2 [shape = 'u8[16384]{0}', space=vmem, size = 0x4000, scoped, tag = 'input window, operand 0']
    #allocation3 [shape = 'u8[32768]{0}', space=vmem, size = 0x8000, scoped, tag = 'output window, operand 0']
    loop: start=0, step=1, limit=4
    $region2: #{simple_cnn_forward.3} parent=1 // loop_pre_header
      _
    $region3: #{simple_cnn_forward.3} parent=1 // loop_header
      %s9 = sphi 0, %s13
      %p10 = scmp.ge.s32.totalorder %s9, 4
      %s19 = sphi 0, %s21
      %s22 = sphi 0, %s19
      %s23 = sphi 0, %s22
      %s39 = sphi 0, %s23
      %s43 = sphi 0, %s43
      %s45 = sphi 0, %s43
      %s46 = sphi 0, %s45
      %s60 = sphi 0, %s46
      %s64 = sphi 0, %s64
      %s66 = sphi 0, %s64
      %s67 = sphi 0, %s66
      %s81 = sphi 0, %s67
      %s87 = sphi 0, %s89
      %s90 = sphi 0, %s87
      %s91 = sphi 0, %s90
      %s107 = sphi 0, %s91
    $region4: #{simple_cnn_forward.3} parent=1 // loop_header_branch
      %12 = sbr.rel (%p10) target = $region8
    $region5: #{simple_cnn_forward.3} parent=1 // loop_body
      %s14 = ssub.s32 %s9, 1
      %s15 = ssub.s32 %s9, 2
      %s16 = sadd.s32 %s9, 1
      %s17 = ssub.s32 %s9, %s16
      %p18 = scmp.eq.s32.totalorder %s17, 0
      %s20 = sadd.s32 %s19, 1
      %s21 = scalar_select %p18, %s19, %s20
      %p24 = pneg %p18
      %p25 = scmp.eq.s32.totalorder %s9, 1
      %p26 = por %p24, %p25
      %p27 = scmp.ne.s32.totalorder %s19, %s22
      %p28 = scmp.eq.s32.totalorder %s9, 0
      %p29 = por %p27, %p28
      %p30 = scmp.ne.s32.totalorder %s19, %s22
      %p31 = scmp.eq.s32.totalorder %s14, 1
      %p32 = por %p30, %p31
      %p33 = scmp.ne.s32.totalorder %s22, %s23
      %p34 = scmp.eq.s32.totalorder %s14, 0
      %p35 = por %p33, %p34
      %p36 = scmp.ne.s32.totalorder %s22, %s23
      %p37 = scmp.eq.s32.totalorder %s15, 1
      %p38 = por %p36, %p37
      %p40 = scmp.ne.s32.totalorder %s23, %s39
      %p41 = scmp.eq.s32.totalorder %s15, 0
      %p42 = por %p40, %p41
      %s44 = sadd.s32 %s43, 1
      %p47 = scmp.eq.s32.totalorder %s9, 1
      %p48 = scmp.ne.s32.totalorder %s43, %s45
      %p49 = scmp.eq.s32.totalorder %s9, 0
      %p50 = por %p48, %p49
      %p51 = scmp.ne.s32.totalorder %s43, %s45
      %p52 = scmp.eq.s32.totalorder %s14, 1
      %p53 = por %p51, %p52
      %p54 = scmp.ne.s32.totalorder %s45, %s46
      %p55 = scmp.eq.s32.totalorder %s14, 0
      %p56 = por %p54, %p55
      %p57 = scmp.ne.s32.totalorder %s45, %s46
      %p58 = scmp.eq.s32.totalorder %s15, 1
      %p59 = por %p57, %p58
      %p61 = scmp.ne.s32.totalorder %s46, %s60
      %p62 = scmp.eq.s32.totalorder %s15, 0
      %p63 = por %p61, %p62
      %s65 = sadd.s32 %s64, 1
      %p68 = scmp.eq.s32.totalorder %s9, 1
      %p69 = scmp.ne.s32.totalorder %s64, %s66
      %p70 = scmp.eq.s32.totalorder %s9, 0
      %p71 = por %p69, %p70
      %p72 = scmp.ne.s32.totalorder %s64, %s66
      %p73 = scmp.eq.s32.totalorder %s14, 1
      %p74 = por %p72, %p73
      %p75 = scmp.ne.s32.totalorder %s66, %s67
      %p76 = scmp.eq.s32.totalorder %s14, 0
      %p77 = por %p75, %p76
      %p78 = scmp.ne.s32.totalorder %s66, %s67
      %p79 = scmp.eq.s32.totalorder %s15, 1
      %p80 = por %p78, %p79
      %p82 = scmp.ne.s32.totalorder %s67, %s81
      %p83 = scmp.eq.s32.totalorder %s15, 0
      %p84 = por %p82, %p83
      %s85 = ssub.s32 %s9, %s16
      %p86 = scmp.eq.s32.totalorder %s85, 0
      %s88 = sadd.s32 %s87, 1
      %s89 = scalar_select %p86, %s87, %s88
      %p92 = pneg %p86
      %p93 = scmp.eq.s32.totalorder %s9, 1
      %p94 = por %p92, %p93
      %p95 = scmp.ne.s32.totalorder %s87, %s90
      %p96 = scmp.eq.s32.totalorder %s9, 0
      %p97 = por %p95, %p96
      %p98 = scmp.ne.s32.totalorder %s87, %s90
      %p99 = scmp.eq.s32.totalorder %s14, 1
      %p100 = por %p98, %p99
      %p101 = scmp.ne.s32.totalorder %s90, %s91
      %p102 = scmp.eq.s32.totalorder %s14, 0
      %p103 = por %p101, %p102
      %p104 = scmp.ne.s32.totalorder %s90, %s91
      %p105 = scmp.eq.s32.totalorder %s15, 1
      %p106 = por %p104, %p105
      %p108 = scmp.ne.s32.totalorder %s91, %s107
      %p109 = scmp.eq.s32.totalorder %s15, 0
      %p110 = por %p108, %p109
      %p111 = scmp.le.s32.totalorder 1, %s9
      %p112 = scmp.lt.s32.totalorder %s9, 3
      %p113 = pnand %p111, %p112
      %p114 = pneg %p113
      // Predicated region
      $region9: #{simple_cnn_forward.3} parent=5 // pred_check
        _
      $region10: #{simple_cnn_forward.3} parent=5 // pred_check_branch
        %116 = sbr.rel (%p113) target = $region12
      $region11: #{simple_cnn_forward.3} parent=5 // pred_region
        %s117 = ssub.s32 %s9, 1
        // Predicated region
        $region13: #{simple_cnn_forward.3} parent=11 // pred_check
          %p118 = pneg %p56
        $region14: #{simple_cnn_forward.3} parent=11 // pred_check_branch
          %120 = sbr.rel (%p118) target = $region16
        $region15: #{simple_cnn_forward.3} parent=11 // pred_region
          _
        $region16: #{simple_cnn_forward.3} parent=11 // pred_fallthru
          _
        // Predicated region
        $region17: #{simple_cnn_forward.3} parent=11 // pred_check
          %p121 = pneg %p77
        $region18: #{simple_cnn_forward.3} parent=11 // pred_check_branch
          %123 = sbr.rel (%p121) target = $region20
        $region19: #{simple_cnn_forward.3} parent=11 // pred_region
          _
        $region20: #{simple_cnn_forward.3} parent=11 // pred_fallthru
          _
      $region12: #{simple_cnn_forward.3} parent=5 // pred_fallthru
        _
      %p124 = scmp.lt.s32.totalorder %s9, 2
      // Predicated region
      $region21: #{simple_cnn_forward.3} parent=5 // pred_check
        %p125 = pneg %p124
      $region22: #{simple_cnn_forward.3} parent=5 // pred_check_branch
        %127 = sbr.rel (%p125) target = $region24
      $region23: #{simple_cnn_forward.3} parent=5 // pred_region
        // Predicated region
        $region25: #{simple_cnn_forward.3} parent=23 // pred_check
          %p128 = pneg %p29
        $region26: #{simple_cnn_forward.3} parent=23 // pred_check_branch
          %130 = sbr.rel (%p128) target = $region28
        $region27: #{simple_cnn_forward.3} parent=23 // pred_region
          %s131 = sand.u32 %s19, 1
          %s132 = sand.u32 %s19, 1
          %s133 = smul.addr %s132, 16
          %s134 = scalar_lea.vmem [#allocation2], %s133
          %s135 = smul.u32 2, %s9
          %s136 = smul.addr %s135, 4
          %s137 = scalar_lea.vmem %s0, %s136
          // Predicated region
          $region29: #{simple_cnn_forward.3} parent=27 // pred_check
            _
          $region30: #{simple_cnn_forward.3} parent=27 // pred_check_branch
            %139 = sbr.rel (0) target = $region32
          $region31: #{simple_cnn_forward.3} parent=27 // pred_region
            // Predicated region
            $region33: #{simple_cnn_forward.3} parent=31 // pred_check
              _
            $region34: #{simple_cnn_forward.3} parent=31 // pred_check_branch
              %141 = sbr.rel (0) target = $region36
            $region35: #{simple_cnn_forward.3} parent=31 // pred_region
              // Predicated region
              $region48: #{simple_cnn_forward.3} parent=35 // pred_check
                _
              $region49: #{simple_cnn_forward.3} parent=35 // pred_check_branch
                %158 = sbr.rel (0) target = $region51
              $region50: #{simple_cnn_forward.3} parent=35 // pred_region
                loop: start=0, step=1, limit=1
                $region52: #{simple_cnn_forward.3} parent=50 // loop_pre_header
                  _
                $region53: #{simple_cnn_forward.3} parent=50 // loop_header
                  %s160 = sphi 0, %s164
                  %p161 = scmp.ge.s32.totalorder %s160, 1
                  %s165 = sphi %s137, %s137
                  %s166 = sphi %s134, %s134
                $region54: #{simple_cnn_forward.3} parent=50 // loop_header_branch
                  %163 = sbr.rel (%p161) target = $region58
                $region55: #{simple_cnn_forward.3} parent=50 // loop_body
                  %v167 = vld [vmem:[%s165] sm:$0xff]
                  %168 = vst [vmem:[%s166] sm:$0xff] %v167
                  %v169 = vld [vmem:[%s165 + $0x10] sm:$0xff]
                  %170 = vst [vmem:[%s166 + $0x8] sm:$0xff] %v169
                $region56: #{simple_cnn_forward.3} parent=50 // loop_footer
                  %s164 = sadd.s32 1, %s160
                $region57: #{simple_cnn_forward.3} parent=50 // loop_footer_branch
                  %159 = sbr.rel target = $region53
                $region58: #{simple_cnn_forward.3} parent=50 // loop_exit
                  _
              $region51: #{simple_cnn_forward.3} parent=35 // pred_fallthru
                _
              // Predicated region
              $region59: #{simple_cnn_forward.3} parent=35 // pred_check
                _
              $region60: #{simple_cnn_forward.3} parent=35 // pred_check_branch
                %172 = sbr.rel target = $region62
              $region61: #{simple_cnn_forward.3} parent=35 // pred_region
                _
              $region62: #{simple_cnn_forward.3} parent=35 // pred_fallthru
                _
            $region36: #{simple_cnn_forward.3} parent=31 // pred_fallthru
              _
            // Predicated region
            $region37: #{simple_cnn_forward.3} parent=31 // pred_check
              _
            $region38: #{simple_cnn_forward.3} parent=31 // pred_check_branch
              %143 = sbr.rel target = $region40
            $region39: #{simple_cnn_forward.3} parent=31 // pred_region
              loop: start=0, step=1, limit=1
              $region41: #{simple_cnn_forward.3} parent=39 // loop_pre_header
                _
              $region42: #{simple_cnn_forward.3} parent=39 // loop_header
                %s146 = sphi 0, %s150
                %p147 = scmp.ge.s32.totalorder %s146, 1
                %s151 = sphi %s137, %s137
                %s152 = sphi %s134, %s134
              $region43: #{simple_cnn_forward.3} parent=39 // loop_header_branch
                %149 = sbr.rel (%p147) target = $region47
              $region44: #{simple_cnn_forward.3} parent=39 // loop_body
                %v153 = vld [vmem:[%s151] sm:$0xff]
                %154 = vst [vmem:[%s152] sm:$0xff] %v153
                %v155 = vld [vmem:[%s151 + $0x10] sm:$0xff]
                %156 = vst [vmem:[%s152 + $0x8] sm:$0xff] %v155
              $region45: #{simple_cnn_forward.3} parent=39 // loop_footer
                %s150 = sadd.s32 1, %s146
              $region46: #{simple_cnn_forward.3} parent=39 // loop_footer_branch
                %145 = sbr.rel target = $region42
              $region47: #{simple_cnn_forward.3} parent=39 // loop_exit
                _
            $region40: #{simple_cnn_forward.3} parent=31 // pred_fallthru
              _
          $region32: #{simple_cnn_forward.3} parent=27 // pred_fallthru
            _
          %173 = vnop
        $region28: #{simple_cnn_forward.3} parent=23 // pred_fallthru
          _
      $region24: #{simple_cnn_forward.3} parent=5 // pred_fallthru
        _
      %p174 = scmp.le.s32.totalorder 1, %s9
      %p175 = scmp.lt.s32.totalorder %s9, 3
      %p176 = pnand %p174, %p175
      %p177 = pneg %p176
      // Predicated region
      $region63: #{simple_cnn_forward.3} parent=5 // pred_check
        _
      $region64: #{simple_cnn_forward.3} parent=5 // pred_check_branch
        %179 = sbr.rel (%p176) target = $region66
      $region65: #{simple_cnn_forward.3} parent=5 // pred_region
        %s180 = ssub.s32 %s9, 1
        %s181 = sand.u32 %s22, 1
        %s182 = sand.u32 %s22, 1
        %s183 = smul.addr %s182, 16
        %s184 = scalar_lea.vmem [#allocation2], %s183
        // Predicated region
        $region67: #{simple_cnn_forward.3} parent=65 // pred_check
          %p185 = pneg %p35
        $region68: #{simple_cnn_forward.3} parent=65 // pred_check_branch
          %187 = sbr.rel (%p185) target = $region70
        $region69: #{simple_cnn_forward.3} parent=65 // pred_region
          _
        $region70: #{simple_cnn_forward.3} parent=65 // pred_fallthru
          _
        %s188 = sand.u32 %s22, 1
        %s189 = sand.u32 %s22, 1
        %s190 = smul.addr %s189, 16
        %s191 = scalar_lea.vmem [#allocation2], %s190
        %p192 = pneg %p35
        %p193 = pneg %p32
        %p194 = pneg %p56
        %p195 = pneg %p53
        %p196 = pneg %p77
        %p197 = pneg %p74
        %p198 = pneg %p103
        %p199 = pneg %p100
        %s200 = sand.u32 %s90, 1
        %s201 = sand.u32 %s90, 1
        %s202 = smul.addr %s201, 32
        %s203 = scalar_lea.vmem [#allocation3], %s202
        %s204 = smul.u32 2, %s14
        %s205 = smul.u32 2, %s14
        %v207 = vld [vmem:[%s1] sm:$0xf]
        %v208 = vld [vmem:[%s1 + $0x4] sm:$0xf]
        %v209 = vld [vmem:[%s1 + $0x8] sm:$0xf]
        %v210 = vld [vmem:[%s1 + $0xc] sm:$0xf]
        %v211 = vld [vmem:[%s1 + $0x10] sm:$0xf]
        %v212 = vld [vmem:[%s1 + $0x14] sm:$0xf]
        %v213 = vld [vmem:[%s1 + $0x18] sm:$0xf]
        %v214 = vld [vmem:[%s1 + $0x1c] sm:$0xf]
        %v215 = vld [vmem:[%s1 + $0x20] sm:$0xf]
        %v216 = vld [vmem:[%s1 + $0x24] sm:$0xf]
        %v217 = vld [vmem:[%s1 + $0x28] sm:$0xf]
        %v218 = vld [vmem:[%s1 + $0x2c] sm:$0xf]
        %v219 = vld [vmem:[%s1 + $0x30] sm:$0xf]
        %v220 = vld [vmem:[%s1 + $0x34] sm:$0xf]
        %v221 = vld [vmem:[%s1 + $0x38] sm:$0xf]
        %v222 = vld [vmem:[%s1 + $0x3c] sm:$0xf]
        %v223 = vld [vmem:[%s184] sm:$0xff]
        %v224 = vld [vmem:[%s184 + $0x8] sm:$0xff]
        %v241 = vunpack.c.l.b16 %v207
        %v242 = vunpack.c.l.b16 %v208
        %v243 = vunpack.c.l.b16 %v209
        %v244 = vunpack.c.l.b16 %v210
        %v245 = vunpack.c.l.b16 %v211
        %v246 = vunpack.c.l.b16 %v212
        %v247 = vunpack.c.l.b16 %v213
        %v248 = vunpack.c.l.b16 %v214
        %v249 = vunpack.c.l.b16 %v215
        %v250 = vunpack.c.l.b16 %v216
        %v251 = vunpack.c.l.b16 %v217
        %v252 = vunpack.c.l.b16 %v218
        %v253 = vunpack.c.l.b16 %v219
        %v254 = vunpack.c.l.b16 %v220
        %v255 = vunpack.c.l.b16 %v221
        %v256 = vunpack.c.l.b16 %v222
        %v257 = vpack.c.b16 %v242, %v241
        %v258 = vpack.c.b16 %v244, %v243
        %v259 = vpack.c.b16 %v246, %v245
        %v260 = vpack.c.b16 %v248, %v247
        %v261 = vpack.c.b16 %v250, %v249
        %v262 = vpack.c.b16 %v252, %v251
        %v263 = vpack.c.b16 %v254, %v253
        %v264 = vpack.c.b16 %v256, %v255
        %v267 = vunpack.c.l.b16 %v223
        %v268 = vunpack.c.h.b16 %v223
        %v269 = vunpack.c.l.b16 %v224
        %v270 = vunpack.c.h.b16 %v224
        %v271 = vpack.c.b16 %v269, %v267
        %v272 = vpack.c.b16 %v270, %v268
        %vm275 = vcmask 130048
        %v277 = vsel %vm275, %v257, 0
        %v280 = vsel %vm275, %v258, 0
        %v283 = vsel %vm275, %v259, 0
        %v286 = vsel %vm275, %v260, 0
        %v289 = vsel %vm275, %v261, 0
        %v292 = vsel %vm275, %v262, 0
        %v295 = vsel %vm275, %v263, 0
        %v298 = vsel %vm275, %v264, 0
        %300 = vmatprep.subr.bf16.mxu0 %v272
        %301 = vmatpush1.bf16.msra.mxu0 %v271
        %302 = vmatprep.subr.bf16.mxu0 0
        %303 = vmatpush1.bf16.msra.mxu0 0
        %304 = vmatprep.subr.bf16.mxu0 0
        %305 = vmatpush1.bf16.msra.mxu0 0
        %306 = vmatprep.subr.bf16.mxu0 0
        %307 = vmatpush1.bf16.msra.mxu0 0
        %308 = vmatprep.subr.bf16.mxu0 0
        %309 = vmatpush1.bf16.msra.mxu0 0
        %310 = vmatprep.subr.bf16.mxu0 0
        %311 = vmatpush1.bf16.msra.mxu0 0
        %312 = vmatprep.subr.bf16.mxu0 0
        %313 = vmatpush1.bf16.msra.mxu0 0
        %314 = vmatprep.subr.bf16.mxu0 0
        %315 = vmatpush1.bf16.msra.mxu0 0
        %316 = vmatprep.subr.bf16.mxu0 0
        %317 = vmatpush1.bf16.msra.mxu0 0
        %318 = vmatprep.subr.bf16.mxu0 0
        %319 = vmatpush1.bf16.msra.mxu0 0
        %320 = vmatprep.subr.bf16.mxu0 0
        %321 = vmatpush1.bf16.msra.mxu0 0
        %322 = vmatprep.subr.bf16.mxu0 0
        %323 = vmatpush1.bf16.msra.mxu0 0
        %324 = vmatprep.subr.bf16.mxu0 0
        %325 = vmatpush1.bf16.msra.mxu0 0
        %326 = vmatprep.subr.bf16.mxu0 0
        %327 = vmatpush1.bf16.msra.mxu0 0
        %328 = vmatprep.subr.bf16.mxu0 0
        %329 = vmatpush1.bf16.msra.mxu0 0
        %330 = vmatprep.subr.bf16.mxu0 0
        %331 = vmatpush1.bf16.msra.mxu0 0
        %332 = vmatprep.mubr.bf16.mxu0 0
        %333 = vmatmul.mubr.bf16.gmra.mrb[0].mxu0 %v277
        %v334 = vpop.f32.mrb[0].mxu0
        %v335 = vadd.f32 0.0, %v334
        %v336 = vpop.f32.mrb[0].mxu0
        %v337 = vadd.f32 0.0, %v336
        %v338 = vpop.f32.mrb[0].mxu0
        %v339 = vadd.f32 0.0, %v338
        %v340 = vpop.f32.mrb[0].mxu0
        %v341 = vadd.f32 0.0, %v340
        %342 = vmatprep.mubr.bf16.mxu0 0
        %343 = vmatmul.mubr.bf16.gmra.mrb[0].mxu0 %v280
        %v344 = vpop.f32.mrb[0].mxu0
        %v345 = vadd.f32 0.0, %v344
        %v346 = vpop.f32.mrb[0].mxu0
        %v347 = vadd.f32 0.0, %v346
        %v348 = vpop.f32.mrb[0].mxu0
        %v349 = vadd.f32 0.0, %v348
        %v350 = vpop.f32.mrb[0].mxu0
        %v351 = vadd.f32 0.0, %v350
        %352 = vmatprep.mubr.bf16.mxu0 0
        %353 = vmatmul.mubr.bf16.gmra.mrb[0].mxu0 %v283
        %v354 = vpop.f32.mrb[0].mxu0
        %v355 = vadd.f32 0.0, %v354
        %v356 = vpop.f32.mrb[0].mxu0
        %v357 = vadd.f32 0.0, %v356
        %v358 = vpop.f32.mrb[0].mxu0
        %v359 = vadd.f32 0.0, %v358
        %v360 = vpop.f32.mrb[0].mxu0
        %v361 = vadd.f32 0.0, %v360
        %362 = vmatprep.mubr.bf16.mxu0 0
        %363 = vmatmul.mubr.bf16.gmra.mrb[0].mxu0 %v286
        %v364 = vpop.f32.mrb[0].mxu0
        %v365 = vadd.f32 0.0, %v364
        %v366 = vpop.f32.mrb[0].mxu0
        %v367 = vadd.f32 0.0, %v366
        %v368 = vpop.f32.mrb[0].mxu0
        %v369 = vadd.f32 0.0, %v368
        %v370 = vpop.f32.mrb[0].mxu0
        %v371 = vadd.f32 0.0, %v370
        %372 = vmatprep.mubr.bf16.mxu0 0
        %373 = vmatmul.mubr.bf16.gmra.mrb[0].mxu0 %v289
        %v374 = vpop.f32.mrb[0].mxu0
        %v375 = vadd.f32 0.0, %v374
        %v376 = vpop.f32.mrb[0].mxu0
        %v377 = vadd.f32 0.0, %v376
        %v378 = vpop.f32.mrb[0].mxu0
        %v379 = vadd.f32 0.0, %v378
        %v380 = vpop.f32.mrb[0].mxu0
        %v381 = vadd.f32 0.0, %v380
        %382 = vmatprep.mubr.bf16.mxu0 0
        %383 = vmatmul.mubr.bf16.gmra.mrb[0].mxu0 %v292
        %v384 = vpop.f32.mrb[0].mxu0
        %v385 = vadd.f32 0.0, %v384
        %v386 = vpop.f32.mrb[0].mxu0
        %v387 = vadd.f32 0.0, %v386
        %v388 = vpop.f32.mrb[0].mxu0
        %v389 = vadd.f32 0.0, %v388
        %v390 = vpop.f32.mrb[0].mxu0
        %v391 = vadd.f32 0.0, %v390
        %392 = vmatprep.mubr.bf16.mxu0 0
        %393 = vmatmul.mubr.bf16.gmra.mrb[0].mxu0 %v295
        %v394 = vpop.f32.mrb[0].mxu0
        %v395 = vadd.f32 0.0, %v394
        %v396 = vpop.f32.mrb[0].mxu0
        %v397 = vadd.f32 0.0, %v396
        %v398 = vpop.f32.mrb[0].mxu0
        %v399 = vadd.f32 0.0, %v398
        %v400 = vpop.f32.mrb[0].mxu0
        %v401 = vadd.f32 0.0, %v400
        %402 = vmatprep.mubr.bf16.mxu0 0
        %403 = vmatmul.mubr.bf16.gmra.mrb[0].mxu0 %v298
        %v404 = vpop.f32.mrb[0].mxu0
        %v405 = vadd.f32 0.0, %v404
        %v406 = vpop.f32.mrb[0].mxu0
        %v407 = vadd.f32 0.0, %v406
        %v408 = vpop.f32.mrb[0].mxu0
        %v409 = vadd.f32 0.0, %v408
        %v410 = vpop.f32.mrb[0].mxu0
        %v411 = vadd.f32 0.0, %v410
        %412 = vdwg.mxu0
        %v413 = vmax.f32 %v335, %v355
        %v414 = vmax.f32 %v337, %v357
        %v415 = vmax.f32 %v339, %v359
        %v416 = vmax.f32 %v341, %v361
        %v417 = vmax.f32 %v345, %v365
        %v418 = vmax.f32 %v347, %v367
        %v419 = vmax.f32 %v349, %v369
        %v420 = vmax.f32 %v351, %v371
        %v421 = vmax.f32 %v375, %v395
        %v422 = vmax.f32 %v377, %v397
        %v423 = vmax.f32 %v379, %v399
        %v424 = vmax.f32 %v381, %v401
        %v425 = vmax.f32 %v385, %v405
        %v426 = vmax.f32 %v387, %v407
        %v427 = vmax.f32 %v389, %v409
        %v428 = vmax.f32 %v391, %v411
        %v429 = vmax.f32 %v413, %v421
        %v430 = vmax.f32 %v414, %v422
        %v431 = vmax.f32 %v415, %v423
        %v432 = vmax.f32 %v416, %v424
        %v433 = vmax.f32 %v417, %v425
        %v434 = vmax.f32 %v418, %v426
        %v435 = vmax.f32 %v419, %v427
        %v436 = vmax.f32 %v420, %v428
        %v437 = vld [vmem:[%s2] sm:$0xff]
        %v438 = vld [vmem:[%s2 + $0x8] sm:$0xff]
        %v439 = vld [vmem:[%s2 + $0x10] sm:$0xff]
        %v440 = vld [vmem:[%s2 + $0x18] sm:$0xff]
        %442 = vset.pattern.permute.xlu0 0
        %443 = vperm.xlu0 %442, %v437
        %v444 = vpop.permute.xlu0 %443
        %447 = vset.pattern.permute.xlu0 0
        %448 = vperm.xlu0 %447, %v438
        %v449 = vpop.permute.xlu0 %448
        %452 = vset.pattern.permute.xlu0 0
        %453 = vperm.xlu0 %452, %v439
        %v454 = vpop.permute.xlu0 %453
        %457 = vset.pattern.permute.xlu0 0
        %458 = vperm.xlu0 %457, %v440
        %v459 = vpop.permute.xlu0 %458
        %v461 = vadd.f32 %v429, %v444
        %v462 = vadd.f32 %v430, %v444
        %v463 = vadd.f32 %v431, %v449
        %v464 = vadd.f32 %v432, %v449
        %v465 = vadd.f32 %v433, %v454
        %v466 = vadd.f32 %v434, %v454
        %v467 = vadd.f32 %v435, %v459
        %v468 = vadd.f32 %v436, %v459
        %v469 = vmax.f32 %v461, 0.0
        %v470 = vmax.f32 %v462, 0.0
        %v471 = vmax.f32 %v463, 0.0
        %v472 = vmax.f32 %v464, 0.0
        %v473 = vmax.f32 %v465, 0.0
        %v474 = vmax.f32 %v466, 0.0
        %v475 = vmax.f32 %v467, 0.0
        %v476 = vmax.f32 %v468, 0.0
        %v477 = vpack.c.bf16 %v471, %v469
        %v478 = vpack.c.bf16 %v472, %v470
        %v479 = vpack.c.bf16 %v475, %v473
        %v480 = vpack.c.bf16 %v476, %v474
        %v485 = vunpack.c.l.b16 %v477
        %v486 = vunpack.c.l.b16 %v478
        %v487 = vunpack.c.h.b16 %v477
        %v488 = vunpack.c.h.b16 %v478
        %v489 = vunpack.c.l.b16 %v479
        %v490 = vunpack.c.l.b16 %v480
        %v491 = vunpack.c.h.b16 %v479
        %v492 = vunpack.c.h.b16 %v480
        %v493 = vpack.c.b16 %v486, %v485
        %v494 = vpack.c.b16 %v488, %v487
        %v495 = vpack.c.b16 %v490, %v489
        %v496 = vpack.c.b16 %v492, %v491
        %501 = vst [vmem:[%s203] sm:$0xff] %v493
        %502 = vst [vmem:[%s203 + $0x8] sm:$0xff] %v494
        %503 = vst [vmem:[%s203 + $0x10] sm:$0xff] %v495
        %504 = vst [vmem:[%s203 + $0x18] sm:$0xff] %v496
        %s505 = sand.u32 %s90, 1
        %s506 = sand.u32 %s90, 1
        %s507 = smul.addr %s506, 32
        %s508 = scalar_lea.vmem [#allocation3], %s507
        // Predicated region
        $region71: #{simple_cnn_forward.3} parent=65 // pred_check
          %p509 = pneg %p100
        $region72: #{simple_cnn_forward.3} parent=65 // pred_check_branch
          %511 = sbr.rel (%p509) target = $region74
        $region73: #{simple_cnn_forward.3} parent=65 // pred_region
          %s512 = smul.u32 2, %s14
          %s513 = smul.addr %s512, 4
          %s514 = scalar_lea.vmem %s3, %s513
          // Predicated region
          $region75: #{simple_cnn_forward.3} parent=73 // pred_check
            _
          $region76: #{simple_cnn_forward.3} parent=73 // pred_check_branch
            %516 = sbr.rel (0) target = $region78
          $region77: #{simple_cnn_forward.3} parent=73 // pred_region
            // Predicated region
            $region79: #{simple_cnn_forward.3} parent=77 // pred_check
              _
            $region80: #{simple_cnn_forward.3} parent=77 // pred_check_branch
              %518 = sbr.rel (0) target = $region82
            $region81: #{simple_cnn_forward.3} parent=77 // pred_region
              // Predicated region
              $region94: #{simple_cnn_forward.3} parent=81 // pred_check
                _
              $region95: #{simple_cnn_forward.3} parent=81 // pred_check_branch
                %539 = sbr.rel (0) target = $region97
              $region96: #{simple_cnn_forward.3} parent=81 // pred_region
                loop: start=0, step=1, limit=1
                $region98: #{simple_cnn_forward.3} parent=96 // loop_pre_header
                  _
                $region99: #{simple_cnn_forward.3} parent=96 // loop_header
                  %s541 = sphi 0, %s545
                  %p542 = scmp.ge.s32.totalorder %s541, 1
                  %s546 = sphi %s508, %s508
                  %s547 = sphi %s514, %s514
                $region100: #{simple_cnn_forward.3} parent=96 // loop_header_branch
                  %544 = sbr.rel (%p542) target = $region104
                $region101: #{simple_cnn_forward.3} parent=96 // loop_body
                  %v548 = vld [vmem:[%s546] sm:$0xff]
                  %549 = vst [vmem:[%s547] sm:$0xff] %v548
                  %v550 = vld [vmem:[%s546 + $0x8] sm:$0xff]
                  %551 = vst [vmem:[%s547 + $0x10] sm:$0xff] %v550
                  %v552 = vld [vmem:[%s546 + $0x10] sm:$0xff]
                  %553 = vst [vmem:[%s547 + $0x20] sm:$0xff] %v552
                  %v554 = vld [vmem:[%s546 + $0x18] sm:$0xff]
                  %555 = vst [vmem:[%s547 + $0x30] sm:$0xff] %v554
                $region102: #{simple_cnn_forward.3} parent=96 // loop_footer
                  %s545 = sadd.s32 1, %s541
                $region103: #{simple_cnn_forward.3} parent=96 // loop_footer_branch
                  %540 = sbr.rel target = $region99
                $region104: #{simple_cnn_forward.3} parent=96 // loop_exit
                  _
              $region97: #{simple_cnn_forward.3} parent=81 // pred_fallthru
                _
              // Predicated region
              $region105: #{simple_cnn_forward.3} parent=81 // pred_check
                _
              $region106: #{simple_cnn_forward.3} parent=81 // pred_check_branch
                %557 = sbr.rel target = $region108
              $region107: #{simple_cnn_forward.3} parent=81 // pred_region
                _
              $region108: #{simple_cnn_forward.3} parent=81 // pred_fallthru
                _
            $region82: #{simple_cnn_forward.3} parent=77 // pred_fallthru
              _
            // Predicated region
            $region83: #{simple_cnn_forward.3} parent=77 // pred_check
              _
            $region84: #{simple_cnn_forward.3} parent=77 // pred_check_branch
              %520 = sbr.rel target = $region86
            $region85: #{simple_cnn_forward.3} parent=77 // pred_region
              loop: start=0, step=1, limit=1
              $region87: #{simple_cnn_forward.3} parent=85 // loop_pre_header
                _
              $region88: #{simple_cnn_forward.3} parent=85 // loop_header
                %s523 = sphi 0, %s527
                %p524 = scmp.ge.s32.totalorder %s523, 1
                %s528 = sphi %s508, %s508
                %s529 = sphi %s514, %s514
              $region89: #{simple_cnn_forward.3} parent=85 // loop_header_branch
                %526 = sbr.rel (%p524) target = $region93
              $region90: #{simple_cnn_forward.3} parent=85 // loop_body
                %v530 = vld [vmem:[%s528] sm:$0xff]
                %531 = vst [vmem:[%s529] sm:$0xff] %v530
                %v532 = vld [vmem:[%s528 + $0x8] sm:$0xff]
                %533 = vst [vmem:[%s529 + $0x10] sm:$0xff] %v532
                %v534 = vld [vmem:[%s528 + $0x10] sm:$0xff]
                %535 = vst [vmem:[%s529 + $0x20] sm:$0xff] %v534
                %v536 = vld [vmem:[%s528 + $0x18] sm:$0xff]
                %537 = vst [vmem:[%s529 + $0x30] sm:$0xff] %v536
              $region91: #{simple_cnn_forward.3} parent=85 // loop_footer
                %s527 = sadd.s32 1, %s523
              $region92: #{simple_cnn_forward.3} parent=85 // loop_footer_branch
                %522 = sbr.rel target = $region88
              $region93: #{simple_cnn_forward.3} parent=85 // loop_exit
                _
            $region86: #{simple_cnn_forward.3} parent=77 // pred_fallthru
              _
          $region78: #{simple_cnn_forward.3} parent=73 // pred_fallthru
            _
          %558 = vnop
        $region74: #{simple_cnn_forward.3} parent=65 // pred_fallthru
          _
      $region66: #{simple_cnn_forward.3} parent=5 // pred_fallthru
        _
      %p559 = scmp.le.s32.totalorder 2, %s9
      // Predicated region
      $region109: #{simple_cnn_forward.3} parent=5 // pred_check
        %p560 = pneg %p559
      $region110: #{simple_cnn_forward.3} parent=5 // pred_check_branch
        %562 = sbr.rel (%p560) target = $region112
      $region111: #{simple_cnn_forward.3} parent=5 // pred_region
        %s563 = ssub.s32 %s9, 2
        // Predicated region
        $region113: #{simple_cnn_forward.3} parent=111 // pred_check
          %p564 = pneg %p106
        $region114: #{simple_cnn_forward.3} parent=111 // pred_check_branch
          %566 = sbr.rel (%p564) target = $region116
        $region115: #{simple_cnn_forward.3} parent=111 // pred_region
          %s567 = sand.u32 %s91, 1
          %s568 = sand.u32 %s91, 1
          %s569 = smul.addr %s568, 32
          %s570 = scalar_lea.vmem [#allocation3], %s569
        $region116: #{simple_cnn_forward.3} parent=111 // pred_fallthru
          _
      $region112: #{simple_cnn_forward.3} parent=5 // pred_fallthru
        _
    $region6: #{simple_cnn_forward.3} parent=1 // loop_footer
      %s13 = sadd.s32 1, %s9
    $region7: #{simple_cnn_forward.3} parent=1 // loop_footer_branch
      %8 = sbr.rel target = $region3
    $region8: #{simple_cnn_forward.3} parent=1 // loop_exit
      _

// kernel: simple_cnn_forward.4
$region0: #{simple_cnn_forward.4}
  #allocation0 [shape = 'u32[]', space=smem, size = 0x4, offset = 0x4, fixed_abs, tag = 'smem constant byte address 0x4 - core index']
  #allocation1 [shape = 'u32[144,128]{1,0:T(1,128)}', space=vmem, size = 0x12000, scoped, tag = 'internal scratch']
  %s0 = inlined_call_operand.vmem [shape: bf16[512,128], index: 0, kind: input, shape index: {}]
  %s1 = inlined_call_operand.vmem [shape: bf16[256,512], index: 1, kind: input, shape index: {}]
  %s2 = inlined_call_operand.vmem [shape: f32[64,1], index: 2, kind: input, shape index: {}]
  %s3 = inlined_call_operand.vmem [shape: bf16[64,128], index: 3, kind: output, shape index: {}]
  %s4 = sld [smem:[#allocation0]]
  $region22: #{simple_cnn_forward.4} parent=0
    _
  %s6 = ssub.s32 1, %s4
  %s7 = scalar_select 0, %s6, %s4
  // Predicated region
  $region2: #{simple_cnn_forward.4} parent=0 // pred_check
    _
  $region3: #{simple_cnn_forward.4} parent=0 // pred_check_branch
    %9 = sbr.rel (0) target = $region5
  $region4: #{simple_cnn_forward.4} parent=0 // pred_region
    _
  $region5: #{simple_cnn_forward.4} parent=0 // pred_fallthru
    _
  // Predicated region
  $region6: #{simple_cnn_forward.4} parent=0 // pred_check
    _
  $region7: #{simple_cnn_forward.4} parent=0 // pred_check_branch
    %11 = sbr.rel (0) target = $region9
  $region8: #{simple_cnn_forward.4} parent=0 // pred_region
    _
  $region9: #{simple_cnn_forward.4} parent=0 // pred_fallthru
    _
  // Predicated region
  $region10: #{simple_cnn_forward.4} parent=0 // pred_check
    _
  $region11: #{simple_cnn_forward.4} parent=0 // pred_check_branch
    %13 = sbr.rel (0) target = $region13
  $region12: #{simple_cnn_forward.4} parent=0 // pred_region
    _
  $region13: #{simple_cnn_forward.4} parent=0 // pred_fallthru
    _
  %v15 = vld [vmem:[%s1] sm:$0xff]
  %v16 = vld [vmem:[%s1 + $0x8] sm:$0xff]
  %v17 = vld [vmem:[%s1 + $0x10] sm:$0xff]
  %v18 = vld [vmem:[%s1 + $0x18] sm:$0xff]
  %v19 = vld [vmem:[%s1 + $0x20] sm:$0xff]
  %v20 = vld [vmem:[%s1 + $0x28] sm:$0xff]
  %v21 = vld [vmem:[%s1 + $0x30] sm:$0xff]
  %v22 = vld [vmem:[%s1 + $0x38] sm:$0xff]
  %v23 = vld [vmem:[%s1 + $0x40] sm:$0xff]
  %v24 = vld [vmem:[%s1 + $0x48] sm:$0xff]
  %v25 = vld [vmem:[%s1 + $0x50] sm:$0xff]
  %v26 = vld [vmem:[%s1 + $0x58] sm:$0xff]
  %v27 = vld [vmem:[%s1 + $0x60] sm:$0xff]
  %v28 = vld [vmem:[%s1 + $0x68] sm:$0xff]
  %v29 = vld [vmem:[%s1 + $0x70] sm:$0xff]
  %v30 = vld [vmem:[%s1 + $0x78] sm:$0xff]
  %v31 = vld [vmem:[%s1 + $0x80] sm:$0xff]
  %v32 = vld [vmem:[%s1 + $0x88] sm:$0xff]
  %v33 = vld [vmem:[%s1 + $0x90] sm:$0xff]
  %v34 = vld [vmem:[%s1 + $0x98] sm:$0xff]
  %v35 = vld [vmem:[%s1 + $0xa0] sm:$0xff]
  %v36 = vld [vmem:[%s1 + $0xa8] sm:$0xff]
  %v37 = vld [vmem:[%s1 + $0xb0] sm:$0xff]
  %v38 = vld [vmem:[%s1 + $0xb8] sm:$0xff]
  %v39 = vld [vmem:[%s1 + $0xc0] sm:$0xff]
  %v40 = vld [vmem:[%s1 + $0xc8] sm:$0xff]
  %v41 = vld [vmem:[%s1 + $0xd0] sm:$0xff]
  %v42 = vld [vmem:[%s1 + $0xd8] sm:$0xff]
  %v43 = vld [vmem:[%s1 + $0xe0] sm:$0xff]
  %v44 = vld [vmem:[%s1 + $0xe8] sm:$0xff]
  %v45 = vld [vmem:[%s1 + $0xf0] sm:$0xff]
  %v46 = vld [vmem:[%s1 + $0xf8] sm:$0xff]
  %v47 = vld [vmem:[%s1 + $0x100] sm:$0xff]
  %v48 = vld [vmem:[%s1 + $0x108] sm:$0xff]
  %v49 = vld [vmem:[%s1 + $0x110] sm:$0xff]
  %v50 = vld [vmem:[%s1 + $0x118] sm:$0xff]
  %v51 = vld [vmem:[%s1 + $0x120] sm:$0xff]
  %v52 = vld [vmem:[%s1 + $0x128] sm:$0xff]
  %v53 = vld [vmem:[%s1 + $0x130] sm:$0xff]
  %v54 = vld [vmem:[%s1 + $0x138] sm:$0xff]
  %v55 = vld [vmem:[%s1 + $0x140] sm:$0xff]
  %v56 = vld [vmem:[%s1 + $0x148] sm:$0xff]
  %v57 = vld [vmem:[%s1 + $0x150] sm:$0xff]
  %v58 = vld [vmem:[%s1 + $0x158] sm:$0xff]
  %v59 = vld [vmem:[%s1 + $0x160] sm:$0xff]
  %v60 = vld [vmem:[%s1 + $0x168] sm:$0xff]
  %v61 = vld [vmem:[%s1 + $0x170] sm:$0xff]
  %v62 = vld [vmem:[%s1 + $0x178] sm:$0xff]
  %v63 = vld [vmem:[%s1 + $0x180] sm:$0xff]
  %v64 = vld [vmem:[%s1 + $0x188] sm:$0xff]
  %v65 = vld [vmem:[%s1 + $0x190] sm:$0xff]
  %v66 = vld [vmem:[%s1 + $0x198] sm:$0xff]
  %v67 = vld [vmem:[%s1 + $0x1a0] sm:$0xff]
  %v68 = vld [vmem:[%s1 + $0x1a8] sm:$0xff]
  %v69 = vld [vmem:[%s1 + $0x1b0] sm:$0xff]
  %v70 = vld [vmem:[%s1 + $0x1b8] sm:$0xff]
  %v71 = vld [vmem:[%s1 + $0x1c0] sm:$0xff]
  %v72 = vld [vmem:[%s1 + $0x1c8] sm:$0xff]
  %v73 = vld [vmem:[%s1 + $0x1d0] sm:$0xff]
  %v74 = vld [vmem:[%s1 + $0x1d8] sm:$0xff]
  %v75 = vld [vmem:[%s1 + $0x1e0] sm:$0xff]
  %v76 = vld [vmem:[%s1 + $0x1e8] sm:$0xff]
  %v77 = vld [vmem:[%s1 + $0x1f0] sm:$0xff]
  %v78 = vld [vmem:[%s1 + $0x1f8] sm:$0xff]
  %v79 = vld [vmem:[%s0] sm:$0xf]
  %v80 = vld [vmem:[%s0 + $0x4] sm:$0xf]
  %v81 = vld [vmem:[%s0 + $0x8] sm:$0xf]
  %v82 = vld [vmem:[%s0 + $0xc] sm:$0xf]
  %v83 = vld [vmem:[%s0 + $0x10] sm:$0xf]
  %v84 = vld [vmem:[%s0 + $0x14] sm:$0xf]
  %v85 = vld [vmem:[%s0 + $0x18] sm:$0xf]
  %v86 = vld [vmem:[%s0 + $0x1c] sm:$0xf]
  %v87 = vld [vmem:[%s0 + $0x20] sm:$0xf]
  %v88 = vld [vmem:[%s0 + $0x24] sm:$0xf]
  %v89 = vld [vmem:[%s0 + $0x28] sm:$0xf]
  %v90 = vld [vmem:[%s0 + $0x2c] sm:$0xf]
  %v91 = vld [vmem:[%s0 + $0x30] sm:$0xf]
  %v92 = vld [vmem:[%s0 + $0x34] sm:$0xf]
  %v93 = vld [vmem:[%s0 + $0x38] sm:$0xf]
  %v94 = vld [vmem:[%s0 + $0x3c] sm:$0xf]
  %v95 = vld [vmem:[%s0 + $0x40] sm:$0xf]
  %v96 = vld [vmem:[%s0 + $0x44] sm:$0xf]
  %v97 = vld [vmem:[%s0 + $0x48] sm:$0xf]
  %v98 = vld [vmem:[%s0 + $0x4c] sm:$0xf]
  %v99 = vld [vmem:[%s0 + $0x50] sm:$0xf]
  %v100 = vld [vmem:[%s0 + $0x54] sm:$0xf]
  %v101 = vld [vmem:[%s0 + $0x58] sm:$0xf]
  %v102 = vld [vmem:[%s0 + $0x5c] sm:$0xf]
  %v103 = vld [vmem:[%s0 + $0x60] sm:$0xf]
  %v104 = vld [vmem:[%s0 + $0x64] sm:$0xf]
  %v105 = vld [vmem:[%s0 + $0x68] sm:$0xf]
  %v106 = vld [vmem:[%s0 + $0x6c] sm:$0xf]
  %v107 = vld [vmem:[%s0 + $0x70] sm:$0xf]
  %v108 = vld [vmem:[%s0 + $0x74] sm:$0xf]
  %v109 = vld [vmem:[%s0 + $0x78] sm:$0xf]
  %v110 = vld [vmem:[%s0 + $0x7c] sm:$0xf]
  %v111 = vld [vmem:[%s0 + $0x80] sm:$0xf]
  %v112 = vld [vmem:[%s0 + $0x84] sm:$0xf]
  %v113 = vld [vmem:[%s0 + $0x88] sm:$0xf]
  %v114 = vld [vmem:[%s0 + $0x8c] sm:$0xf]
  %v115 = vld [vmem:[%s0 + $0x90] sm:$0xf]
  %v116 = vld [vmem:[%s0 + $0x94] sm:$0xf]
  %v117 = vld [vmem:[%s0 + $0x98] sm:$0xf]
  %v118 = vld [vmem:[%s0 + $0x9c] sm:$0xf]
  %v119 = vld [vmem:[%s0 + $0xa0] sm:$0xf]
  %v120 = vld [vmem:[%s0 + $0xa4] sm:$0xf]
  %v121 = vld [vmem:[%s0 + $0xa8] sm:$0xf]
  %v122 = vld [vmem:[%s0 + $0xac] sm:$0xf]
  %v123 = vld [vmem:[%s0 + $0xb0] sm:$0xf]
  %v124 = vld [vmem:[%s0 + $0xb4] sm:$0xf]
  %v125 = vld [vmem:[%s0 + $0xb8] sm:$0xf]
  %v126 = vld [vmem:[%s0 + $0xbc] sm:$0xf]
  %v127 = vld [vmem:[%s0 + $0xc0] sm:$0xf]
  %v128 = vld [vmem:[%s0 + $0xc4] sm:$0xf]
  %v129 = vld [vmem:[%s0 + $0xc8] sm:$0xf]
  %v130 = vld [vmem:[%s0 + $0xcc] sm:$0xf]
  %v131 = vld [vmem:[%s0 + $0xd0] sm:$0xf]
  %v132 = vld [vmem:[%s0 + $0xd4] sm:$0xf]
  %v133 = vld [vmem:[%s0 + $0xd8] sm:$0xf]
  %v134 = vld [vmem:[%s0 + $0xdc] sm:$0xf]
  %v135 = vld [vmem:[%s0 + $0xe0] sm:$0xf]
  %v136 = vld [vmem:[%s0 + $0xe4] sm:$0xf]
  %v137 = vld [vmem:[%s0 + $0xe8] sm:$0xf]
  %v138 = vld [vmem:[%s0 + $0xec] sm:$0xf]
  %v139 = vld [vmem:[%s0 + $0xf0] sm:$0xf]
  %v140 = vld [vmem:[%s0 + $0xf4] sm:$0xf]
  %v141 = vld [vmem:[%s0 + $0xf8] sm:$0xf]
  %v142 = vld [vmem:[%s0 + $0xfc] sm:$0xf]
  %v207 = vunpack.c.l.b16 %v15
  %v208 = vunpack.c.h.b16 %v15
  %v209 = vunpack.c.l.b16 %v16
  %v210 = vunpack.c.h.b16 %v16
  %v211 = vunpack.c.l.b16 %v17
  %v212 = vunpack.c.h.b16 %v17
  %v213 = vunpack.c.l.b16 %v18
  %v214 = vunpack.c.h.b16 %v18
  %v215 = vunpack.c.l.b16 %v19
  %v216 = vunpack.c.h.b16 %v19
  %v217 = vunpack.c.l.b16 %v20
  %v218 = vunpack.c.h.b16 %v20
  %v219 = vunpack.c.l.b16 %v21
  %v220 = vunpack.c.h.b16 %v21
  %v221 = vunpack.c.l.b16 %v22
  %v222 = vunpack.c.h.b16 %v22
  %v223 = vunpack.c.l.b16 %v23
  %v224 = vunpack.c.h.b16 %v23
  %v225 = vunpack.c.l.b16 %v24
  %v226 = vunpack.c.h.b16 %v24
  %v227 = vunpack.c.l.b16 %v25
  %v228 = vunpack.c.h.b16 %v25
  %v229 = vunpack.c.l.b16 %v26
  %v230 = vunpack.c.h.b16 %v26
  %v231 = vunpack.c.l.b16 %v27
  %v232 = vunpack.c.h.b16 %v27
  %v233 = vunpack.c.l.b16 %v28
  %v234 = vunpack.c.h.b16 %v28
  %v235 = vunpack.c.l.b16 %v29
  %v236 = vunpack.c.h.b16 %v29
  %v237 = vunpack.c.l.b16 %v30
  %v238 = vunpack.c.h.b16 %v30
  %v239 = vunpack.c.l.b16 %v31
  %v240 = vunpack.c.h.b16 %v31
  %v241 = vunpack.c.l.b16 %v32
  %v242 = vunpack.c.h.b16 %v32
  %v243 = vunpack.c.l.b16 %v33
  %v244 = vunpack.c.h.b16 %v33
  %v245 = vunpack.c.l.b16 %v34
  %v246 = vunpack.c.h.b16 %v34
  %v247 = vunpack.c.l.b16 %v35
  %v248 = vunpack.c.h.b16 %v35
  %v249 = vunpack.c.l.b16 %v36
  %v250 = vunpack.c.h.b16 %v36
  %v251 = vunpack.c.l.b16 %v37
  %v252 = vunpack.c.h.b16 %v37
  %v253 = vunpack.c.l.b16 %v38
  %v254 = vunpack.c.h.b16 %v38
  %v255 = vunpack.c.l.b16 %v39
  %v256 = vunpack.c.h.b16 %v39
  %v257 = vunpack.c.l.b16 %v40
  %v258 = vunpack.c.h.b16 %v40
  %v259 = vunpack.c.l.b16 %v41
  %v260 = vunpack.c.h.b16 %v41
  %v261 = vunpack.c.l.b16 %v42
  %v262 = vunpack.c.h.b16 %v42
  %v263 = vunpack.c.l.b16 %v43
  %v264 = vunpack.c.h.b16 %v43
  %v265 = vunpack.c.l.b16 %v44
  %v266 = vunpack.c.h.b16 %v44
  %v267 = vunpack.c.l.b16 %v45
  %v268 = vunpack.c.h.b16 %v45
  %v269 = vunpack.c.l.b16 %v46
  %v270 = vunpack.c.h.b16 %v46
  %v271 = vunpack.c.l.b16 %v47
  %v272 = vunpack.c.h.b16 %v47
  %v273 = vunpack.c.l.b16 %v48
  %v274 = vunpack.c.h.b16 %v48
  %v275 = vunpack.c.l.b16 %v49
  %v276 = vunpack.c.h.b16 %v49
  %v277 = vunpack.c.l.b16 %v50
  %v278 = vunpack.c.h.b16 %v50
  %v279 = vunpack.c.l.b16 %v51
  %v280 = vunpack.c.h.b16 %v51
  %v281 = vunpack.c.l.b16 %v52
  %v282 = vunpack.c.h.b16 %v52
  %v283 = vunpack.c.l.b16 %v53
  %v284 = vunpack.c.h.b16 %v53
  %v285 = vunpack.c.l.b16 %v54
  %v286 = vunpack.c.h.b16 %v54
  %v287 = vunpack.c.l.b16 %v55
  %v288 = vunpack.c.h.b16 %v55
  %v289 = vunpack.c.l.b16 %v56
  %v290 = vunpack.c.h.b16 %v56
  %v291 = vunpack.c.l.b16 %v57
  %v292 = vunpack.c.h.b16 %v57
  %v293 = vunpack.c.l.b16 %v58
  %v294 = vunpack.c.h.b16 %v58
  %v295 = vunpack.c.l.b16 %v59
  %v296 = vunpack.c.h.b16 %v59
  %v297 = vunpack.c.l.b16 %v60
  %v298 = vunpack.c.h.b16 %v60
  %v299 = vunpack.c.l.b16 %v61
  %v300 = vunpack.c.h.b16 %v61
  %v301 = vunpack.c.l.b16 %v62
  %v302 = vunpack.c.h.b16 %v62
  %v303 = vunpack.c.l.b16 %v63
  %v304 = vunpack.c.h.b16 %v63
  %v305 = vunpack.c.l.b16 %v64
  %v306 = vunpack.c.h.b16 %v64
  %v307 = vunpack.c.l.b16 %v65
  %v308 = vunpack.c.h.b16 %v65
  %v309 = vunpack.c.l.b16 %v66
  %v310 = vunpack.c.h.b16 %v66
  %v311 = vunpack.c.l.b16 %v67
  %v312 = vunpack.c.h.b16 %v67
  %v313 = vunpack.c.l.b16 %v68
  %v314 = vunpack.c.h.b16 %v68
  %v315 = vunpack.c.l.b16 %v69
  %v316 = vunpack.c.h.b16 %v69
  %v317 = vunpack.c.l.b16 %v70
  %v318 = vunpack.c.h.b16 %v70
  %v319 = vunpack.c.l.b16 %v71
  %v320 = vunpack.c.h.b16 %v71
  %v321 = vunpack.c.l.b16 %v72
  %v322 = vunpack.c.h.b16 %v72
  %v323 = vunpack.c.l.b16 %v73
  %v324 = vunpack.c.h.b16 %v73
  %v325 = vunpack.c.l.b16 %v74
  %v326 = vunpack.c.h.b16 %v74
  %v327 = vunpack.c.l.b16 %v75
  %v328 = vunpack.c.h.b16 %v75
  %v329 = vunpack.c.l.b16 %v76
  %v330 = vunpack.c.h.b16 %v76
  %v331 = vunpack.c.l.b16 %v77
  %v332 = vunpack.c.h.b16 %v77
  %v333 = vunpack.c.l.b16 %v78
  %v334 = vunpack.c.h.b16 %v78
  %v335 = vpack.c.b16 %v211, %v207
  %v336 = vpack.c.b16 %v212, %v208
  %v337 = vpack.c.b16 %v213, %v209
  %v338 = vpack.c.b16 %v214, %v210
  %v339 = vpack.c.b16 %v219, %v215
  %v340 = vpack.c.b16 %v220, %v216
  %v341 = vpack.c.b16 %v221, %v217
  %v342 = vpack.c.b16 %v222, %v218
  %v343 = vpack.c.b16 %v227, %v223
  %v344 = vpack.c.b16 %v228, %v224
  %v345 = vpack.c.b16 %v229, %v225
  %v346 = vpack.c.b16 %v230, %v226
  %v347 = vpack.c.b16 %v235, %v231
  %v348 = vpack.c.b16 %v236, %v232
  %v349 = vpack.c.b16 %v237, %v233
  %v350 = vpack.c.b16 %v238, %v234
  %v351 = vpack.c.b16 %v243, %v239
  %v352 = vpack.c.b16 %v244, %v240
  %v353 = vpack.c.b16 %v245, %v241
  %v354 = vpack.c.b16 %v246, %v242
  %v355 = vpack.c.b16 %v251, %v247
  %v356 = vpack.c.b16 %v252, %v248
  %v357 = vpack.c.b16 %v253, %v249
  %v358 = vpack.c.b16 %v254, %v250
  %v359 = vpack.c.b16 %v259, %v255
  %v360 = vpack.c.b16 %v260, %v256
  %v361 = vpack.c.b16 %v261, %v257
  %v362 = vpack.c.b16 %v262, %v258
  %v363 = vpack.c.b16 %v267, %v263
  %v364 = vpack.c.b16 %v268, %v264
  %v365 = vpack.c.b16 %v269, %v265
  %v366 = vpack.c.b16 %v270, %v266
  %v367 = vpack.c.b16 %v275, %v271
  %v368 = vpack.c.b16 %v276, %v272
  %v369 = vpack.c.b16 %v277, %v273
  %v370 = vpack.c.b16 %v278, %v274
  %v371 = vpack.c.b16 %v283, %v279
  %v372 = vpack.c.b16 %v284, %v280
  %v373 = vpack.c.b16 %v285, %v281
  %v374 = vpack.c.b16 %v286, %v282
  %v375 = vpack.c.b16 %v291, %v287
  %v376 = vpack.c.b16 %v292, %v288
  %v377 = vpack.c.b16 %v293, %v289
  %v378 = vpack.c.b16 %v294, %v290
  %v379 = vpack.c.b16 %v299, %v295
  %v380 = vpack.c.b16 %v300, %v296
  %v381 = vpack.c.b16 %v301, %v297
  %v382 = vpack.c.b16 %v302, %v298
  %v383 = vpack.c.b16 %v307, %v303
  %v384 = vpack.c.b16 %v308, %v304
  %v385 = vpack.c.b16 %v309, %v305
  %v386 = vpack.c.b16 %v310, %v306
  %v387 = vpack.c.b16 %v315, %v311
  %v388 = vpack.c.b16 %v316, %v312
  %v389 = vpack.c.b16 %v317, %v313
  %v390 = vpack.c.b16 %v318, %v314
  %v391 = vpack.c.b16 %v323, %v319
  %v392 = vpack.c.b16 %v324, %v320
  %v393 = vpack.c.b16 %v325, %v321
  %v394 = vpack.c.b16 %v326, %v322
  %v395 = vpack.c.b16 %v331, %v327
  %v396 = vpack.c.b16 %v332, %v328
  %v397 = vpack.c.b16 %v333, %v329
  %v398 = vpack.c.b16 %v334, %v330
  %v527 = vunpack.c.l.b16 %v79
  %v528 = vunpack.c.l.b16 %v80
  %v529 = vunpack.c.l.b16 %v81
  %v530 = vunpack.c.l.b16 %v82
  %v531 = vunpack.c.l.b16 %v83
  %v532 = vunpack.c.l.b16 %v84
  %v533 = vunpack.c.l.b16 %v85
  %v534 = vunpack.c.l.b16 %v86
  %v535 = vunpack.c.l.b16 %v87
  %v536 = vunpack.c.l.b16 %v88
  %v537 = vunpack.c.l.b16 %v89
  %v538 = vunpack.c.l.b16 %v90
  %v539 = vunpack.c.l.b16 %v91
  %v540 = vunpack.c.l.b16 %v92
  %v541 = vunpack.c.l.b16 %v93
  %v542 = vunpack.c.l.b16 %v94
  %v543 = vunpack.c.l.b16 %v95
  %v544 = vunpack.c.l.b16 %v96
  %v545 = vunpack.c.l.b16 %v97
  %v546 = vunpack.c.l.b16 %v98
  %v547 = vunpack.c.l.b16 %v99
  %v548 = vunpack.c.l.b16 %v100
  %v549 = vunpack.c.l.b16 %v101
  %v550 = vunpack.c.l.b16 %v102
  %v551 = vunpack.c.l.b16 %v103
  %v552 = vunpack.c.l.b16 %v104
  %v553 = vunpack.c.l.b16 %v105
  %v554 = vunpack.c.l.b16 %v106
  %v555 = vunpack.c.l.b16 %v107
  %v556 = vunpack.c.l.b16 %v108
  %v557 = vunpack.c.l.b16 %v109
  %v558 = vunpack.c.l.b16 %v110
  %v559 = vunpack.c.l.b16 %v111
  %v560 = vunpack.c.l.b16 %v112
  %v561 = vunpack.c.l.b16 %v113
  %v562 = vunpack.c.l.b16 %v114
  %v563 = vunpack.c.l.b16 %v115
  %v564 = vunpack.c.l.b16 %v116
  %v565 = vunpack.c.l.b16 %v117
  %v566 = vunpack.c.l.b16 %v118
  %v567 = vunpack.c.l.b16 %v119
  %v568 = vunpack.c.l.b16 %v120
  %v569 = vunpack.c.l.b16 %v121
  %v570 = vunpack.c.l.b16 %v122
  %v571 = vunpack.c.l.b16 %v123
  %v572 = vunpack.c.l.b16 %v124
  %v573 = vunpack.c.l.b16 %v125
  %v574 = vunpack.c.l.b16 %v126
  %v575 = vunpack.c.l.b16 %v127
  %v576 = vunpack.c.l.b16 %v128
  %v577 = vunpack.c.l.b16 %v129
  %v578 = vunpack.c.l.b16 %v130
  %v579 = vunpack.c.l.b16 %v131
  %v580 = vunpack.c.l.b16 %v132
  %v581 = vunpack.c.l.b16 %v133
  %v582 = vunpack.c.l.b16 %v134
  %v583 = vunpack.c.l.b16 %v135
  %v584 = vunpack.c.l.b16 %v136
  %v585 = vunpack.c.l.b16 %v137
  %v586 = vunpack.c.l.b16 %v138
  %v587 = vunpack.c.l.b16 %v139
  %v588 = vunpack.c.l.b16 %v140
  %v589 = vunpack.c.l.b16 %v141
  %v590 = vunpack.c.l.b16 %v142
  %v591 = vpack.c.b16 %v528, %v527
  %v592 = vpack.c.b16 %v530, %v529
  %v593 = vpack.c.b16 %v532, %v531
  %v594 = vpack.c.b16 %v534, %v533
  %v595 = vpack.c.b16 %v536, %v535
  %v596 = vpack.c.b16 %v538, %v537
  %v597 = vpack.c.b16 %v540, %v539
  %v598 = vpack.c.b16 %v542, %v541
  %v599 = vpack.c.b16 %v544, %v543
  %v600 = vpack.c.b16 %v546, %v545
  %v601 = vpack.c.b16 %v548, %v547
  %v602 = vpack.c.b16 %v550, %v549
  %v603 = vpack.c.b16 %v552, %v551
  %v604 = vpack.c.b16 %v554, %v553
  %v605 = vpack.c.b16 %v556, %v555
  %v606 = vpack.c.b16 %v558, %v557
  %v607 = vpack.c.b16 %v560, %v559
  %v608 = vpack.c.b16 %v562, %v561
  %v609 = vpack.c.b16 %v564, %v563
  %v610 = vpack.c.b16 %v566, %v565
  %v611 = vpack.c.b16 %v568, %v567
  %v612 = vpack.c.b16 %v570, %v569
  %v613 = vpack.c.b16 %v572, %v571
  %v614 = vpack.c.b16 %v574, %v573
  %v615 = vpack.c.b16 %v576, %v575
  %v616 = vpack.c.b16 %v578, %v577
  %v617 = vpack.c.b16 %v580, %v579
  %v618 = vpack.c.b16 %v582, %v581
  %v619 = vpack.c.b16 %v584, %v583
  %v620 = vpack.c.b16 %v586, %v585
  %v621 = vpack.c.b16 %v588, %v587
  %v622 = vpack.c.b16 %v590, %v589
  %655 = vmatprep.subr.bf16.mxu0 0
  %656 = vmatpush1.bf16.msra.mxu0 %v591
  %657 = vmatprep.subr.bf16.mxu0 0
  %658 = vmatpush1.bf16.msra.mxu0 %v592
  %659 = vmatprep.subr.bf16.mxu0 0
  %660 = vmatpush1.bf16.msra.mxu0 %v593
  %661 = vmatprep.subr.bf16.mxu0 0
  %662 = vmatpush1.bf16.msra.mxu0 %v594
  %663 = vmatprep.subr.bf16.mxu0 0
  %664 = vmatpush1.bf16.msra.mxu0 %v595
  %665 = vmatprep.subr.bf16.mxu0 0
  %666 = vmatpush1.bf16.msra.mxu0 %v596
  %667 = vmatprep.subr.bf16.mxu0 0
  %668 = vmatpush1.bf16.msra.mxu0 %v597
  %669 = vmatprep.subr.bf16.mxu0 0
  %670 = vmatpush1.bf16.msra.mxu0 %v598
  %671 = vmatprep.subr.bf16.mxu0 0
  %672 = vmatpush1.bf16.msra.mxu0 %v599
  %673 = vmatprep.subr.bf16.mxu0 0
  %674 = vmatpush1.bf16.msra.mxu0 %v600
  %675 = vmatprep.subr.bf16.mxu0 0
  %676 = vmatpush1.bf16.msra.mxu0 %v601
  %677 = vmatprep.subr.bf16.mxu0 0
  %678 = vmatpush1.bf16.msra.mxu0 %v602
  %679 = vmatprep.subr.bf16.mxu0 0
  %680 = vmatpush1.bf16.msra.mxu0 %v603
  %681 = vmatprep.subr.bf16.mxu0 0
  %682 = vmatpush1.bf16.msra.mxu0 %v604
  %683 = vmatprep.subr.bf16.mxu0 0
  %684 = vmatpush1.bf16.msra.mxu0 %v605
  %685 = vmatprep.subr.bf16.mxu0 0
  %686 = vmatpush1.bf16.msra.mxu0 %v606
  %687 = vmatprep.mubr.bf16.mxu0 %v336
  %688 = vmatmul.mubr.bf16.gmra.mrb[0].mxu0 %v335
  %v689 = vpop.f32.mrb[0].mxu0
  %v690 = vadd.f32 0.0, %v689
  %v691 = vpop.f32.mrb[0].mxu0
  %v692 = vpop.f32.mrb[0].mxu0
  %v693 = vadd.f32 0.0, %v692
  %v694 = vpop.f32.mrb[0].mxu0
  %695 = vmatprep.mubr.bf16.mxu0 %v340
  %696 = vmatmul.mubr.bf16.gmra.mrb[0].mxu0 %v339
  %v697 = vpop.f32.mrb[0].mxu0
  %v698 = vadd.f32 0.0, %v697
  %v699 = vpop.f32.mrb[0].mxu0
  %v700 = vpop.f32.mrb[0].mxu0
  %v701 = vadd.f32 0.0, %v700
  %v702 = vpop.f32.mrb[0].mxu0
  %703 = vmatprep.mubr.bf16.mxu0 %v344
  %704 = vmatmul.mubr.bf16.gmra.mrb[0].mxu0 %v343
  %v705 = vpop.f32.mrb[0].mxu0
  %v706 = vadd.f32 0.0, %v705
  %v707 = vpop.f32.mrb[0].mxu0
  %v708 = vpop.f32.mrb[0].mxu0
  %v709 = vadd.f32 0.0, %v708
  %v710 = vpop.f32.mrb[0].mxu0
  %711 = vmatprep.mubr.bf16.mxu0 %v348
  %712 = vmatmul.mubr.bf16.gmra.mrb[0].mxu0 %v347
  %v713 = vpop.f32.mrb[0].mxu0
  %v714 = vadd.f32 0.0, %v713
  %v715 = vpop.f32.mrb[0].mxu0
  %v716 = vpop.f32.mrb[0].mxu0
  %v717 = vadd.f32 0.0, %v716
  %v718 = vpop.f32.mrb[0].mxu0
  %719 = vmatprep.mubr.bf16.mxu0 %v352
  %720 = vmatmul.mubr.bf16.gmra.mrb[0].mxu0 %v351
  %v721 = vpop.f32.mrb[0].mxu0
  %v722 = vadd.f32 0.0, %v721
  %v723 = vpop.f32.mrb[0].mxu0
  %v724 = vpop.f32.mrb[0].mxu0
  %v725 = vadd.f32 0.0, %v724
  %v726 = vpop.f32.mrb[0].mxu0
  %727 = vmatprep.mubr.bf16.mxu0 %v356
  %728 = vmatmul.mubr.bf16.gmra.mrb[0].mxu0 %v355
  %v729 = vpop.f32.mrb[0].mxu0
  %v730 = vadd.f32 0.0, %v729
  %v731 = vpop.f32.mrb[0].mxu0
  %v732 = vpop.f32.mrb[0].mxu0
  %v733 = vadd.f32 0.0, %v732
  %v734 = vpop.f32.mrb[0].mxu0
  %735 = vmatprep.mubr.bf16.mxu0 %v360
  %736 = vmatmul.mubr.bf16.gmra.mrb[0].mxu0 %v359
  %v737 = vpop.f32.mrb[0].mxu0
  %v738 = vadd.f32 0.0, %v737
  %v739 = vpop.f32.mrb[0].mxu0
  %v740 = vpop.f32.mrb[0].mxu0
  %v741 = vadd.f32 0.0, %v740
  %v742 = vpop.f32.mrb[0].mxu0
  %743 = vmatprep.mubr.bf16.mxu0 %v364
  %744 = vmatmul.mubr.bf16.gmra.mrb[0].mxu0 %v363
  %v745 = vpop.f32.mrb[0].mxu0
  %v746 = vadd.f32 0.0, %v745
  %v747 = vpop.f32.mrb[0].mxu0
  %v748 = vpop.f32.mrb[0].mxu0
  %v749 = vadd.f32 0.0, %v748
  %v750 = vpop.f32.mrb[0].mxu0
  %751 = vmatprep.mubr.bf16.mxu0 %v368
  %752 = vmatmul.mubr.bf16.gmra.mrb[0].mxu0 %v367
  %v753 = vpop.f32.mrb[0].mxu0
  %v754 = vadd.f32 0.0, %v753
  %v755 = vpop.f32.mrb[0].mxu0
  %v756 = vpop.f32.mrb[0].mxu0
  %v757 = vadd.f32 0.0, %v756
  %v758 = vpop.f32.mrb[0].mxu0
  %759 = vmatprep.mubr.bf16.mxu0 %v372
  %760 = vmatmul.mubr.bf16.gmra.mrb[0].mxu0 %v371
  %v761 = vpop.f32.mrb[0].mxu0
  %v762 = vadd.f32 0.0, %v761
  %v763 = vpop.f32.mrb[0].mxu0
  %v764 = vpop.f32.mrb[0].mxu0
  %v765 = vadd.f32 0.0, %v764
  %v766 = vpop.f32.mrb[0].mxu0
  %767 = vmatprep.mubr.bf16.mxu0 %v376
  %768 = vmatmul.mubr.bf16.gmra.mrb[0].mxu0 %v375
  %v769 = vpop.f32.mrb[0].mxu0
  %v770 = vadd.f32 0.0, %v769
  %v771 = vpop.f32.mrb[0].mxu0
  %v772 = vpop.f32.mrb[0].mxu0
  %v773 = vadd.f32 0.0, %v772
  %v774 = vpop.f32.mrb[0].mxu0
  %775 = vmatprep.mubr.bf16.mxu0 %v380
  %776 = vmatmul.mubr.bf16.gmra.mrb[0].mxu0 %v379
  %v777 = vpop.f32.mrb[0].mxu0
  %v778 = vadd.f32 0.0, %v777
  %v779 = vpop.f32.mrb[0].mxu0
  %v780 = vpop.f32.mrb[0].mxu0
  %v781 = vadd.f32 0.0, %v780
  %v782 = vpop.f32.mrb[0].mxu0
  %783 = vmatprep.mubr.bf16.mxu0 %v384
  %784 = vmatmul.mubr.bf16.gmra.mrb[0].mxu0 %v383
  %v785 = vpop.f32.mrb[0].mxu0
  %v786 = vadd.f32 0.0, %v785
  %v787 = vpop.f32.mrb[0].mxu0
  %v788 = vpop.f32.mrb[0].mxu0
  %v789 = vadd.f32 0.0, %v788
  %v790 = vpop.f32.mrb[0].mxu0
  %791 = vmatprep.mubr.bf16.mxu0 %v388
  %792 = vmatmul.mubr.bf16.gmra.mrb[0].mxu0 %v387
  %v793 = vpop.f32.mrb[0].mxu0
  %v794 = vadd.f32 0.0, %v793
  %v795 = vpop.f32.mrb[0].mxu0
  %v796 = vpop.f32.mrb[0].mxu0
  %v797 = vadd.f32 0.0, %v796
  %v798 = vpop.f32.mrb[0].mxu0
  %799 = vmatprep.mubr.bf16.mxu0 %v392
  %800 = vmatmul.mubr.bf16.gmra.mrb[0].mxu0 %v391
  %v801 = vpop.f32.mrb[0].mxu0
  %v802 = vadd.f32 0.0, %v801
  %v803 = vpop.f32.mrb[0].mxu0
  %v804 = vpop.f32.mrb[0].mxu0
  %v805 = vadd.f32 0.0, %v804
  %v806 = vpop.f32.mrb[0].mxu0
  %807 = vmatprep.mubr.bf16.mxu0 %v396
  %808 = vmatmul.mubr.bf16.gmra.mrb[0].mxu0 %v395
  %v809 = vpop.f32.mrb[0].mxu0
  %v810 = vadd.f32 0.0, %v809
  %v811 = vpop.f32.mrb[0].mxu0
  %v812 = vpop.f32.mrb[0].mxu0
  %v813 = vadd.f32 0.0, %v812
  %v814 = vpop.f32.mrb[0].mxu0
  %815 = vdwg.mxu0
  %816 = vmatprep.subr.bf16.mxu0 0
  %817 = vmatpush1.bf16.msra.mxu0 %v607
  %818 = vmatprep.subr.bf16.mxu0 0
  %819 = vmatpush1.bf16.msra.mxu0 %v608
  %820 = vmatprep.subr.bf16.mxu0 0
  %821 = vmatpush1.bf16.msra.mxu0 %v609
  %822 = vmatprep.subr.bf16.mxu0 0
  %823 = vmatpush1.bf16.msra.mxu0 %v610
  %824 = vmatprep.subr.bf16.mxu0 0
  %825 = vmatpush1.bf16.msra.mxu0 %v611
  %826 = vmatprep.subr.bf16.mxu0 0
  %827 = vmatpush1.bf16.msra.mxu0 %v612
  %828 = vmatprep.subr.bf16.mxu0 0
  %829 = vmatpush1.bf16.msra.mxu0 %v613
  %830 = vmatprep.subr.bf16.mxu0 0
  %831 = vmatpush1.bf16.msra.mxu0 %v614
  %832 = vmatprep.subr.bf16.mxu0 0
  %833 = vmatpush1.bf16.msra.mxu0 %v615
  %834 = vmatprep.subr.bf16.mxu0 0
  %835 = vmatpush1.bf16.msra.mxu0 %v616
  %836 = vmatprep.subr.bf16.mxu0 0
  %837 = vmatpush1.bf16.msra.mxu0 %v617
  %838 = vmatprep.subr.bf16.mxu0 0
  %839 = vmatpush1.bf16.msra.mxu0 %v618
  %840 = vmatprep.subr.bf16.mxu0 0
  %841 = vmatpush1.bf16.msra.mxu0 %v619
  %842 = vmatprep.subr.bf16.mxu0 0
  %843 = vmatpush1.bf16.msra.mxu0 %v620
  %844 = vmatprep.subr.bf16.mxu0 0
  %845 = vmatpush1.bf16.msra.mxu0 %v621
  %846 = vmatprep.subr.bf16.mxu0 0
  %847 = vmatpush1.bf16.msra.mxu0 %v622
  %848 = vmatprep.mubr.bf16.mxu0 %v338
  %849 = vmatmul.mubr.bf16.gmra.mrb[0].mxu0 %v337
  %v850 = vpop.f32.mrb[0].mxu0
  %v851 = vadd.f32 %v690, %v850
  %v852 = vpop.f32.mrb[0].mxu0
  %v853 = vpop.f32.mrb[0].mxu0
  %v854 = vadd.f32 %v693, %v853
  %v855 = vpop.f32.mrb[0].mxu0
  %856 = vmatprep.mubr.bf16.mxu0 %v342
  %857 = vmatmul.mubr.bf16.gmra.mrb[0].mxu0 %v341
  %v858 = vpop.f32.mrb[0].mxu0
  %v859 = vadd.f32 %v698, %v858
  %v860 = vpop.f32.mrb[0].mxu0
  %v861 = vpop.f32.mrb[0].mxu0
  %v862 = vadd.f32 %v701, %v861
  %v863 = vpop.f32.mrb[0].mxu0
  %864 = vmatprep.mubr.bf16.mxu0 %v346
  %865 = vmatmul.mubr.bf16.gmra.mrb[0].mxu0 %v345
  %v866 = vpop.f32.mrb[0].mxu0
  %v867 = vadd.f32 %v706, %v866
  %v868 = vpop.f32.mrb[0].mxu0
  %v869 = vpop.f32.mrb[0].mxu0
  %v870 = vadd.f32 %v709, %v869
  %v871 = vpop.f32.mrb[0].mxu0
  %872 = vmatprep.mubr.bf16.mxu0 %v350
  %873 = vmatmul.mubr.bf16.gmra.mrb[0].mxu0 %v349
  %v874 = vpop.f32.mrb[0].mxu0
  %v875 = vadd.f32 %v714, %v874
  %v876 = vpop.f32.mrb[0].mxu0
  %v877 = vpop.f32.mrb[0].mxu0
  %v878 = vadd.f32 %v717, %v877
  %v879 = vpop.f32.mrb[0].mxu0
  %880 = vmatprep.mubr.bf16.mxu0 %v354
  %881 = vmatmul.mubr.bf16.gmra.mrb[0].mxu0 %v353
  %v882 = vpop.f32.mrb[0].mxu0
  %v883 = vadd.f32 %v722, %v882
  %v884 = vpop.f32.mrb[0].mxu0
  %v885 = vpop.f32.mrb[0].mxu0
  %v886 = vadd.f32 %v725, %v885
  %v887 = vpop.f32.mrb[0].mxu0
  %888 = vmatprep.mubr.bf16.mxu0 %v358
  %889 = vmatmul.mubr.bf16.gmra.mrb[0].mxu0 %v357
  %v890 = vpop.f32.mrb[0].mxu0
  %v891 = vadd.f32 %v730, %v890
  %v892 = vpop.f32.mrb[0].mxu0
  %v893 = vpop.f32.mrb[0].mxu0
  %v894 = vadd.f32 %v733, %v893
  %v895 = vpop.f32.mrb[0].mxu0
  %896 = vmatprep.mubr.bf16.mxu0 %v362
  %897 = vmatmul.mubr.bf16.gmra.mrb[0].mxu0 %v361
  %v898 = vpop.f32.mrb[0].mxu0
  %v899 = vadd.f32 %v738, %v898
  %v900 = vpop.f32.mrb[0].mxu0
  %v901 = vpop.f32.mrb[0].mxu0
  %v902 = vadd.f32 %v741, %v901
  %v903 = vpop.f32.mrb[0].mxu0
  %904 = vmatprep.mubr.bf16.mxu0 %v366
  %905 = vmatmul.mubr.bf16.gmra.mrb[0].mxu0 %v365
  %v906 = vpop.f32.mrb[0].mxu0
  %v907 = vadd.f32 %v746, %v906
  %v908 = vpop.f32.mrb[0].mxu0
  %v909 = vpop.f32.mrb[0].mxu0
  %v910 = vadd.f32 %v749, %v909
  %v911 = vpop.f32.mrb[0].mxu0
  %912 = vmatprep.mubr.bf16.mxu0 %v370
  %913 = vmatmul.mubr.bf16.gmra.mrb[0].mxu0 %v369
  %v914 = vpop.f32.mrb[0].mxu0
  %v915 = vadd.f32 %v754, %v914
  %v916 = vpop.f32.mrb[0].mxu0
  %v917 = vpop.f32.mrb[0].mxu0
  %v918 = vadd.f32 %v757, %v917
  %v919 = vpop.f32.mrb[0].mxu0
  %920 = vmatprep.mubr.bf16.mxu0 %v374
  %921 = vmatmul.mubr.bf16.gmra.mrb[0].mxu0 %v373
  %v922 = vpop.f32.mrb[0].mxu0
  %v923 = vadd.f32 %v762, %v922
  %v924 = vpop.f32.mrb[0].mxu0
  %v925 = vpop.f32.mrb[0].mxu0
  %v926 = vadd.f32 %v765, %v925
  %v927 = vpop.f32.mrb[0].mxu0
  %928 = vmatprep.mubr.bf16.mxu0 %v378
  %929 = vmatmul.mubr.bf16.gmra.mrb[0].mxu0 %v377
  %v930 = vpop.f32.mrb[0].mxu0
  %v931 = vadd.f32 %v770, %v930
  %v932 = vpop.f32.mrb[0].mxu0
  %v933 = vpop.f32.mrb[0].mxu0
  %v934 = vadd.f32 %v773, %v933
  %v935 = vpop.f32.mrb[0].mxu0
  %936 = vmatprep.mubr.bf16.mxu0 %v382
  %937 = vmatmul.mubr.bf16.gmra.mrb[0].mxu0 %v381
  %v938 = vpop.f32.mrb[0].mxu0
  %v939 = vadd.f32 %v778, %v938
  %v940 = vpop.f32.mrb[0].mxu0
  %v941 = vpop.f32.mrb[0].mxu0
  %v942 = vadd.f32 %v781, %v941
  %v943 = vpop.f32.mrb[0].mxu0
  %944 = vmatprep.mubr.bf16.mxu0 %v386
  %945 = vmatmul.mubr.bf16.gmra.mrb[0].mxu0 %v385
  %v946 = vpop.f32.mrb[0].mxu0
  %v947 = vadd.f32 %v786, %v946
  %v948 = vpop.f32.mrb[0].mxu0
  %v949 = vpop.f32.mrb[0].mxu0
  %v950 = vadd.f32 %v789, %v949
  %v951 = vpop.f32.mrb[0].mxu0
  %952 = vmatprep.mubr.bf16.mxu0 %v390
  %953 = vmatmul.mubr.bf16.gmra.mrb[0].mxu0 %v389
  %v954 = vpop.f32.mrb[0].mxu0
  %v955 = vadd.f32 %v794, %v954
  %v956 = vpop.f32.mrb[0].mxu0
  %v957 = vpop.f32.mrb[0].mxu0
  %v958 = vadd.f32 %v797, %v957
  %v959 = vpop.f32.mrb[0].mxu0
  %960 = vmatprep.mubr.bf16.mxu0 %v394
  %961 = vmatmul.mubr.bf16.gmra.mrb[0].mxu0 %v393
  %v962 = vpop.f32.mrb[0].mxu0
  %v963 = vadd.f32 %v802, %v962
  %v964 = vpop.f32.mrb[0].mxu0
  %v965 = vpop.f32.mrb[0].mxu0
  %v966 = vadd.f32 %v805, %v965
  %v967 = vpop.f32.mrb[0].mxu0
  %968 = vmatprep.mubr.bf16.mxu0 %v398
  %969 = vmatmul.mubr.bf16.gmra.mrb[0].mxu0 %v397
  %v970 = vpop.f32.mrb[0].mxu0
  %v971 = vadd.f32 %v810, %v970
  %v972 = vpop.f32.mrb[0].mxu0
  %v973 = vpop.f32.mrb[0].mxu0
  %v974 = vadd.f32 %v813, %v973
  %v975 = vpop.f32.mrb[0].mxu0
  %976 = vdwg.mxu0
  %v977 = vmax.f32 %v851, %v883
  %v978 = vmax.f32 %v854, %v886
  %v979 = vmax.f32 %v859, %v891
  %v980 = vmax.f32 %v862, %v894
  %v981 = vmax.f32 %v867, %v899
  %v982 = vmax.f32 %v870, %v902
  %v983 = vmax.f32 %v875, %v907
  %v984 = vmax.f32 %v878, %v910
  %v985 = vmax.f32 %v915, %v947
  %v986 = vmax.f32 %v918, %v950
  %v987 = vmax.f32 %v923, %v955
  %v988 = vmax.f32 %v926, %v958
  %v989 = vmax.f32 %v931, %v963
  %v990 = vmax.f32 %v934, %v966
  %v991 = vmax.f32 %v939, %v971
  %v992 = vmax.f32 %v942, %v974
  %v993 = vmax.f32 %v977, %v985
  %v994 = vmax.f32 %v978, %v986
  %v995 = vmax.f32 %v979, %v987
  %v996 = vmax.f32 %v980, %v988
  %v997 = vmax.f32 %v981, %v989
  %v998 = vmax.f32 %v982, %v990
  %v999 = vmax.f32 %v983, %v991
  %v1000 = vmax.f32 %v984, %v992
  %v1001 = vld [vmem:[%s2] sm:$0xff]
  %v1002 = vld [vmem:[%s2 + $0x8] sm:$0xff]
  %v1003 = vld [vmem:[%s2 + $0x10] sm:$0xff]
  %v1004 = vld [vmem:[%s2 + $0x18] sm:$0xff]
  %v1005 = vld [vmem:[%s2 + $0x20] sm:$0xff]
  %v1006 = vld [vmem:[%s2 + $0x28] sm:$0xff]
  %v1007 = vld [vmem:[%s2 + $0x30] sm:$0xff]
  %v1008 = vld [vmem:[%s2 + $0x38] sm:$0xff]
  %1010 = vset.pattern.permute.xlu0 0
  %1011 = vperm.xlu0 %1010, %v1001
  %v1012 = vpop.permute.xlu0 %1011
  %1015 = vset.pattern.permute.xlu0 0
  %1016 = vperm.xlu0 %1015, %v1002
  %v1017 = vpop.permute.xlu0 %1016
  %1020 = vset.pattern.permute.xlu0 0
  %1021 = vperm.xlu0 %1020, %v1003
  %v1022 = vpop.permute.xlu0 %1021
  %1025 = vset.pattern.permute.xlu0 0
  %1026 = vperm.xlu0 %1025, %v1004
  %v1027 = vpop.permute.xlu0 %1026
  %1030 = vset.pattern.permute.xlu0 0
  %1031 = vperm.xlu0 %1030, %v1005
  %v1032 = vpop.permute.xlu0 %1031
  %1035 = vset.pattern.permute.xlu0 0
  %1036 = vperm.xlu0 %1035, %v1006
  %v1037 = vpop.permute.xlu0 %1036
  %1040 = vset.pattern.permute.xlu0 0
  %1041 = vperm.xlu0 %1040, %v1007
  %v1042 = vpop.permute.xlu0 %1041
  %1045 = vset.pattern.permute.xlu0 0
  %1046 = vperm.xlu0 %1045, %v1008
  %v1047 = vpop.permute.xlu0 %1046
  %v1049 = vadd.f32 %v993, %v1012
  %v1050 = vadd.f32 %v994, %v1017
  %v1051 = vadd.f32 %v995, %v1022
  %v1052 = vadd.f32 %v996, %v1027
  %v1053 = vadd.f32 %v997, %v1032
  %v1054 = vadd.f32 %v998, %v1037
  %v1055 = vadd.f32 %v999, %v1042
  %v1056 = vadd.f32 %v1000, %v1047
  %v1057 = vmax.f32 %v1049, 0.0
  %v1058 = vmax.f32 %v1050, 0.0
  %v1059 = vmax.f32 %v1051, 0.0
  %v1060 = vmax.f32 %v1052, 0.0
  %v1061 = vmax.f32 %v1053, 0.0
  %v1062 = vmax.f32 %v1054, 0.0
  %v1063 = vmax.f32 %v1055, 0.0
  %v1064 = vmax.f32 %v1056, 0.0
  %v1065 = vpack.c.bf16 %v1058, %v1057
  %v1066 = vpack.c.bf16 %v1060, %v1059
  %v1067 = vpack.c.bf16 %v1062, %v1061
  %v1068 = vpack.c.bf16 %v1064, %v1063
  %v1073 = vunpack.c.l.b16 %v1065
  %v1074 = vunpack.c.h.b16 %v1065
  %v1075 = vunpack.c.l.b16 %v1066
  %v1076 = vunpack.c.h.b16 %v1066
  %v1077 = vunpack.c.l.b16 %v1067
  %v1078 = vunpack.c.h.b16 %v1067
  %v1079 = vunpack.c.l.b16 %v1068
  %v1080 = vunpack.c.h.b16 %v1068
  %v1081 = vpack.c.b16 %v1073, %v1073
  %v1082 = vpack.c.b16 %v1074, %v1074
  %v1083 = vpack.c.b16 %v1075, %v1075
  %v1084 = vpack.c.b16 %v1076, %v1076
  %v1085 = vpack.c.b16 %v1077, %v1077
  %v1086 = vpack.c.b16 %v1078, %v1078
  %v1087 = vpack.c.b16 %v1079, %v1079
  %v1088 = vpack.c.b16 %v1080, %v1080
  %1097 = vst [vmem:[%s3] sm:$0xf] %v1081
  %1098 = vst [vmem:[%s3 + $0x4] sm:$0xf] %v1082
  %1099 = vst [vmem:[%s3 + $0x8] sm:$0xf] %v1083
  %1100 = vst [vmem:[%s3 + $0xc] sm:$0xf] %v1084
  %1101 = vst [vmem:[%s3 + $0x10] sm:$0xf] %v1085
  %1102 = vst [vmem:[%s3 + $0x14] sm:$0xf] %v1086
  %1103 = vst [vmem:[%s3 + $0x18] sm:$0xf] %v1087
  %1104 = vst [vmem:[%s3 + $0x1c] sm:$0xf] %v1088
  // Predicated region
  $region14: #{simple_cnn_forward.4} parent=0 // pred_check
    _
  $region15: #{simple_cnn_forward.4} parent=0 // pred_check_branch
    %1106 = sbr.rel (0) target = $region17
  $region16: #{simple_cnn_forward.4} parent=0 // pred_region
    _
  $region17: #{simple_cnn_forward.4} parent=0 // pred_fallthru
    _
  // Predicated region
  $region18: #{simple_cnn_forward.4} parent=0 // pred_check
    _
  $region19: #{simple_cnn_forward.4} parent=0 // pred_check_branch
    %1108 = sbr.rel (0) target = $region21
  $region20: #{simple_cnn_forward.4} parent=0 // pred_region
    _
  $region21: #{simple_cnn_forward.4} parent=0 // pred_fallthru
    _

// kernel: simple_cnn_forward.5
$region0: #{simple_cnn_forward.5}
  #allocation0 [shape = 'u32[]', space=smem, size = 0x4, offset = 0x4, fixed_abs, tag = 'smem constant byte address 0x4 - core index']
  #allocation1 [shape = 'u32[144,128]{1,0:T(1,128)}', space=vmem, size = 0x12000, scoped, tag = 'internal scratch']
  %s0 = inlined_call_operand.vmem [shape: bf16[8,3136], index: 0, kind: input, shape index: {}]
  %s1 = inlined_call_operand.vmem [shape: bf16[3136,128], index: 1, kind: input, shape index: {}]
  %s2 = inlined_call_operand.vmem [shape: f32[1,128], index: 2, kind: input, shape index: {}]
  %s3 = inlined_call_operand.vmem [shape: bf16[128,128], index: 3, kind: input, shape index: {}]
  %s4 = inlined_call_operand.vmem [shape: f32[1,128], index: 4, kind: input, shape index: {}]
  %s5 = inlined_call_operand.vmem [shape: f32[8,128], index: 5, kind: output, shape index: {}]
  %s6 = sld [smem:[#allocation0]]
  $region30: #{simple_cnn_forward.5} parent=0
    _
  %s8 = ssub.s32 1, %s6
  %s9 = scalar_select 0, %s8, %s6
  // Predicated region
  $region2: #{simple_cnn_forward.5} parent=0 // pred_check
    _
  $region3: #{simple_cnn_forward.5} parent=0 // pred_check_branch
    %11 = sbr.rel (0) target = $region5
  $region4: #{simple_cnn_forward.5} parent=0 // pred_region
    _
  $region5: #{simple_cnn_forward.5} parent=0 // pred_fallthru
    _
  // Predicated region
  $region6: #{simple_cnn_forward.5} parent=0 // pred_check
    _
  $region7: #{simple_cnn_forward.5} parent=0 // pred_check_branch
    %13 = sbr.rel (0) target = $region9
  $region8: #{simple_cnn_forward.5} parent=0 // pred_region
    _
  $region9: #{simple_cnn_forward.5} parent=0 // pred_fallthru
    _
  // Predicated region
  $region10: #{simple_cnn_forward.5} parent=0 // pred_check
    _
  $region11: #{simple_cnn_forward.5} parent=0 // pred_check_branch
    %15 = sbr.rel (0) target = $region13
  $region12: #{simple_cnn_forward.5} parent=0 // pred_region
    _
  $region13: #{simple_cnn_forward.5} parent=0 // pred_fallthru
    _
  // Predicated region
  $region14: #{simple_cnn_forward.5} parent=0 // pred_check
    _
  $region15: #{simple_cnn_forward.5} parent=0 // pred_check_branch
    %17 = sbr.rel (0) target = $region17
  $region16: #{simple_cnn_forward.5} parent=0 // pred_region
    _
  $region17: #{simple_cnn_forward.5} parent=0 // pred_fallthru
    _
  // Predicated region
  $region18: #{simple_cnn_forward.5} parent=0 // pred_check
    _
  $region19: #{simple_cnn_forward.5} parent=0 // pred_check_branch
    %19 = sbr.rel (0) target = $region21
  $region20: #{simple_cnn_forward.5} parent=0 // pred_region
    _
  $region21: #{simple_cnn_forward.5} parent=0 // pred_fallthru
    _
  %v21 = vld [vmem:[%s0] sm:$0xff]
  %v22 = vld [vmem:[%s0 + $0x8] sm:$0xff]
  %v23 = vld [vmem:[%s0 + $0x10] sm:$0xff]
  %v24 = vld [vmem:[%s0 + $0x18] sm:$0xff]
  %v25 = vld [vmem:[%s0 + $0x20] sm:$0xff]
  %v26 = vld [vmem:[%s0 + $0x28] sm:$0xff]
  %v27 = vld [vmem:[%s0 + $0x30] sm:$0xff]
  %v28 = vld [vmem:[%s0 + $0x38] sm:$0xff]
  %v29 = vld [vmem:[%s0 + $0x40] sm:$0xff]
  %v30 = vld [vmem:[%s0 + $0x48] sm:$0xff]
  %v31 = vld [vmem:[%s0 + $0x50] sm:$0xff]
  %v32 = vld [vmem:[%s0 + $0x58] sm:$0xff]
  %v33 = vld [vmem:[%s0 + $0x60] sm:$0xf]
  %v34 = vld [vmem:[%s1] sm:$0xf]
  %v35 = vld [vmem:[%s1 + $0x4] sm:$0xf]
  %v36 = vld [vmem:[%s1 + $0x8] sm:$0xf]
  %v37 = vld [vmem:[%s1 + $0xc] sm:$0xf]
  %v38 = vld [vmem:[%s1 + $0x10] sm:$0xf]
  %v39 = vld [vmem:[%s1 + $0x14] sm:$0xf]
  %v40 = vld [vmem:[%s1 + $0x18] sm:$0xf]
  %v41 = vld [vmem:[%s1 + $0x1c] sm:$0xf]
  %v42 = vld [vmem:[%s1 + $0x20] sm:$0xf]
  %v43 = vld [vmem:[%s1 + $0x24] sm:$0xf]
  %v44 = vld [vmem:[%s1 + $0x28] sm:$0xf]
  %v45 = vld [vmem:[%s1 + $0x2c] sm:$0xf]
  %v46 = vld [vmem:[%s1 + $0x30] sm:$0xf]
  %v47 = vld [vmem:[%s1 + $0x34] sm:$0xf]
  %v48 = vld [vmem:[%s1 + $0x38] sm:$0xf]
  %v49 = vld [vmem:[%s1 + $0x3c] sm:$0xf]
  %v50 = vld [vmem:[%s1 + $0x40] sm:$0xf]
  %v51 = vld [vmem:[%s1 + $0x44] sm:$0xf]
  %v52 = vld [vmem:[%s1 + $0x48] sm:$0xf]
  %v53 = vld [vmem:[%s1 + $0x4c] sm:$0xf]
  %v54 = vld [vmem:[%s1 + $0x50] sm:$0xf]
  %v55 = vld [vmem:[%s1 + $0x54] sm:$0xf]
  %v56 = vld [vmem:[%s1 + $0x58] sm:$0xf]
  %v57 = vld [vmem:[%s1 + $0x5c] sm:$0xf]
  %v58 = vld [vmem:[%s1 + $0x60] sm:$0xf]
  %v59 = vld [vmem:[%s1 + $0x64] sm:$0xf]
  %v60 = vld [vmem:[%s1 + $0x68] sm:$0xf]
  %v61 = vld [vmem:[%s1 + $0x6c] sm:$0xf]
  %v62 = vld [vmem:[%s1 + $0x70] sm:$0xf]
  %v63 = vld [vmem:[%s1 + $0x74] sm:$0xf]
  %v64 = vld [vmem:[%s1 + $0x78] sm:$0xf]
  %v65 = vld [vmem:[%s1 + $0x7c] sm:$0xf]
  %v66 = vld [vmem:[%s1 + $0x80] sm:$0xf]
  %v67 = vld [vmem:[%s1 + $0x84] sm:$0xf]
  %v68 = vld [vmem:[%s1 + $0x88] sm:$0xf]
  %v69 = vld [vmem:[%s1 + $0x8c] sm:$0xf]
  %v70 = vld [vmem:[%s1 + $0x90] sm:$0xf]
  %v71 = vld [vmem:[%s1 + $0x94] sm:$0xf]
  %v72 = vld [vmem:[%s1 + $0x98] sm:$0xf]
  %v73 = vld [vmem:[%s1 + $0x9c] sm:$0xf]
  %v74 = vld [vmem:[%s1 + $0xa0] sm:$0xf]
  %v75 = vld [vmem:[%s1 + $0xa4] sm:$0xf]
  %v76 = vld [vmem:[%s1 + $0xa8] sm:$0xf]
  %v77 = vld [vmem:[%s1 + $0xac] sm:$0xf]
  %v78 = vld [vmem:[%s1 + $0xb0] sm:$0xf]
  %v79 = vld [vmem:[%s1 + $0xb4] sm:$0xf]
  %v80 = vld [vmem:[%s1 + $0xb8] sm:$0xf]
  %v81 = vld [vmem:[%s1 + $0xbc] sm:$0xf]
  %v82 = vld [vmem:[%s1 + $0xc0] sm:$0xf]
  %v83 = vld [vmem:[%s1 + $0xc4] sm:$0xf]
  %v84 = vld [vmem:[%s1 + $0xc8] sm:$0xf]
  %v85 = vld [vmem:[%s1 + $0xcc] sm:$0xf]
  %v86 = vld [vmem:[%s1 + $0xd0] sm:$0xf]
  %v87 = vld [vmem:[%s1 + $0xd4] sm:$0xf]
  %v88 = vld [vmem:[%s1 + $0xd8] sm:$0xf]
  %v89 = vld [vmem:[%s1 + $0xdc] sm:$0xf]
  %v90 = vld [vmem:[%s1 + $0xe0] sm:$0xf]
  %v91 = vld [vmem:[%s1 + $0xe4] sm:$0xf]
  %v92 = vld [vmem:[%s1 + $0xe8] sm:$0xf]
  %v93 = vld [vmem:[%s1 + $0xec] sm:$0xf]
  %v94 = vld [vmem:[%s1 + $0xf0] sm:$0xf]
  %v95 = vld [vmem:[%s1 + $0xf4] sm:$0xf]
  %v96 = vld [vmem:[%s1 + $0xf8] sm:$0xf]
  %v97 = vld [vmem:[%s1 + $0xfc] sm:$0xf]
  %v98 = vld [vmem:[%s1 + $0x100] sm:$0xf]
  %v99 = vld [vmem:[%s1 + $0x104] sm:$0xf]
  %v100 = vld [vmem:[%s1 + $0x108] sm:$0xf]
  %v101 = vld [vmem:[%s1 + $0x10c] sm:$0xf]
  %v102 = vld [vmem:[%s1 + $0x110] sm:$0xf]
  %v103 = vld [vmem:[%s1 + $0x114] sm:$0xf]
  %v104 = vld [vmem:[%s1 + $0x118] sm:$0xf]
  %v105 = vld [vmem:[%s1 + $0x11c] sm:$0xf]
  %v106 = vld [vmem:[%s1 + $0x120] sm:$0xf]
  %v107 = vld [vmem:[%s1 + $0x124] sm:$0xf]
  %v108 = vld [vmem:[%s1 + $0x128] sm:$0xf]
  %v109 = vld [vmem:[%s1 + $0x12c] sm:$0xf]
  %v110 = vld [vmem:[%s1 + $0x130] sm:$0xf]
  %v111 = vld [vmem:[%s1 + $0x134] sm:$0xf]
  %v112 = vld [vmem:[%s1 + $0x138] sm:$0xf]
  %v113 = vld [vmem:[%s1 + $0x13c] sm:$0xf]
  %v114 = vld [vmem:[%s1 + $0x140] sm:$0xf]
  %v115 = vld [vmem:[%s1 + $0x144] sm:$0xf]
  %v116 = vld [vmem:[%s1 + $0x148] sm:$0xf]
  %v117 = vld [vmem:[%s1 + $0x14c] sm:$0xf]
  %v118 = vld [vmem:[%s1 + $0x150] sm:$0xf]
  %v119 = vld [vmem:[%s1 + $0x154] sm:$0xf]
  %v120 = vld [vmem:[%s1 + $0x158] sm:$0xf]
  %v121 = vld [vmem:[%s1 + $0x15c] sm:$0xf]
  %v122 = vld [vmem:[%s1 + $0x160] sm:$0xf]
  %v123 = vld [vmem:[%s1 + $0x164] sm:$0xf]
  %v124 = vld [vmem:[%s1 + $0x168] sm:$0xf]
  %v125 = vld [vmem:[%s1 + $0x16c] sm:$0xf]
  %v126 = vld [vmem:[%s1 + $0x170] sm:$0xf]
  %v127 = vld [vmem:[%s1 + $0x174] sm:$0xf]
  %v128 = vld [vmem:[%s1 + $0x178] sm:$0xf]
  %v129 = vld [vmem:[%s1 + $0x17c] sm:$0xf]
  %v130 = vld [vmem:[%s1 + $0x180] sm:$0xf]
  %v131 = vld [vmem:[%s1 + $0x184] sm:$0xf]
  %v132 = vld [vmem:[%s1 + $0x188] sm:$0xf]
  %v133 = vld [vmem:[%s1 + $0x18c] sm:$0xf]
  %v134 = vld [vmem:[%s1 + $0x190] sm:$0xf]
  %v135 = vld [vmem:[%s1 + $0x194] sm:$0xf]
  %v136 = vld [vmem:[%s1 + $0x198] sm:$0xf]
  %v137 = vld [vmem:[%s1 + $0x19c] sm:$0xf]
  %v138 = vld [vmem:[%s1 + $0x1a0] sm:$0xf]
  %v139 = vld [vmem:[%s1 + $0x1a4] sm:$0xf]
  %v140 = vld [vmem:[%s1 + $0x1a8] sm:$0xf]
  %v141 = vld [vmem:[%s1 + $0x1ac] sm:$0xf]
  %v142 = vld [vmem:[%s1 + $0x1b0] sm:$0xf]
  %v143 = vld [vmem:[%s1 + $0x1b4] sm:$0xf]
  %v144 = vld [vmem:[%s1 + $0x1b8] sm:$0xf]
  %v145 = vld [vmem:[%s1 + $0x1bc] sm:$0xf]
  %v146 = vld [vmem:[%s1 + $0x1c0] sm:$0xf]
  %v147 = vld [vmem:[%s1 + $0x1c4] sm:$0xf]
  %v148 = vld [vmem:[%s1 + $0x1c8] sm:$0xf]
  %v149 = vld [vmem:[%s1 + $0x1cc] sm:$0xf]
  %v150 = vld [vmem:[%s1 + $0x1d0] sm:$0xf]
  %v151 = vld [vmem:[%s1 + $0x1d4] sm:$0xf]
  %v152 = vld [vmem:[%s1 + $0x1d8] sm:$0xf]
  %v153 = vld [vmem:[%s1 + $0x1dc] sm:$0xf]
  %v154 = vld [vmem:[%s1 + $0x1e0] sm:$0xf]
  %v155 = vld [vmem:[%s1 + $0x1e4] sm:$0xf]
  %v156 = vld [vmem:[%s1 + $0x1e8] sm:$0xf]
  %v157 = vld [vmem:[%s1 + $0x1ec] sm:$0xf]
  %v158 = vld [vmem:[%s1 + $0x1f0] sm:$0xf]
  %v159 = vld [vmem:[%s1 + $0x1f4] sm:$0xf]
  %v160 = vld [vmem:[%s1 + $0x1f8] sm:$0xf]
  %v161 = vld [vmem:[%s1 + $0x1fc] sm:$0xf]
  %v162 = vld [vmem:[%s1 + $0x200] sm:$0xf]
  %v163 = vld [vmem:[%s1 + $0x204] sm:$0xf]
  %v164 = vld [vmem:[%s1 + $0x208] sm:$0xf]
  %v165 = vld [vmem:[%s1 + $0x20c] sm:$0xf]
  %v166 = vld [vmem:[%s1 + $0x210] sm:$0xf]
  %v167 = vld [vmem:[%s1 + $0x214] sm:$0xf]
  %v168 = vld [vmem:[%s1 + $0x218] sm:$0xf]
  %v169 = vld [vmem:[%s1 + $0x21c] sm:$0xf]
  %v170 = vld [vmem:[%s1 + $0x220] sm:$0xf]
  %v171 = vld [vmem:[%s1 + $0x224] sm:$0xf]
  %v172 = vld [vmem:[%s1 + $0x228] sm:$0xf]
  %v173 = vld [vmem:[%s1 + $0x22c] sm:$0xf]
  %v174 = vld [vmem:[%s1 + $0x230] sm:$0xf]
  %v175 = vld [vmem:[%s1 + $0x234] sm:$0xf]
  %v176 = vld [vmem:[%s1 + $0x238] sm:$0xf]
  %v177 = vld [vmem:[%s1 + $0x23c] sm:$0xf]
  %v178 = vld [vmem:[%s1 + $0x240] sm:$0xf]
  %v179 = vld [vmem:[%s1 + $0x244] sm:$0xf]
  %v180 = vld [vmem:[%s1 + $0x248] sm:$0xf]
  %v181 = vld [vmem:[%s1 + $0x24c] sm:$0xf]
  %v182 = vld [vmem:[%s1 + $0x250] sm:$0xf]
  %v183 = vld [vmem:[%s1 + $0x254] sm:$0xf]
  %v184 = vld [vmem:[%s1 + $0x258] sm:$0xf]
  %v185 = vld [vmem:[%s1 + $0x25c] sm:$0xf]
  %v186 = vld [vmem:[%s1 + $0x260] sm:$0xf]
  %v187 = vld [vmem:[%s1 + $0x264] sm:$0xf]
  %v188 = vld [vmem:[%s1 + $0x268] sm:$0xf]
  %v189 = vld [vmem:[%s1 + $0x26c] sm:$0xf]
  %v190 = vld [vmem:[%s1 + $0x270] sm:$0xf]
  %v191 = vld [vmem:[%s1 + $0x274] sm:$0xf]
  %v192 = vld [vmem:[%s1 + $0x278] sm:$0xf]
  %v193 = vld [vmem:[%s1 + $0x27c] sm:$0xf]
  %v194 = vld [vmem:[%s1 + $0x280] sm:$0xf]
  %v195 = vld [vmem:[%s1 + $0x284] sm:$0xf]
  %v196 = vld [vmem:[%s1 + $0x288] sm:$0xf]
  %v197 = vld [vmem:[%s1 + $0x28c] sm:$0xf]
  %v198 = vld [vmem:[%s1 + $0x290] sm:$0xf]
  %v199 = vld [vmem:[%s1 + $0x294] sm:$0xf]
  %v200 = vld [vmem:[%s1 + $0x298] sm:$0xf]
  %v201 = vld [vmem:[%s1 + $0x29c] sm:$0xf]
  %v202 = vld [vmem:[%s1 + $0x2a0] sm:$0xf]
  %v203 = vld [vmem:[%s1 + $0x2a4] sm:$0xf]
  %v204 = vld [vmem:[%s1 + $0x2a8] sm:$0xf]
  %v205 = vld [vmem:[%s1 + $0x2ac] sm:$0xf]
  %v206 = vld [vmem:[%s1 + $0x2b0] sm:$0xf]
  %v207 = vld [vmem:[%s1 + $0x2b4] sm:$0xf]
  %v208 = vld [vmem:[%s1 + $0x2b8] sm:$0xf]
  %v209 = vld [vmem:[%s1 + $0x2bc] sm:$0xf]
  %v210 = vld [vmem:[%s1 + $0x2c0] sm:$0xf]
  %v211 = vld [vmem:[%s1 + $0x2c4] sm:$0xf]
  %v212 = vld [vmem:[%s1 + $0x2c8] sm:$0xf]
  %v213 = vld [vmem:[%s1 + $0x2cc] sm:$0xf]
  %v214 = vld [vmem:[%s1 + $0x2d0] sm:$0xf]
  %v215 = vld [vmem:[%s1 + $0x2d4] sm:$0xf]
  %v216 = vld [vmem:[%s1 + $0x2d8] sm:$0xf]
  %v217 = vld [vmem:[%s1 + $0x2dc] sm:$0xf]
  %v218 = vld [vmem:[%s1 + $0x2e0] sm:$0xf]
  %v219 = vld [vmem:[%s1 + $0x2e4] sm:$0xf]
  %v220 = vld [vmem:[%s1 + $0x2e8] sm:$0xf]
  %v221 = vld [vmem:[%s1 + $0x2ec] sm:$0xf]
  %v222 = vld [vmem:[%s1 + $0x2f0] sm:$0xf]
  %v223 = vld [vmem:[%s1 + $0x2f4] sm:$0xf]
  %v224 = vld [vmem:[%s1 + $0x2f8] sm:$0xf]
  %v225 = vld [vmem:[%s1 + $0x2fc] sm:$0xf]
  %v226 = vld [vmem:[%s1 + $0x300] sm:$0xf]
  %v227 = vld [vmem:[%s1 + $0x304] sm:$0xf]
  %v228 = vld [vmem:[%s1 + $0x308] sm:$0xf]
  %v229 = vld [vmem:[%s1 + $0x30c] sm:$0xf]
  %v230 = vld [vmem:[%s1 + $0x310] sm:$0xf]
  %v231 = vld [vmem:[%s1 + $0x314] sm:$0xf]
  %v232 = vld [vmem:[%s1 + $0x318] sm:$0xf]
  %v233 = vld [vmem:[%s1 + $0x31c] sm:$0xf]
  %v234 = vld [vmem:[%s1 + $0x320] sm:$0xf]
  %v235 = vld [vmem:[%s1 + $0x324] sm:$0xf]
  %v236 = vld [vmem:[%s1 + $0x328] sm:$0xf]
  %v237 = vld [vmem:[%s1 + $0x32c] sm:$0xf]
  %v238 = vld [vmem:[%s1 + $0x330] sm:$0xf]
  %v239 = vld [vmem:[%s1 + $0x334] sm:$0xf]
  %v240 = vld [vmem:[%s1 + $0x338] sm:$0xf]
  %v241 = vld [vmem:[%s1 + $0x33c] sm:$0xf]
  %v242 = vld [vmem:[%s1 + $0x340] sm:$0xf]
  %v243 = vld [vmem:[%s1 + $0x344] sm:$0xf]
  %v244 = vld [vmem:[%s1 + $0x348] sm:$0xf]
  %v245 = vld [vmem:[%s1 + $0x34c] sm:$0xf]
  %v246 = vld [vmem:[%s1 + $0x350] sm:$0xf]
  %v247 = vld [vmem:[%s1 + $0x354] sm:$0xf]
  %v248 = vld [vmem:[%s1 + $0x358] sm:$0xf]
  %v249 = vld [vmem:[%s1 + $0x35c] sm:$0xf]
  %v250 = vld [vmem:[%s1 + $0x360] sm:$0xf]
  %v251 = vld [vmem:[%s1 + $0x364] sm:$0xf]
  %v252 = vld [vmem:[%s1 + $0x368] sm:$0xf]
  %v253 = vld [vmem:[%s1 + $0x36c] sm:$0xf]
  %v254 = vld [vmem:[%s1 + $0x370] sm:$0xf]
  %v255 = vld [vmem:[%s1 + $0x374] sm:$0xf]
  %v256 = vld [vmem:[%s1 + $0x378] sm:$0xf]
  %v257 = vld [vmem:[%s1 + $0x37c] sm:$0xf]
  %v258 = vld [vmem:[%s1 + $0x380] sm:$0xf]
  %v259 = vld [vmem:[%s1 + $0x384] sm:$0xf]
  %v260 = vld [vmem:[%s1 + $0x388] sm:$0xf]
  %v261 = vld [vmem:[%s1 + $0x38c] sm:$0xf]
  %v262 = vld [vmem:[%s1 + $0x390] sm:$0xf]
  %v263 = vld [vmem:[%s1 + $0x394] sm:$0xf]
  %v264 = vld [vmem:[%s1 + $0x398] sm:$0xf]
  %v265 = vld [vmem:[%s1 + $0x39c] sm:$0xf]
  %v266 = vld [vmem:[%s1 + $0x3a0] sm:$0xf]
  %v267 = vld [vmem:[%s1 + $0x3a4] sm:$0xf]
  %v268 = vld [vmem:[%s1 + $0x3a8] sm:$0xf]
  %v269 = vld [vmem:[%s1 + $0x3ac] sm:$0xf]
  %v270 = vld [vmem:[%s1 + $0x3b0] sm:$0xf]
  %v271 = vld [vmem:[%s1 + $0x3b4] sm:$0xf]
  %v272 = vld [vmem:[%s1 + $0x3b8] sm:$0xf]
  %v273 = vld [vmem:[%s1 + $0x3bc] sm:$0xf]
  %v274 = vld [vmem:[%s1 + $0x3c0] sm:$0xf]
  %v275 = vld [vmem:[%s1 + $0x3c4] sm:$0xf]
  %v276 = vld [vmem:[%s1 + $0x3c8] sm:$0xf]
  %v277 = vld [vmem:[%s1 + $0x3cc] sm:$0xf]
  %v278 = vld [vmem:[%s1 + $0x3d0] sm:$0xf]
  %v279 = vld [vmem:[%s1 + $0x3d4] sm:$0xf]
  %v280 = vld [vmem:[%s1 + $0x3d8] sm:$0xf]
  %v281 = vld [vmem:[%s1 + $0x3dc] sm:$0xf]
  %v282 = vld [vmem:[%s1 + $0x3e0] sm:$0xf]
  %v283 = vld [vmem:[%s1 + $0x3e4] sm:$0xf]
  %v284 = vld [vmem:[%s1 + $0x3e8] sm:$0xf]
  %v285 = vld [vmem:[%s1 + $0x3ec] sm:$0xf]
  %v286 = vld [vmem:[%s1 + $0x3f0] sm:$0xf]
  %v287 = vld [vmem:[%s1 + $0x3f4] sm:$0xf]
  %v288 = vld [vmem:[%s1 + $0x3f8] sm:$0xf]
  %v289 = vld [vmem:[%s1 + $0x3fc] sm:$0xf]
  %v290 = vld [vmem:[%s1 + $0x400] sm:$0xf]
  %v291 = vld [vmem:[%s1 + $0x404] sm:$0xf]
  %v292 = vld [vmem:[%s1 + $0x408] sm:$0xf]
  %v293 = vld [vmem:[%s1 + $0x40c] sm:$0xf]
  %v294 = vld [vmem:[%s1 + $0x410] sm:$0xf]
  %v295 = vld [vmem:[%s1 + $0x414] sm:$0xf]
  %v296 = vld [vmem:[%s1 + $0x418] sm:$0xf]
  %v297 = vld [vmem:[%s1 + $0x41c] sm:$0xf]
  %v298 = vld [vmem:[%s1 + $0x420] sm:$0xf]
  %v299 = vld [vmem:[%s1 + $0x424] sm:$0xf]
  %v300 = vld [vmem:[%s1 + $0x428] sm:$0xf]
  %v301 = vld [vmem:[%s1 + $0x42c] sm:$0xf]
  %v302 = vld [vmem:[%s1 + $0x430] sm:$0xf]
  %v303 = vld [vmem:[%s1 + $0x434] sm:$0xf]
  %v304 = vld [vmem:[%s1 + $0x438] sm:$0xf]
  %v305 = vld [vmem:[%s1 + $0x43c] sm:$0xf]
  %v306 = vld [vmem:[%s1 + $0x440] sm:$0xf]
  %v307 = vld [vmem:[%s1 + $0x444] sm:$0xf]
  %v308 = vld [vmem:[%s1 + $0x448] sm:$0xf]
  %v309 = vld [vmem:[%s1 + $0x44c] sm:$0xf]
  %v310 = vld [vmem:[%s1 + $0x450] sm:$0xf]
  %v311 = vld [vmem:[%s1 + $0x454] sm:$0xf]
  %v312 = vld [vmem:[%s1 + $0x458] sm:$0xf]
  %v313 = vld [vmem:[%s1 + $0x45c] sm:$0xf]
  %v314 = vld [vmem:[%s1 + $0x460] sm:$0xf]
  %v315 = vld [vmem:[%s1 + $0x464] sm:$0xf]
  %v316 = vld [vmem:[%s1 + $0x468] sm:$0xf]
  %v317 = vld [vmem:[%s1 + $0x46c] sm:$0xf]
  %v318 = vld [vmem:[%s1 + $0x470] sm:$0xf]
  %v319 = vld [vmem:[%s1 + $0x474] sm:$0xf]
  %v320 = vld [vmem:[%s1 + $0x478] sm:$0xf]
  %v321 = vld [vmem:[%s1 + $0x47c] sm:$0xf]
  %v322 = vld [vmem:[%s1 + $0x480] sm:$0xf]
  %v323 = vld [vmem:[%s1 + $0x484] sm:$0xf]
  %v324 = vld [vmem:[%s1 + $0x488] sm:$0xf]
  %v325 = vld [vmem:[%s1 + $0x48c] sm:$0xf]
  %v326 = vld [vmem:[%s1 + $0x490] sm:$0xf]
  %v327 = vld [vmem:[%s1 + $0x494] sm:$0xf]
  %v328 = vld [vmem:[%s1 + $0x498] sm:$0xf]
  %v329 = vld [vmem:[%s1 + $0x49c] sm:$0xf]
  %v330 = vld [vmem:[%s1 + $0x4a0] sm:$0xf]
  %v331 = vld [vmem:[%s1 + $0x4a4] sm:$0xf]
  %v332 = vld [vmem:[%s1 + $0x4a8] sm:$0xf]
  %v333 = vld [vmem:[%s1 + $0x4ac] sm:$0xf]
  %v334 = vld [vmem:[%s1 + $0x4b0] sm:$0xf]
  %v335 = vld [vmem:[%s1 + $0x4b4] sm:$0xf]
  %v336 = vld [vmem:[%s1 + $0x4b8] sm:$0xf]
  %v337 = vld [vmem:[%s1 + $0x4bc] sm:$0xf]
  %v338 = vld [vmem:[%s1 + $0x4c0] sm:$0xf]
  %v339 = vld [vmem:[%s1 + $0x4c4] sm:$0xf]
  %v340 = vld [vmem:[%s1 + $0x4c8] sm:$0xf]
  %v341 = vld [vmem:[%s1 + $0x4cc] sm:$0xf]
  %v342 = vld [vmem:[%s1 + $0x4d0] sm:$0xf]
  %v343 = vld [vmem:[%s1 + $0x4d4] sm:$0xf]
  %v344 = vld [vmem:[%s1 + $0x4d8] sm:$0xf]
  %v345 = vld [vmem:[%s1 + $0x4dc] sm:$0xf]
  %v346 = vld [vmem:[%s1 + $0x4e0] sm:$0xf]
  %v347 = vld [vmem:[%s1 + $0x4e4] sm:$0xf]
  %v348 = vld [vmem:[%s1 + $0x4e8] sm:$0xf]
  %v349 = vld [vmem:[%s1 + $0x4ec] sm:$0xf]
  %v350 = vld [vmem:[%s1 + $0x4f0] sm:$0xf]
  %v351 = vld [vmem:[%s1 + $0x4f4] sm:$0xf]
  %v352 = vld [vmem:[%s1 + $0x4f8] sm:$0xf]
  %v353 = vld [vmem:[%s1 + $0x4fc] sm:$0xf]
  %v354 = vld [vmem:[%s1 + $0x500] sm:$0xf]
  %v355 = vld [vmem:[%s1 + $0x504] sm:$0xf]
  %v356 = vld [vmem:[%s1 + $0x508] sm:$0xf]
  %v357 = vld [vmem:[%s1 + $0x50c] sm:$0xf]
  %v358 = vld [vmem:[%s1 + $0x510] sm:$0xf]
  %v359 = vld [vmem:[%s1 + $0x514] sm:$0xf]
  %v360 = vld [vmem:[%s1 + $0x518] sm:$0xf]
  %v361 = vld [vmem:[%s1 + $0x51c] sm:$0xf]
  %v362 = vld [vmem:[%s1 + $0x520] sm:$0xf]
  %v363 = vld [vmem:[%s1 + $0x524] sm:$0xf]
  %v364 = vld [vmem:[%s1 + $0x528] sm:$0xf]
  %v365 = vld [vmem:[%s1 + $0x52c] sm:$0xf]
  %v366 = vld [vmem:[%s1 + $0x530] sm:$0xf]
  %v367 = vld [vmem:[%s1 + $0x534] sm:$0xf]
  %v368 = vld [vmem:[%s1 + $0x538] sm:$0xf]
  %v369 = vld [vmem:[%s1 + $0x53c] sm:$0xf]
  %v370 = vld [vmem:[%s1 + $0x540] sm:$0xf]
  %v371 = vld [vmem:[%s1 + $0x544] sm:$0xf]
  %v372 = vld [vmem:[%s1 + $0x548] sm:$0xf]
  %v373 = vld [vmem:[%s1 + $0x54c] sm:$0xf]
  %v374 = vld [vmem:[%s1 + $0x550] sm:$0xf]
  %v375 = vld [vmem:[%s1 + $0x554] sm:$0xf]
  %v376 = vld [vmem:[%s1 + $0x558] sm:$0xf]
  %v377 = vld [vmem:[%s1 + $0x55c] sm:$0xf]
  %v378 = vld [vmem:[%s1 + $0x560] sm:$0xf]
  %v379 = vld [vmem:[%s1 + $0x564] sm:$0xf]
  %v380 = vld [vmem:[%s1 + $0x568] sm:$0xf]
  %v381 = vld [vmem:[%s1 + $0x56c] sm:$0xf]
  %v382 = vld [vmem:[%s1 + $0x570] sm:$0xf]
  %v383 = vld [vmem:[%s1 + $0x574] sm:$0xf]
  %v384 = vld [vmem:[%s1 + $0x578] sm:$0xf]
  %v385 = vld [vmem:[%s1 + $0x57c] sm:$0xf]
  %v386 = vld [vmem:[%s1 + $0x580] sm:$0xf]
  %v387 = vld [vmem:[%s1 + $0x584] sm:$0xf]
  %v388 = vld [vmem:[%s1 + $0x588] sm:$0xf]
  %v389 = vld [vmem:[%s1 + $0x58c] sm:$0xf]
  %v390 = vld [vmem:[%s1 + $0x590] sm:$0xf]
  %v391 = vld [vmem:[%s1 + $0x594] sm:$0xf]
  %v392 = vld [vmem:[%s1 + $0x598] sm:$0xf]
  %v393 = vld [vmem:[%s1 + $0x59c] sm:$0xf]
  %v394 = vld [vmem:[%s1 + $0x5a0] sm:$0xf]
  %v395 = vld [vmem:[%s1 + $0x5a4] sm:$0xf]
  %v396 = vld [vmem:[%s1 + $0x5a8] sm:$0xf]
  %v397 = vld [vmem:[%s1 + $0x5ac] sm:$0xf]
  %v398 = vld [vmem:[%s1 + $0x5b0] sm:$0xf]
  %v399 = vld [vmem:[%s1 + $0x5b4] sm:$0xf]
  %v400 = vld [vmem:[%s1 + $0x5b8] sm:$0xf]
  %v401 = vld [vmem:[%s1 + $0x5bc] sm:$0xf]
  %v402 = vld [vmem:[%s1 + $0x5c0] sm:$0xf]
  %v403 = vld [vmem:[%s1 + $0x5c4] sm:$0xf]
  %v404 = vld [vmem:[%s1 + $0x5c8] sm:$0xf]
  %v405 = vld [vmem:[%s1 + $0x5cc] sm:$0xf]
  %v406 = vld [vmem:[%s1 + $0x5d0] sm:$0xf]
  %v407 = vld [vmem:[%s1 + $0x5d4] sm:$0xf]
  %v408 = vld [vmem:[%s1 + $0x5d8] sm:$0xf]
  %v409 = vld [vmem:[%s1 + $0x5dc] sm:$0xf]
  %v410 = vld [vmem:[%s1 + $0x5e0] sm:$0xf]
  %v411 = vld [vmem:[%s1 + $0x5e4] sm:$0xf]
  %v412 = vld [vmem:[%s1 + $0x5e8] sm:$0xf]
  %v413 = vld [vmem:[%s1 + $0x5ec] sm:$0xf]
  %v414 = vld [vmem:[%s1 + $0x5f0] sm:$0xf]
  %v415 = vld [vmem:[%s1 + $0x5f4] sm:$0xf]
  %v416 = vld [vmem:[%s1 + $0x5f8] sm:$0xf]
  %v417 = vld [vmem:[%s1 + $0x5fc] sm:$0xf]
  %v418 = vld [vmem:[%s1 + $0x600] sm:$0xf]
  %v419 = vld [vmem:[%s1 + $0x604] sm:$0xf]
  %v420 = vld [vmem:[%s1 + $0x608] sm:$0xf]
  %v421 = vld [vmem:[%s1 + $0x60c] sm:$0xf]
  %v422 = vld [vmem:[%s1 + $0x610] sm:$0xf]
  %v423 = vld [vmem:[%s1 + $0x614] sm:$0xf]
  %v424 = vld [vmem:[%s1 + $0x618] sm:$0xf]
  %v425 = vld [vmem:[%s1 + $0x61c] sm:$0xf]
  %v426 = vld [vmem:[%s2] sm:$0x1]
  %v428 = vlaneseq
  %v429 = vshrl.u32 %v428, 7
  %v430 = vsub.s32 0, %v429
  %v431 = vrot.slane %v426, %v430
  %v446 = vunpack.c.l.b16 %v21
  %v447 = vunpack.c.h.b16 %v21
  %v448 = vunpack.c.l.b16 %v22
  %v449 = vunpack.c.h.b16 %v22
  %v450 = vunpack.c.l.b16 %v23
  %v451 = vunpack.c.h.b16 %v23
  %v452 = vunpack.c.l.b16 %v24
  %v453 = vunpack.c.h.b16 %v24
  %v454 = vunpack.c.l.b16 %v25
  %v455 = vunpack.c.h.b16 %v25
  %v456 = vunpack.c.l.b16 %v26
  %v457 = vunpack.c.h.b16 %v26
  %v458 = vunpack.c.l.b16 %v27
  %v459 = vunpack.c.h.b16 %v27
  %v460 = vunpack.c.l.b16 %v28
  %v461 = vunpack.c.h.b16 %v28
  %v462 = vunpack.c.l.b16 %v29
  %v463 = vunpack.c.h.b16 %v29
  %v464 = vunpack.c.l.b16 %v30
  %v465 = vunpack.c.h.b16 %v30
  %v466 = vunpack.c.l.b16 %v31
  %v467 = vunpack.c.h.b16 %v31
  %v468 = vunpack.c.l.b16 %v32
  %v469 = vunpack.c.h.b16 %v32
  %v470 = vunpack.c.l.b16 %v33
  %v471 = vpack.c.b16 %v446, %v446
  %v472 = vpack.c.b16 %v447, %v447
  %v473 = vpack.c.b16 %v448, %v448
  %v474 = vpack.c.b16 %v449, %v449
  %v475 = vpack.c.b16 %v450, %v450
  %v476 = vpack.c.b16 %v451, %v451
  %v477 = vpack.c.b16 %v452, %v452
  %v478 = vpack.c.b16 %v453, %v453
  %v479 = vpack.c.b16 %v454, %v454
  %v480 = vpack.c.b16 %v455, %v455
  %v481 = vpack.c.b16 %v456, %v456
  %v482 = vpack.c.b16 %v457, %v457
  %v483 = vpack.c.b16 %v458, %v458
  %v484 = vpack.c.b16 %v459, %v459
  %v485 = vpack.c.b16 %v460, %v460
  %v486 = vpack.c.b16 %v461, %v461
  %v487 = vpack.c.b16 %v462, %v462
  %v488 = vpack.c.b16 %v463, %v463
  %v489 = vpack.c.b16 %v464, %v464
  %v490 = vpack.c.b16 %v465, %v465
  %v491 = vpack.c.b16 %v466, %v466
  %v492 = vpack.c.b16 %v467, %v467
  %v493 = vpack.c.b16 %v468, %v468
  %v494 = vpack.c.b16 %v469, %v469
  %v495 = vpack.c.b16 %v470, %v470
  %v912 = vunpack.c.l.b16 %v34
  %v913 = vunpack.c.l.b16 %v35
  %v914 = vunpack.c.l.b16 %v36
  %v915 = vunpack.c.l.b16 %v37
  %v916 = vunpack.c.l.b16 %v38
  %v917 = vunpack.c.l.b16 %v39
  %v918 = vunpack.c.l.b16 %v40
  %v919 = vunpack.c.l.b16 %v41
  %v920 = vunpack.c.l.b16 %v42
  %v921 = vunpack.c.l.b16 %v43
  %v922 = vunpack.c.l.b16 %v44
  %v923 = vunpack.c.l.b16 %v45
  %v924 = vunpack.c.l.b16 %v46
  %v925 = vunpack.c.l.b16 %v47
  %v926 = vunpack.c.l.b16 %v48
  %v927 = vunpack.c.l.b16 %v49
  %v928 = vunpack.c.l.b16 %v50
  %v929 = vunpack.c.l.b16 %v51
  %v930 = vunpack.c.l.b16 %v52
  %v931 = vunpack.c.l.b16 %v53
  %v932 = vunpack.c.l.b16 %v54
  %v933 = vunpack.c.l.b16 %v55
  %v934 = vunpack.c.l.b16 %v56
  %v935 = vunpack.c.l.b16 %v57
  %v936 = vunpack.c.l.b16 %v58
  %v937 = vunpack.c.l.b16 %v59
  %v938 = vunpack.c.l.b16 %v60
  %v939 = vunpack.c.l.b16 %v61
  %v940 = vunpack.c.l.b16 %v62
  %v941 = vunpack.c.l.b16 %v63
  %v942 = vunpack.c.l.b16 %v64
  %v943 = vunpack.c.l.b16 %v65
  %v944 = vunpack.c.l.b16 %v66
  %v945 = vunpack.c.l.b16 %v67
  %v946 = vunpack.c.l.b16 %v68
  %v947 = vunpack.c.l.b16 %v69
  %v948 = vunpack.c.l.b16 %v70
  %v949 = vunpack.c.l.b16 %v71
  %v950 = vunpack.c.l.b16 %v72
  %v951 = vunpack.c.l.b16 %v73
  %v952 = vunpack.c.l.b16 %v74
  %v953 = vunpack.c.l.b16 %v75
  %v954 = vunpack.c.l.b16 %v76
  %v955 = vunpack.c.l.b16 %v77
  %v956 = vunpack.c.l.b16 %v78
  %v957 = vunpack.c.l.b16 %v79
  %v958 = vunpack.c.l.b16 %v80
  %v959 = vunpack.c.l.b16 %v81
  %v960 = vunpack.c.l.b16 %v82
  %v961 = vunpack.c.l.b16 %v83
  %v962 = vunpack.c.l.b16 %v84
  %v963 = vunpack.c.l.b16 %v85
  %v964 = vunpack.c.l.b16 %v86
  %v965 = vunpack.c.l.b16 %v87
  %v966 = vunpack.c.l.b16 %v88
  %v967 = vunpack.c.l.b16 %v89
  %v968 = vunpack.c.l.b16 %v90
  %v969 = vunpack.c.l.b16 %v91
  %v970 = vunpack.c.l.b16 %v92
  %v971 = vunpack.c.l.b16 %v93
  %v972 = vunpack.c.l.b16 %v94
  %v973 = vunpack.c.l.b16 %v95
  %v974 = vunpack.c.l.b16 %v96
  %v975 = vunpack.c.l.b16 %v97
  %v976 = vunpack.c.l.b16 %v98
  %v977 = vunpack.c.l.b16 %v99
  %v978 = vunpack.c.l.b16 %v100
  %v979 = vunpack.c.l.b16 %v101
  %v980 = vunpack.c.l.b16 %v102
  %v981 = vunpack.c.l.b16 %v103
  %v982 = vunpack.c.l.b16 %v104
  %v983 = vunpack.c.l.b16 %v105
  %v984 = vunpack.c.l.b16 %v106
  %v985 = vunpack.c.l.b16 %v107
  %v986 = vunpack.c.l.b16 %v108
  %v987 = vunpack.c.l.b16 %v109
  %v988 = vunpack.c.l.b16 %v110
  %v989 = vunpack.c.l.b16 %v111
  %v990 = vunpack.c.l.b16 %v112
  %v991 = vunpack.c.l.b16 %v113
  %v992 = vunpack.c.l.b16 %v114
  %v993 = vunpack.c.l.b16 %v115
  %v994 = vunpack.c.l.b16 %v116
  %v995 = vunpack.c.l.b16 %v117
  %v996 = vunpack.c.l.b16 %v118
  %v997 = vunpack.c.l.b16 %v119
  %v998 = vunpack.c.l.b16 %v120
  %v999 = vunpack.c.l.b16 %v121
  %v1000 = vunpack.c.l.b16 %v122
  %v1001 = vunpack.c.l.b16 %v123
  %v1002 = vunpack.c.l.b16 %v124
  %v1003 = vunpack.c.l.b16 %v125
  %v1004 = vunpack.c.l.b16 %v126
  %v1005 = vunpack.c.l.b16 %v127
  %v1006 = vunpack.c.l.b16 %v128
  %v1007 = vunpack.c.l.b16 %v129
  %v1008 = vunpack.c.l.b16 %v130
  %v1009 = vunpack.c.l.b16 %v131
  %v1010 = vunpack.c.l.b16 %v132
  %v1011 = vunpack.c.l.b16 %v133
  %v1012 = vunpack.c.l.b16 %v134
  %v1013 = vunpack.c.l.b16 %v135
  %v1014 = vunpack.c.l.b16 %v136
  %v1015 = vunpack.c.l.b16 %v137
  %v1016 = vunpack.c.l.b16 %v138
  %v1017 = vunpack.c.l.b16 %v139
  %v1018 = vunpack.c.l.b16 %v140
  %v1019 = vunpack.c.l.b16 %v141
  %v1020 = vunpack.c.l.b16 %v142
  %v1021 = vunpack.c.l.b16 %v143
  %v1022 = vunpack.c.l.b16 %v144
  %v1023 = vunpack.c.l.b16 %v145
  %v1024 = vunpack.c.l.b16 %v146
  %v1025 = vunpack.c.l.b16 %v147
  %v1026 = vunpack.c.l.b16 %v148
  %v1027 = vunpack.c.l.b16 %v149
  %v1028 = vunpack.c.l.b16 %v150
  %v1029 = vunpack.c.l.b16 %v151
  %v1030 = vunpack.c.l.b16 %v152
  %v1031 = vunpack.c.l.b16 %v153
  %v1032 = vunpack.c.l.b16 %v154
  %v1033 = vunpack.c.l.b16 %v155
  %v1034 = vunpack.c.l.b16 %v156
  %v1035 = vunpack.c.l.b16 %v157
  %v1036 = vunpack.c.l.b16 %v158
  %v1037 = vunpack.c.l.b16 %v159
  %v1038 = vunpack.c.l.b16 %v160
  %v1039 = vunpack.c.l.b16 %v161
  %v1040 = vunpack.c.l.b16 %v162
  %v1041 = vunpack.c.l.b16 %v163
  %v1042 = vunpack.c.l.b16 %v164
  %v1043 = vunpack.c.l.b16 %v165
  %v1044 = vunpack.c.l.b16 %v166
  %v1045 = vunpack.c.l.b16 %v167
  %v1046 = vunpack.c.l.b16 %v168
  %v1047 = vunpack.c.l.b16 %v169
  %v1048 = vunpack.c.l.b16 %v170
  %v1049 = vunpack.c.l.b16 %v171
  %v1050 = vunpack.c.l.b16 %v172
  %v1051 = vunpack.c.l.b16 %v173
  %v1052 = vunpack.c.l.b16 %v174
  %v1053 = vunpack.c.l.b16 %v175
  %v1054 = vunpack.c.l.b16 %v176
  %v1055 = vunpack.c.l.b16 %v177
  %v1056 = vunpack.c.l.b16 %v178
  %v1057 = vunpack.c.l.b16 %v179
  %v1058 = vunpack.c.l.b16 %v180
  %v1059 = vunpack.c.l.b16 %v181
  %v1060 = vunpack.c.l.b16 %v182
  %v1061 = vunpack.c.l.b16 %v183
  %v1062 = vunpack.c.l.b16 %v184
  %v1063 = vunpack.c.l.b16 %v185
  %v1064 = vunpack.c.l.b16 %v186
  %v1065 = vunpack.c.l.b16 %v187
  %v1066 = vunpack.c.l.b16 %v188
  %v1067 = vunpack.c.l.b16 %v189
  %v1068 = vunpack.c.l.b16 %v190
  %v1069 = vunpack.c.l.b16 %v191
  %v1070 = vunpack.c.l.b16 %v192
  %v1071 = vunpack.c.l.b16 %v193
  %v1072 = vunpack.c.l.b16 %v194
  %v1073 = vunpack.c.l.b16 %v195
  %v1074 = vunpack.c.l.b16 %v196
  %v1075 = vunpack.c.l.b16 %v197
  %v1076 = vunpack.c.l.b16 %v198
  %v1077 = vunpack.c.l.b16 %v199
  %v1078 = vunpack.c.l.b16 %v200
  %v1079 = vunpack.c.l.b16 %v201
  %v1080 = vunpack.c.l.b16 %v202
  %v1081 = vunpack.c.l.b16 %v203
  %v1082 = vunpack.c.l.b16 %v204
  %v1083 = vunpack.c.l.b16 %v205
  %v1084 = vunpack.c.l.b16 %v206
  %v1085 = vunpack.c.l.b16 %v207
  %v1086 = vunpack.c.l.b16 %v208
  %v1087 = vunpack.c.l.b16 %v209
  %v1088 = vunpack.c.l.b16 %v210
  %v1089 = vunpack.c.l.b16 %v211
  %v1090 = vunpack.c.l.b16 %v212
  %v1091 = vunpack.c.l.b16 %v213
  %v1092 = vunpack.c.l.b16 %v214
  %v1093 = vunpack.c.l.b16 %v215
  %v1094 = vunpack.c.l.b16 %v216
  %v1095 = vunpack.c.l.b16 %v217
  %v1096 = vunpack.c.l.b16 %v218
  %v1097 = vunpack.c.l.b16 %v219
  %v1098 = vunpack.c.l.b16 %v220
  %v1099 = vunpack.c.l.b16 %v221
  %v1100 = vunpack.c.l.b16 %v222
  %v1101 = vunpack.c.l.b16 %v223
  %v1102 = vunpack.c.l.b16 %v224
  %v1103 = vunpack.c.l.b16 %v225
  %v1104 = vunpack.c.l.b16 %v226
  %v1105 = vunpack.c.l.b16 %v227
  %v1106 = vunpack.c.l.b16 %v228
  %v1107 = vunpack.c.l.b16 %v229
  %v1108 = vunpack.c.l.b16 %v230
  %v1109 = vunpack.c.l.b16 %v231
  %v1110 = vunpack.c.l.b16 %v232
  %v1111 = vunpack.c.l.b16 %v233
  %v1112 = vunpack.c.l.b16 %v234
  %v1113 = vunpack.c.l.b16 %v235
  %v1114 = vunpack.c.l.b16 %v236
  %v1115 = vunpack.c.l.b16 %v237
  %v1116 = vunpack.c.l.b16 %v238
  %v1117 = vunpack.c.l.b16 %v239
  %v1118 = vunpack.c.l.b16 %v240
  %v1119 = vunpack.c.l.b16 %v241
  %v1120 = vunpack.c.l.b16 %v242
  %v1121 = vunpack.c.l.b16 %v243
  %v1122 = vunpack.c.l.b16 %v244
  %v1123 = vunpack.c.l.b16 %v245
  %v1124 = vunpack.c.l.b16 %v246
  %v1125 = vunpack.c.l.b16 %v247
  %v1126 = vunpack.c.l.b16 %v248
  %v1127 = vunpack.c.l.b16 %v249
  %v1128 = vunpack.c.l.b16 %v250
  %v1129 = vunpack.c.l.b16 %v251
  %v1130 = vunpack.c.l.b16 %v252
  %v1131 = vunpack.c.l.b16 %v253
  %v1132 = vunpack.c.l.b16 %v254
  %v1133 = vunpack.c.l.b16 %v255
  %v1134 = vunpack.c.l.b16 %v256
  %v1135 = vunpack.c.l.b16 %v257
  %v1136 = vunpack.c.l.b16 %v258
  %v1137 = vunpack.c.l.b16 %v259
  %v1138 = vunpack.c.l.b16 %v260
  %v1139 = vunpack.c.l.b16 %v261
  %v1140 = vunpack.c.l.b16 %v262
  %v1141 = vunpack.c.l.b16 %v263
  %v1142 = vunpack.c.l.b16 %v264
  %v1143 = vunpack.c.l.b16 %v265
  %v1144 = vunpack.c.l.b16 %v266
  %v1145 = vunpack.c.l.b16 %v267
  %v1146 = vunpack.c.l.b16 %v268
  %v1147 = vunpack.c.l.b16 %v269
  %v1148 = vunpack.c.l.b16 %v270
  %v1149 = vunpack.c.l.b16 %v271
  %v1150 = vunpack.c.l.b16 %v272
  %v1151 = vunpack.c.l.b16 %v273
  %v1152 = vunpack.c.l.b16 %v274
  %v1153 = vunpack.c.l.b16 %v275
  %v1154 = vunpack.c.l.b16 %v276
  %v1155 = vunpack.c.l.b16 %v277
  %v1156 = vunpack.c.l.b16 %v278
  %v1157 = vunpack.c.l.b16 %v279
  %v1158 = vunpack.c.l.b16 %v280
  %v1159 = vunpack.c.l.b16 %v281
  %v1160 = vunpack.c.l.b16 %v282
  %v1161 = vunpack.c.l.b16 %v283
  %v1162 = vunpack.c.l.b16 %v284
  %v1163 = vunpack.c.l.b16 %v285
  %v1164 = vunpack.c.l.b16 %v286
  %v1165 = vunpack.c.l.b16 %v287
  %v1166 = vunpack.c.l.b16 %v288
  %v1167 = vunpack.c.l.b16 %v289
  %v1168 = vunpack.c.l.b16 %v290
  %v1169 = vunpack.c.l.b16 %v291
  %v1170 = vunpack.c.l.b16 %v292
  %v1171 = vunpack.c.l.b16 %v293
  %v1172 = vunpack.c.l.b16 %v294
  %v1173 = vunpack.c.l.b16 %v295
  %v1174 = vunpack.c.l.b16 %v296
  %v1175 = vunpack.c.l.b16 %v297
  %v1176 = vunpack.c.l.b16 %v298
  %v1177 = vunpack.c.l.b16 %v299
  %v1178 = vunpack.c.l.b16 %v300
  %v1179 = vunpack.c.l.b16 %v301
  %v1180 = vunpack.c.l.b16 %v302
  %v1181 = vunpack.c.l.b16 %v303
  %v1182 = vunpack.c.l.b16 %v304
  %v1183 = vunpack.c.l.b16 %v305
  %v1184 = vunpack.c.l.b16 %v306
  %v1185 = vunpack.c.l.b16 %v307
  %v1186 = vunpack.c.l.b16 %v308
  %v1187 = vunpack.c.l.b16 %v309
  %v1188 = vunpack.c.l.b16 %v310
  %v1189 = vunpack.c.l.b16 %v311
  %v1190 = vunpack.c.l.b16 %v312
  %v1191 = vunpack.c.l.b16 %v313
  %v1192 = vunpack.c.l.b16 %v314
  %v1193 = vunpack.c.l.b16 %v315
  %v1194 = vunpack.c.l.b16 %v316
  %v1195 = vunpack.c.l.b16 %v317
  %v1196 = vunpack.c.l.b16 %v318
  %v1197 = vunpack.c.l.b16 %v319
  %v1198 = vunpack.c.l.b16 %v320
  %v1199 = vunpack.c.l.b16 %v321
  %v1200 = vunpack.c.l.b16 %v322
  %v1201 = vunpack.c.l.b16 %v323
  %v1202 = vunpack.c.l.b16 %v324
  %v1203 = vunpack.c.l.b16 %v325
  %v1204 = vunpack.c.l.b16 %v326
  %v1205 = vunpack.c.l.b16 %v327
  %v1206 = vunpack.c.l.b16 %v328
  %v1207 = vunpack.c.l.b16 %v329
  %v1208 = vunpack.c.l.b16 %v330
  %v1209 = vunpack.c.l.b16 %v331
  %v1210 = vunpack.c.l.b16 %v332
  %v1211 = vunpack.c.l.b16 %v333
  %v1212 = vunpack.c.l.b16 %v334
  %v1213 = vunpack.c.l.b16 %v335
  %v1214 = vunpack.c.l.b16 %v336
  %v1215 = vunpack.c.l.b16 %v337
  %v1216 = vunpack.c.l.b16 %v338
  %v1217 = vunpack.c.l.b16 %v339
  %v1218 = vunpack.c.l.b16 %v340
  %v1219 = vunpack.c.l.b16 %v341
  %v1220 = vunpack.c.l.b16 %v342
  %v1221 = vunpack.c.l.b16 %v343
  %v1222 = vunpack.c.l.b16 %v344
  %v1223 = vunpack.c.l.b16 %v345
  %v1224 = vunpack.c.l.b16 %v346
  %v1225 = vunpack.c.l.b16 %v347
  %v1226 = vunpack.c.l.b16 %v348
  %v1227 = vunpack.c.l.b16 %v349
  %v1228 = vunpack.c.l.b16 %v350
  %v1229 = vunpack.c.l.b16 %v351
  %v1230 = vunpack.c.l.b16 %v352
  %v1231 = vunpack.c.l.b16 %v353
  %v1232 = vunpack.c.l.b16 %v354
  %v1233 = vunpack.c.l.b16 %v355
  %v1234 = vunpack.c.l.b16 %v356
  %v1235 = vunpack.c.l.b16 %v357
  %v1236 = vunpack.c.l.b16 %v358
  %v1237 = vunpack.c.l.b16 %v359
  %v1238 = vunpack.c.l.b16 %v360
  %v1239 = vunpack.c.l.b16 %v361
  %v1240 = vunpack.c.l.b16 %v362
  %v1241 = vunpack.c.l.b16 %v363
  %v1242 = vunpack.c.l.b16 %v364
  %v1243 = vunpack.c.l.b16 %v365
  %v1244 = vunpack.c.l.b16 %v366
  %v1245 = vunpack.c.l.b16 %v367
  %v1246 = vunpack.c.l.b16 %v368
  %v1247 = vunpack.c.l.b16 %v369
  %v1248 = vunpack.c.l.b16 %v370
  %v1249 = vunpack.c.l.b16 %v371
  %v1250 = vunpack.c.l.b16 %v372
  %v1251 = vunpack.c.l.b16 %v373
  %v1252 = vunpack.c.l.b16 %v374
  %v1253 = vunpack.c.l.b16 %v375
  %v1254 = vunpack.c.l.b16 %v376
  %v1255 = vunpack.c.l.b16 %v377
  %v1256 = vunpack.c.l.b16 %v378
  %v1257 = vunpack.c.l.b16 %v379
  %v1258 = vunpack.c.l.b16 %v380
  %v1259 = vunpack.c.l.b16 %v381
  %v1260 = vunpack.c.l.b16 %v382
  %v1261 = vunpack.c.l.b16 %v383
  %v1262 = vunpack.c.l.b16 %v384
  %v1263 = vunpack.c.l.b16 %v385
  %v1264 = vunpack.c.l.b16 %v386
  %v1265 = vunpack.c.l.b16 %v387
  %v1266 = vunpack.c.l.b16 %v388
  %v1267 = vunpack.c.l.b16 %v389
  %v1268 = vunpack.c.l.b16 %v390
  %v1269 = vunpack.c.l.b16 %v391
  %v1270 = vunpack.c.l.b16 %v392
  %v1271 = vunpack.c.l.b16 %v393
  %v1272 = vunpack.c.l.b16 %v394
  %v1273 = vunpack.c.l.b16 %v395
  %v1274 = vunpack.c.l.b16 %v396
  %v1275 = vunpack.c.l.b16 %v397
  %v1276 = vunpack.c.l.b16 %v398
  %v1277 = vunpack.c.l.b16 %v399
  %v1278 = vunpack.c.l.b16 %v400
  %v1279 = vunpack.c.l.b16 %v401
  %v1280 = vunpack.c.l.b16 %v402
  %v1281 = vunpack.c.l.b16 %v403
  %v1282 = vunpack.c.l.b16 %v404
  %v1283 = vunpack.c.l.b16 %v405
  %v1284 = vunpack.c.l.b16 %v406
  %v1285 = vunpack.c.l.b16 %v407
  %v1286 = vunpack.c.l.b16 %v408
  %v1287 = vunpack.c.l.b16 %v409
  %v1288 = vunpack.c.l.b16 %v410
  %v1289 = vunpack.c.l.b16 %v411
  %v1290 = vunpack.c.l.b16 %v412
  %v1291 = vunpack.c.l.b16 %v413
  %v1292 = vunpack.c.l.b16 %v414
  %v1293 = vunpack.c.l.b16 %v415
  %v1294 = vunpack.c.l.b16 %v416
  %v1295 = vunpack.c.l.b16 %v417
  %v1296 = vunpack.c.l.b16 %v418
  %v1297 = vunpack.c.l.b16 %v419
  %v1298 = vunpack.c.l.b16 %v420
  %v1299 = vunpack.c.l.b16 %v421
  %v1300 = vunpack.c.l.b16 %v422
  %v1301 = vunpack.c.l.b16 %v423
  %v1302 = vunpack.c.l.b16 %v424
  %v1303 = vunpack.c.l.b16 %v425
  %v1304 = vpack.c.b16 %v913, %v912
  %v1305 = vpack.c.b16 %v915, %v914
  %v1306 = vpack.c.b16 %v917, %v916
  %v1307 = vpack.c.b16 %v919, %v918
  %v1308 = vpack.c.b16 %v921, %v920
  %v1309 = vpack.c.b16 %v923, %v922
  %v1310 = vpack.c.b16 %v925, %v924
  %v1311 = vpack.c.b16 %v927, %v926
  %v1312 = vpack.c.b16 %v929, %v928
  %v1313 = vpack.c.b16 %v931, %v930
  %v1314 = vpack.c.b16 %v933, %v932
  %v1315 = vpack.c.b16 %v935, %v934
  %v1316 = vpack.c.b16 %v937, %v936
  %v1317 = vpack.c.b16 %v939, %v938
  %v1318 = vpack.c.b16 %v941, %v940
  %v1319 = vpack.c.b16 %v943, %v942
  %v1320 = vpack.c.b16 %v945, %v944
  %v1321 = vpack.c.b16 %v947, %v946
  %v1322 = vpack.c.b16 %v949, %v948
  %v1323 = vpack.c.b16 %v951, %v950
  %v1324 = vpack.c.b16 %v953, %v952
  %v1325 = vpack.c.b16 %v955, %v954
  %v1326 = vpack.c.b16 %v957, %v956
  %v1327 = vpack.c.b16 %v959, %v958
  %v1328 = vpack.c.b16 %v961, %v960
  %v1329 = vpack.c.b16 %v963, %v962
  %v1330 = vpack.c.b16 %v965, %v964
  %v1331 = vpack.c.b16 %v967, %v966
  %v1332 = vpack.c.b16 %v969, %v968
  %v1333 = vpack.c.b16 %v971, %v970
  %v1334 = vpack.c.b16 %v973, %v972
  %v1335 = vpack.c.b16 %v975, %v974
  %v1336 = vpack.c.b16 %v977, %v976
  %v1337 = vpack.c.b16 %v979, %v978
  %v1338 = vpack.c.b16 %v981, %v980
  %v1339 = vpack.c.b16 %v983, %v982
  %v1340 = vpack.c.b16 %v985, %v984
  %v1341 = vpack.c.b16 %v987, %v986
  %v1342 = vpack.c.b16 %v989, %v988
  %v1343 = vpack.c.b16 %v991, %v990
  %v1344 = vpack.c.b16 %v993, %v992
  %v1345 = vpack.c.b16 %v995, %v994
  %v1346 = vpack.c.b16 %v997, %v996
  %v1347 = vpack.c.b16 %v999, %v998
  %v1348 = vpack.c.b16 %v1001, %v1000
  %v1349 = vpack.c.b16 %v1003, %v1002
  %v1350 = vpack.c.b16 %v1005, %v1004
  %v1351 = vpack.c.b16 %v1007, %v1006
  %v1352 = vpack.c.b16 %v1009, %v1008
  %v1353 = vpack.c.b16 %v1011, %v1010
  %v1354 = vpack.c.b16 %v1013, %v1012
  %v1355 = vpack.c.b16 %v1015, %v1014
  %v1356 = vpack.c.b16 %v1017, %v1016
  %v1357 = vpack.c.b16 %v1019, %v1018
  %v1358 = vpack.c.b16 %v1021, %v1020
  %v1359 = vpack.c.b16 %v1023, %v1022
  %v1360 = vpack.c.b16 %v1025, %v1024
  %v1361 = vpack.c.b16 %v1027, %v1026
  %v1362 = vpack.c.b16 %v1029, %v1028
  %v1363 = vpack.c.b16 %v1031, %v1030
  %v1364 = vpack.c.b16 %v1033, %v1032
  %v1365 = vpack.c.b16 %v1035, %v1034
  %v1366 = vpack.c.b16 %v1037, %v1036
  %v1367 = vpack.c.b16 %v1039, %v1038
  %v1368 = vpack.c.b16 %v1041, %v1040
  %v1369 = vpack.c.b16 %v1043, %v1042
  %v1370 = vpack.c.b16 %v1045, %v1044
  %v1371 = vpack.c.b16 %v1047, %v1046
  %v1372 = vpack.c.b16 %v1049, %v1048
  %v1373 = vpack.c.b16 %v1051, %v1050
  %v1374 = vpack.c.b16 %v1053, %v1052
  %v1375 = vpack.c.b16 %v1055, %v1054
  %v1376 = vpack.c.b16 %v1057, %v1056
  %v1377 = vpack.c.b16 %v1059, %v1058
  %v1378 = vpack.c.b16 %v1061, %v1060
  %v1379 = vpack.c.b16 %v1063, %v1062
  %v1380 = vpack.c.b16 %v1065, %v1064
  %v1381 = vpack.c.b16 %v1067, %v1066
  %v1382 = vpack.c.b16 %v1069, %v1068
  %v1383 = vpack.c.b16 %v1071, %v1070
  %v1384 = vpack.c.b16 %v1073, %v1072
  %v1385 = vpack.c.b16 %v1075, %v1074
  %v1386 = vpack.c.b16 %v1077, %v1076
  %v1387 = vpack.c.b16 %v1079, %v1078
  %v1388 = vpack.c.b16 %v1081, %v1080
  %v1389 = vpack.c.b16 %v1083, %v1082
  %v1390 = vpack.c.b16 %v1085, %v1084
  %v1391 = vpack.c.b16 %v1087, %v1086
  %v1392 = vpack.c.b16 %v1089, %v1088
  %v1393 = vpack.c.b16 %v1091, %v1090
  %v1394 = vpack.c.b16 %v1093, %v1092
  %v1395 = vpack.c.b16 %v1095, %v1094
  %v1396 = vpack.c.b16 %v1097, %v1096
  %v1397 = vpack.c.b16 %v1099, %v1098
  %v1398 = vpack.c.b16 %v1101, %v1100
  %v1399 = vpack.c.b16 %v1103, %v1102
  %v1400 = vpack.c.b16 %v1105, %v1104
  %v1401 = vpack.c.b16 %v1107, %v1106
  %v1402 = vpack.c.b16 %v1109, %v1108
  %v1403 = vpack.c.b16 %v1111, %v1110
  %v1404 = vpack.c.b16 %v1113, %v1112
  %v1405 = vpack.c.b16 %v1115, %v1114
  %v1406 = vpack.c.b16 %v1117, %v1116
  %v1407 = vpack.c.b16 %v1119, %v1118
  %v1408 = vpack.c.b16 %v1121, %v1120
  %v1409 = vpack.c.b16 %v1123, %v1122
  %v1410 = vpack.c.b16 %v1125, %v1124
  %v1411 = vpack.c.b16 %v1127, %v1126
  %v1412 = vpack.c.b16 %v1129, %v1128
  %v1413 = vpack.c.b16 %v1131, %v1130
  %v1414 = vpack.c.b16 %v1133, %v1132
  %v1415 = vpack.c.b16 %v1135, %v1134
  %v1416 = vpack.c.b16 %v1137, %v1136
  %v1417 = vpack.c.b16 %v1139, %v1138
  %v1418 = vpack.c.b16 %v1141, %v1140
  %v1419 = vpack.c.b16 %v1143, %v1142
  %v1420 = vpack.c.b16 %v1145, %v1144
  %v1421 = vpack.c.b16 %v1147, %v1146
  %v1422 = vpack.c.b16 %v1149, %v1148
  %v1423 = vpack.c.b16 %v1151, %v1150
  %v1424 = vpack.c.b16 %v1153, %v1152
  %v1425 = vpack.c.b16 %v1155, %v1154
  %v1426 = vpack.c.b16 %v1157, %v1156
  %v1427 = vpack.c.b16 %v1159, %v1158
  %v1428 = vpack.c.b16 %v1161, %v1160
  %v1429 = vpack.c.b16 %v1163, %v1162
  %v1430 = vpack.c.b16 %v1165, %v1164
  %v1431 = vpack.c.b16 %v1167, %v1166
  %v1432 = vpack.c.b16 %v1169, %v1168
  %v1433 = vpack.c.b16 %v1171, %v1170
  %v1434 = vpack.c.b16 %v1173, %v1172
  %v1435 = vpack.c.b16 %v1175, %v1174
  %v1436 = vpack.c.b16 %v1177, %v1176
  %v1437 = vpack.c.b16 %v1179, %v1178
  %v1438 = vpack.c.b16 %v1181, %v1180
  %v1439 = vpack.c.b16 %v1183, %v1182
  %v1440 = vpack.c.b16 %v1185, %v1184
  %v1441 = vpack.c.b16 %v1187, %v1186
  %v1442 = vpack.c.b16 %v1189, %v1188
  %v1443 = vpack.c.b16 %v1191, %v1190
  %v1444 = vpack.c.b16 %v1193, %v1192
  %v1445 = vpack.c.b16 %v1195, %v1194
  %v1446 = vpack.c.b16 %v1197, %v1196
  %v1447 = vpack.c.b16 %v1199, %v1198
  %v1448 = vpack.c.b16 %v1201, %v1200
  %v1449 = vpack.c.b16 %v1203, %v1202
  %v1450 = vpack.c.b16 %v1205, %v1204
  %v1451 = vpack.c.b16 %v1207, %v1206
  %v1452 = vpack.c.b16 %v1209, %v1208
  %v1453 = vpack.c.b16 %v1211, %v1210
  %v1454 = vpack.c.b16 %v1213, %v1212
  %v1455 = vpack.c.b16 %v1215, %v1214
  %v1456 = vpack.c.b16 %v1217, %v1216
  %v1457 = vpack.c.b16 %v1219, %v1218
  %v1458 = vpack.c.b16 %v1221, %v1220
  %v1459 = vpack.c.b16 %v1223, %v1222
  %v1460 = vpack.c.b16 %v1225, %v1224
  %v1461 = vpack.c.b16 %v1227, %v1226
  %v1462 = vpack.c.b16 %v1229, %v1228
  %v1463 = vpack.c.b16 %v1231, %v1230
  %v1464 = vpack.c.b16 %v1233, %v1232
  %v1465 = vpack.c.b16 %v1235, %v1234
  %v1466 = vpack.c.b16 %v1237, %v1236
  %v1467 = vpack.c.b16 %v1239, %v1238
  %v1468 = vpack.c.b16 %v1241, %v1240
  %v1469 = vpack.c.b16 %v1243, %v1242
  %v1470 = vpack.c.b16 %v1245, %v1244
  %v1471 = vpack.c.b16 %v1247, %v1246
  %v1472 = vpack.c.b16 %v1249, %v1248
  %v1473 = vpack.c.b16 %v1251, %v1250
  %v1474 = vpack.c.b16 %v1253, %v1252
  %v1475 = vpack.c.b16 %v1255, %v1254
  %v1476 = vpack.c.b16 %v1257, %v1256
  %v1477 = vpack.c.b16 %v1259, %v1258
  %v1478 = vpack.c.b16 %v1261, %v1260
  %v1479 = vpack.c.b16 %v1263, %v1262
  %v1480 = vpack.c.b16 %v1265, %v1264
  %v1481 = vpack.c.b16 %v1267, %v1266
  %v1482 = vpack.c.b16 %v1269, %v1268
  %v1483 = vpack.c.b16 %v1271, %v1270
  %v1484 = vpack.c.b16 %v1273, %v1272
  %v1485 = vpack.c.b16 %v1275, %v1274
  %v1486 = vpack.c.b16 %v1277, %v1276
  %v1487 = vpack.c.b16 %v1279, %v1278
  %v1488 = vpack.c.b16 %v1281, %v1280
  %v1489 = vpack.c.b16 %v1283, %v1282
  %v1490 = vpack.c.b16 %v1285, %v1284
  %v1491 = vpack.c.b16 %v1287, %v1286
  %v1492 = vpack.c.b16 %v1289, %v1288
  %v1493 = vpack.c.b16 %v1291, %v1290
  %v1494 = vpack.c.b16 %v1293, %v1292
  %v1495 = vpack.c.b16 %v1295, %v1294
  %v1496 = vpack.c.b16 %v1297, %v1296
  %v1497 = vpack.c.b16 %v1299, %v1298
  %v1498 = vpack.c.b16 %v1301, %v1300
  %v1499 = vpack.c.b16 %v1303, %v1302
  %vm1696 = vcmask 523264
  %v1698 = vsel %vm1696, %v495, 0
  %1700 = vmatprep.subr.bf16.mxu0 0
  %1701 = vmatpush1.bf16.msra.mxu0 %v1304
  %1702 = vmatprep.subr.bf16.mxu0 0
  %1703 = vmatpush1.bf16.msra.mxu0 %v1305
  %1704 = vmatprep.subr.bf16.mxu0 0
  %1705 = vmatpush1.bf16.msra.mxu0 %v1306
  %1706 = vmatprep.subr.bf16.mxu0 0
  %1707 = vmatpush1.bf16.msra.mxu0 %v1307
  %1708 = vmatprep.subr.bf16.mxu0 0
  %1709 = vmatpush1.bf16.msra.mxu0 %v1308
  %1710 = vmatprep.subr.bf16.mxu0 0
  %1711 = vmatpush1.bf16.msra.mxu0 %v1309
  %1712 = vmatprep.subr.bf16.mxu0 0
  %1713 = vmatpush1.bf16.msra.mxu0 %v1310
  %1714 = vmatprep.subr.bf16.mxu0 0
  %1715 = vmatpush1.bf16.msra.mxu0 %v1311
  %1716 = vmatprep.subr.bf16.mxu0 0
  %1717 = vmatpush1.bf16.msra.mxu0 %v1312
  %1718 = vmatprep.subr.bf16.mxu0 0
  %1719 = vmatpush1.bf16.msra.mxu0 %v1313
  %1720 = vmatprep.subr.bf16.mxu0 0
  %1721 = vmatpush1.bf16.msra.mxu0 %v1314
  %1722 = vmatprep.subr.bf16.mxu0 0
  %1723 = vmatpush1.bf16.msra.mxu0 %v1315
  %1724 = vmatprep.subr.bf16.mxu0 0
  %1725 = vmatpush1.bf16.msra.mxu0 %v1316
  %1726 = vmatprep.subr.bf16.mxu0 0
  %1727 = vmatpush1.bf16.msra.mxu0 %v1317
  %1728 = vmatprep.subr.bf16.mxu0 0
  %1729 = vmatpush1.bf16.msra.mxu0 %v1318
  %1730 = vmatprep.subr.bf16.mxu0 0
  %1731 = vmatpush1.bf16.msra.mxu0 %v1319
  %1732 = vmatprep.mubr.bf16.mxu0 %v472
  %1733 = vmatmul.mubr.bf16.gmra.mrb[0].mxu0 %v471
  %v1734 = vpop.f32.mrb[0].mxu0
  %v1735 = vadd.f32 %v431, %v1734
  %v1736 = vpop.f32.mrb[0].mxu0
  %v1737 = vpop.f32.mrb[0].mxu0
  %v1738 = vpop.f32.mrb[0].mxu0
  %1739 = vdwg.mxu0
  %1740 = vmatprep.subr.bf16.mxu0 0
  %1741 = vmatpush1.bf16.msra.mxu0 %v1320
  %1742 = vmatprep.subr.bf16.mxu0 0
  %1743 = vmatpush1.bf16.msra.mxu0 %v1321
  %1744 = vmatprep.subr.bf16.mxu0 0
  %1745 = vmatpush1.bf16.msra.mxu0 %v1322
  %1746 = vmatprep.subr.bf16.mxu0 0
  %1747 = vmatpush1.bf16.msra.mxu0 %v1323
  %1748 = vmatprep.subr.bf16.mxu0 0
  %1749 = vmatpush1.bf16.msra.mxu0 %v1324
  %1750 = vmatprep.subr.bf16.mxu0 0
  %1751 = vmatpush1.bf16.msra.mxu0 %v1325
  %1752 = vmatprep.subr.bf16.mxu0 0
  %1753 = vmatpush1.bf16.msra.mxu0 %v1326
  %1754 = vmatprep.subr.bf16.mxu0 0
  %1755 = vmatpush1.bf16.msra.mxu0 %v1327
  %1756 = vmatprep.subr.bf16.mxu0 0
  %1757 = vmatpush1.bf16.msra.mxu0 %v1328
  %1758 = vmatprep.subr.bf16.mxu0 0
  %1759 = vmatpush1.bf16.msra.mxu0 %v1329
  %1760 = vmatprep.subr.bf16.mxu0 0
  %1761 = vmatpush1.bf16.msra.mxu0 %v1330
  %1762 = vmatprep.subr.bf16.mxu0 0
  %1763 = vmatpush1.bf16.msra.mxu0 %v1331
  %1764 = vmatprep.subr.bf16.mxu0 0
  %1765 = vmatpush1.bf16.msra.mxu0 %v1332
  %1766 = vmatprep.subr.bf16.mxu0 0
  %1767 = vmatpush1.bf16.msra.mxu0 %v1333
  %1768 = vmatprep.subr.bf16.mxu0 0
  %1769 = vmatpush1.bf16.msra.mxu0 %v1334
  %1770 = vmatprep.subr.bf16.mxu0 0
  %1771 = vmatpush1.bf16.msra.mxu0 %v1335
  %1772 = vmatprep.mubr.bf16.mxu0 %v474
  %1773 = vmatmul.mubr.bf16.gmra.mrb[0].mxu0 %v473
  %v1774 = vpop.f32.mrb[0].mxu0
  %v1775 = vadd.f32 %v1735, %v1774
  %v1776 = vpop.f32.mrb[0].mxu0
  %v1777 = vpop.f32.mrb[0].mxu0
  %v1778 = vpop.f32.mrb[0].mxu0
  %1779 = vdwg.mxu0
  %1780 = vmatprep.subr.bf16.mxu0 0
  %1781 = vmatpush1.bf16.msra.mxu0 %v1336
  %1782 = vmatprep.subr.bf16.mxu0 0
  %1783 = vmatpush1.bf16.msra.mxu0 %v1337
  %1784 = vmatprep.subr.bf16.mxu0 0
  %1785 = vmatpush1.bf16.msra.mxu0 %v1338
  %1786 = vmatprep.subr.bf16.mxu0 0
  %1787 = vmatpush1.bf16.msra.mxu0 %v1339
  %1788 = vmatprep.subr.bf16.mxu0 0
  %1789 = vmatpush1.bf16.msra.mxu0 %v1340
  %1790 = vmatprep.subr.bf16.mxu0 0
  %1791 = vmatpush1.bf16.msra.mxu0 %v1341
  %1792 = vmatprep.subr.bf16.mxu0 0
  %1793 = vmatpush1.bf16.msra.mxu0 %v1342
  %1794 = vmatprep.subr.bf16.mxu0 0
  %1795 = vmatpush1.bf16.msra.mxu0 %v1343
  %1796 = vmatprep.subr.bf16.mxu0 0
  %1797 = vmatpush1.bf16.msra.mxu0 %v1344
  %1798 = vmatprep.subr.bf16.mxu0 0
  %1799 = vmatpush1.bf16.msra.mxu0 %v1345
  %1800 = vmatprep.subr.bf16.mxu0 0
  %1801 = vmatpush1.bf16.msra.mxu0 %v1346
  %1802 = vmatprep.subr.bf16.mxu0 0
  %1803 = vmatpush1.bf16.msra.mxu0 %v1347
  %1804 = vmatprep.subr.bf16.mxu0 0
  %1805 = vmatpush1.bf16.msra.mxu0 %v1348
  %1806 = vmatprep.subr.bf16.mxu0 0
  %1807 = vmatpush1.bf16.msra.mxu0 %v1349
  %1808 = vmatprep.subr.bf16.mxu0 0
  %1809 = vmatpush1.bf16.msra.mxu0 %v1350
  %1810 = vmatprep.subr.bf16.mxu0 0
  %1811 = vmatpush1.bf16.msra.mxu0 %v1351
  %1812 = vmatprep.mubr.bf16.mxu0 %v476
  %1813 = vmatmul.mubr.bf16.gmra.mrb[0].mxu0 %v475
  %v1814 = vpop.f32.mrb[0].mxu0
  %v1815 = vadd.f32 %v1775, %v1814
  %v1816 = vpop.f32.mrb[0].mxu0
  %v1817 = vpop.f32.mrb[0].mxu0
  %v1818 = vpop.f32.mrb[0].mxu0
  %1819 = vdwg.mxu0
  %1820 = vmatprep.subr.bf16.mxu0 0
  %1821 = vmatpush1.bf16.msra.mxu0 %v1352
  %1822 = vmatprep.subr.bf16.mxu0 0
  %1823 = vmatpush1.bf16.msra.mxu0 %v1353
  %1824 = vmatprep.subr.bf16.mxu0 0
  %1825 = vmatpush1.bf16.msra.mxu0 %v1354
  %1826 = vmatprep.subr.bf16.mxu0 0
  %1827 = vmatpush1.bf16.msra.mxu0 %v1355
  %1828 = vmatprep.subr.bf16.mxu0 0
  %1829 = vmatpush1.bf16.msra.mxu0 %v1356
  %1830 = vmatprep.subr.bf16.mxu0 0
  %1831 = vmatpush1.bf16.msra.mxu0 %v1357
  %1832 = vmatprep.subr.bf16.mxu0 0
  %1833 = vmatpush1.bf16.msra.mxu0 %v1358
  %1834 = vmatprep.subr.bf16.mxu0 0
  %1835 = vmatpush1.bf16.msra.mxu0 %v1359
  %1836 = vmatprep.subr.bf16.mxu0 0
  %1837 = vmatpush1.bf16.msra.mxu0 %v1360
  %1838 = vmatprep.subr.bf16.mxu0 0
  %1839 = vmatpush1.bf16.msra.mxu0 %v1361
  %1840 = vmatprep.subr.bf16.mxu0 0
  %1841 = vmatpush1.bf16.msra.mxu0 %v1362
  %1842 = vmatprep.subr.bf16.mxu0 0
  %1843 = vmatpush1.bf16.msra.mxu0 %v1363
  %1844 = vmatprep.subr.bf16.mxu0 0
  %1845 = vmatpush1.bf16.msra.mxu0 %v1364
  %1846 = vmatprep.subr.bf16.mxu0 0
  %1847 = vmatpush1.bf16.msra.mxu0 %v1365
  %1848 = vmatprep.subr.bf16.mxu0 0
  %1849 = vmatpush1.bf16.msra.mxu0 %v1366
  %1850 = vmatprep.subr.bf16.mxu0 0
  %1851 = vmatpush1.bf16.msra.mxu0 %v1367
  %1852 = vmatprep.mubr.bf16.mxu0 %v478
  %1853 = vmatmul.mubr.bf16.gmra.mrb[0].mxu0 %v477
  %v1854 = vpop.f32.mrb[0].mxu0
  %v1855 = vadd.f32 %v1815, %v1854
  %v1856 = vpop.f32.mrb[0].mxu0
  %v1857 = vpop.f32.mrb[0].mxu0
  %v1858 = vpop.f32.mrb[0].mxu0
  %1859 = vdwg.mxu0
  %1860 = vmatprep.subr.bf16.mxu0 0
  %1861 = vmatpush1.bf16.msra.mxu0 %v1368
  %1862 = vmatprep.subr.bf16.mxu0 0
  %1863 = vmatpush1.bf16.msra.mxu0 %v1369
  %1864 = vmatprep.subr.bf16.mxu0 0
  %1865 = vmatpush1.bf16.msra.mxu0 %v1370
  %1866 = vmatprep.subr.bf16.mxu0 0
  %1867 = vmatpush1.bf16.msra.mxu0 %v1371
  %1868 = vmatprep.subr.bf16.mxu0 0
  %1869 = vmatpush1.bf16.msra.mxu0 %v1372
  %1870 = vmatprep.subr.bf16.mxu0 0
  %1871 = vmatpush1.bf16.msra.mxu0 %v1373
  %1872 = vmatprep.subr.bf16.mxu0 0
  %1873 = vmatpush1.bf16.msra.mxu0 %v1374
  %1874 = vmatprep.subr.bf16.mxu0 0
  %1875 = vmatpush1.bf16.msra.mxu0 %v1375
  %1876 = vmatprep.subr.bf16.mxu0 0
  %1877 = vmatpush1.bf16.msra.mxu0 %v1376
  %1878 = vmatprep.subr.bf16.mxu0 0
  %1879 = vmatpush1.bf16.msra.mxu0 %v1377
  %1880 = vmatprep.subr.bf16.mxu0 0
  %1881 = vmatpush1.bf16.msra.mxu0 %v1378
  %1882 = vmatprep.subr.bf16.mxu0 0
  %1883 = vmatpush1.bf16.msra.mxu0 %v1379
  %1884 = vmatprep.subr.bf16.mxu0 0
  %1885 = vmatpush1.bf16.msra.mxu0 %v1380
  %1886 = vmatprep.subr.bf16.mxu0 0
  %1887 = vmatpush1.bf16.msra.mxu0 %v1381
  %1888 = vmatprep.subr.bf16.mxu0 0
  %1889 = vmatpush1.bf16.msra.mxu0 %v1382
  %1890 = vmatprep.subr.bf16.mxu0 0
  %1891 = vmatpush1.bf16.msra.mxu0 %v1383
  %1892 = vmatprep.mubr.bf16.mxu0 %v480
  %1893 = vmatmul.mubr.bf16.gmra.mrb[0].mxu0 %v479
  %v1894 = vpop.f32.mrb[0].mxu0
  %v1895 = vadd.f32 %v1855, %v1894
  %v1896 = vpop.f32.mrb[0].mxu0
  %v1897 = vpop.f32.mrb[0].mxu0
  %v1898 = vpop.f32.mrb[0].mxu0
  %1899 = vdwg.mxu0
  %1900 = vmatprep.subr.bf16.mxu0 0
  %1901 = vmatpush1.bf16.msra.mxu0 %v1384
  %1902 = vmatprep.subr.bf16.mxu0 0
  %1903 = vmatpush1.bf16.msra.mxu0 %v1385
  %1904 = vmatprep.subr.bf16.mxu0 0
  %1905 = vmatpush1.bf16.msra.mxu0 %v1386
  %1906 = vmatprep.subr.bf16.mxu0 0
  %1907 = vmatpush1.bf16.msra.mxu0 %v1387
  %1908 = vmatprep.subr.bf16.mxu0 0
  %1909 = vmatpush1.bf16.msra.mxu0 %v1388
  %1910 = vmatprep.subr.bf16.mxu0 0
  %1911 = vmatpush1.bf16.msra.mxu0 %v1389
  %1912 = vmatprep.subr.bf16.mxu0 0
  %1913 = vmatpush1.bf16.msra.mxu0 %v1390
  %1914 = vmatprep.subr.bf16.mxu0 0
  %1915 = vmatpush1.bf16.msra.mxu0 %v1391
  %1916 = vmatprep.subr.bf16.mxu0 0
  %1917 = vmatpush1.bf16.msra.mxu0 %v1392
  %1918 = vmatprep.subr.bf16.mxu0 0
  %1919 = vmatpush1.bf16.msra.mxu0 %v1393
  %1920 = vmatprep.subr.bf16.mxu0 0
  %1921 = vmatpush1.bf16.msra.mxu0 %v1394
  %1922 = vmatprep.subr.bf16.mxu0 0
  %1923 = vmatpush1.bf16.msra.mxu0 %v1395
  %1924 = vmatprep.subr.bf16.mxu0 0
  %1925 = vmatpush1.bf16.msra.mxu0 %v1396
  %1926 = vmatprep.subr.bf16.mxu0 0
  %1927 = vmatpush1.bf16.msra.mxu0 %v1397
  %1928 = vmatprep.subr.bf16.mxu0 0
  %1929 = vmatpush1.bf16.msra.mxu0 %v1398
  %1930 = vmatprep.subr.bf16.mxu0 0
  %1931 = vmatpush1.bf16.msra.mxu0 %v1399
  %1932 = vmatprep.mubr.bf16.mxu0 %v482
  %1933 = vmatmul.mubr.bf16.gmra.mrb[0].mxu0 %v481
  %v1934 = vpop.f32.mrb[0].mxu0
  %v1935 = vadd.f32 %v1895, %v1934
  %v1936 = vpop.f32.mrb[0].mxu0
  %v1937 = vpop.f32.mrb[0].mxu0
  %v1938 = vpop.f32.mrb[0].mxu0
  %1939 = vdwg.mxu0
  %1940 = vmatprep.subr.bf16.mxu0 0
  %1941 = vmatpush1.bf16.msra.mxu0 %v1400
  %1942 = vmatprep.subr.bf16.mxu0 0
  %1943 = vmatpush1.bf16.msra.mxu0 %v1401
  %1944 = vmatprep.subr.bf16.mxu0 0
  %1945 = vmatpush1.bf16.msra.mxu0 %v1402
  %1946 = vmatprep.subr.bf16.mxu0 0
  %1947 = vmatpush1.bf16.msra.mxu0 %v1403
  %1948 = vmatprep.subr.bf16.mxu0 0
  %1949 = vmatpush1.bf16.msra.mxu0 %v1404
  %1950 = vmatprep.subr.bf16.mxu0 0
  %1951 = vmatpush1.bf16.msra.mxu0 %v1405
  %1952 = vmatprep.subr.bf16.mxu0 0
  %1953 = vmatpush1.bf16.msra.mxu0 %v1406
  %1954 = vmatprep.subr.bf16.mxu0 0
  %1955 = vmatpush1.bf16.msra.mxu0 %v1407
  %1956 = vmatprep.subr.bf16.mxu0 0
  %1957 = vmatpush1.bf16.msra.mxu0 %v1408
  %1958 = vmatprep.subr.bf16.mxu0 0
  %1959 = vmatpush1.bf16.msra.mxu0 %v1409
  %1960 = vmatprep.subr.bf16.mxu0 0
  %1961 = vmatpush1.bf16.msra.mxu0 %v1410
  %1962 = vmatprep.subr.bf16.mxu0 0
  %1963 = vmatpush1.bf16.msra.mxu0 %v1411
  %1964 = vmatprep.subr.bf16.mxu0 0
  %1965 = vmatpush1.bf16.msra.mxu0 %v1412
  %1966 = vmatprep.subr.bf16.mxu0 0
  %1967 = vmatpush1.bf16.msra.mxu0 %v1413
  %1968 = vmatprep.subr.bf16.mxu0 0
  %1969 = vmatpush1.bf16.msra.mxu0 %v1414
  %1970 = vmatprep.subr.bf16.mxu0 0
  %1971 = vmatpush1.bf16.msra.mxu0 %v1415
  %1972 = vmatprep.mubr.bf16.mxu0 %v484
  %1973 = vmatmul.mubr.bf16.gmra.mrb[0].mxu0 %v483
  %v1974 = vpop.f32.mrb[0].mxu0
  %v1975 = vadd.f32 %v1935, %v1974
  %v1976 = vpop.f32.mrb[0].mxu0
  %v1977 = vpop.f32.mrb[0].mxu0
  %v1978 = vpop.f32.mrb[0].mxu0
  %1979 = vdwg.mxu0
  %1980 = vmatprep.subr.bf16.mxu0 0
  %1981 = vmatpush1.bf16.msra.mxu0 %v1416
  %1982 = vmatprep.subr.bf16.mxu0 0
  %1983 = vmatpush1.bf16.msra.mxu0 %v1417
  %1984 = vmatprep.subr.bf16.mxu0 0
  %1985 = vmatpush1.bf16.msra.mxu0 %v1418
  %1986 = vmatprep.subr.bf16.mxu0 0
  %1987 = vmatpush1.bf16.msra.mxu0 %v1419
  %1988 = vmatprep.subr.bf16.mxu0 0
  %1989 = vmatpush1.bf16.msra.mxu0 %v1420
  %1990 = vmatprep.subr.bf16.mxu0 0
  %1991 = vmatpush1.bf16.msra.mxu0 %v1421
  %1992 = vmatprep.subr.bf16.mxu0 0
  %1993 = vmatpush1.bf16.msra.mxu0 %v1422
  %1994 = vmatprep.subr.bf16.mxu0 0
  %1995 = vmatpush1.bf16.msra.mxu0 %v1423
  %1996 = vmatprep.subr.bf16.mxu0 0
  %1997 = vmatpush1.bf16.msra.mxu0 %v1424
  %1998 = vmatprep.subr.bf16.mxu0 0
  %1999 = vmatpush1.bf16.msra.mxu0 %v1425
  %2000 = vmatprep.subr.bf16.mxu0 0
  %2001 = vmatpush1.bf16.msra.mxu0 %v1426
  %2002 = vmatprep.subr.bf16.mxu0 0
  %2003 = vmatpush1.bf16.msra.mxu0 %v1427
  %2004 = vmatprep.subr.bf16.mxu0 0
  %2005 = vmatpush1.bf16.msra.mxu0 %v1428
  %2006 = vmatprep.subr.bf16.mxu0 0
  %2007 = vmatpush1.bf16.msra.mxu0 %v1429
  %2008 = vmatprep.subr.bf16.mxu0 0
  %2009 = vmatpush1.bf16.msra.mxu0 %v1430
  %2010 = vmatprep.subr.bf16.mxu0 0
  %2011 = vmatpush1.bf16.msra.mxu0 %v1431
  %2012 = vmatprep.mubr.bf16.mxu0 %v486
  %2013 = vmatmul.mubr.bf16.gmra.mrb[0].mxu0 %v485
  %v2014 = vpop.f32.mrb[0].mxu0
  %v2015 = vadd.f32 %v1975, %v2014
  %v2016 = vpop.f32.mrb[0].mxu0
  %v2017 = vpop.f32.mrb[0].mxu0
  %v2018 = vpop.f32.mrb[0].mxu0
  %2019 = vdwg.mxu0
  %2020 = vmatprep.subr.bf16.mxu0 0
  %2021 = vmatpush1.bf16.msra.mxu0 %v1432
  %2022 = vmatprep.subr.bf16.mxu0 0
  %2023 = vmatpush1.bf16.msra.mxu0 %v1433
  %2024 = vmatprep.subr.bf16.mxu0 0
  %2025 = vmatpush1.bf16.msra.mxu0 %v1434
  %2026 = vmatprep.subr.bf16.mxu0 0
  %2027 = vmatpush1.bf16.msra.mxu0 %v1435
  %2028 = vmatprep.subr.bf16.mxu0 0
  %2029 = vmatpush1.bf16.msra.mxu0 %v1436
  %2030 = vmatprep.subr.bf16.mxu0 0
  %2031 = vmatpush1.bf16.msra.mxu0 %v1437
  %2032 = vmatprep.subr.bf16.mxu0 0
  %2033 = vmatpush1.bf16.msra.mxu0 %v1438
  %2034 = vmatprep.subr.bf16.mxu0 0
  %2035 = vmatpush1.bf16.msra.mxu0 %v1439
  %2036 = vmatprep.subr.bf16.mxu0 0
  %2037 = vmatpush1.bf16.msra.mxu0 %v1440
  %2038 = vmatprep.subr.bf16.mxu0 0
  %2039 = vmatpush1.bf16.msra.mxu0 %v1441
  %2040 = vmatprep.subr.bf16.mxu0 0
  %2041 = vmatpush1.bf16.msra.mxu0 %v1442
  %2042 = vmatprep.subr.bf16.mxu0 0
  %2043 = vmatpush1.bf16.msra.mxu0 %v1443
  %2044 = vmatprep.subr.bf16.mxu0 0
  %2045 = vmatpush1.bf16.msra.mxu0 %v1444
  %2046 = vmatprep.subr.bf16.mxu0 0
  %2047 = vmatpush1.bf16.msra.mxu0 %v1445
  %2048 = vmatprep.subr.bf16.mxu0 0
  %2049 = vmatpush1.bf16.msra.mxu0 %v1446
  %2050 = vmatprep.subr.bf16.mxu0 0
  %2051 = vmatpush1.bf16.msra.mxu0 %v1447
  %2052 = vmatprep.mubr.bf16.mxu0 %v488
  %2053 = vmatmul.mubr.bf16.gmra.mrb[0].mxu0 %v487
  %v2054 = vpop.f32.mrb[0].mxu0
  %v2055 = vadd.f32 %v2015, %v2054
  %v2056 = vpop.f32.mrb[0].mxu0
  %v2057 = vpop.f32.mrb[0].mxu0
  %v2058 = vpop.f32.mrb[0].mxu0
  %2059 = vdwg.mxu0
  %2060 = vmatprep.subr.bf16.mxu0 0
  %2061 = vmatpush1.bf16.msra.mxu0 %v1448
  %2062 = vmatprep.subr.bf16.mxu0 0
  %2063 = vmatpush1.bf16.msra.mxu0 %v1449
  %2064 = vmatprep.subr.bf16.mxu0 0
  %2065 = vmatpush1.bf16.msra.mxu0 %v1450
  %2066 = vmatprep.subr.bf16.mxu0 0
  %2067 = vmatpush1.bf16.msra.mxu0 %v1451
  %2068 = vmatprep.subr.bf16.mxu0 0
  %2069 = vmatpush1.bf16.msra.mxu0 %v1452
  %2070 = vmatprep.subr.bf16.mxu0 0
  %2071 = vmatpush1.bf16.msra.mxu0 %v1453
  %2072 = vmatprep.subr.bf16.mxu0 0
  %2073 = vmatpush1.bf16.msra.mxu0 %v1454
  %2074 = vmatprep.subr.bf16.mxu0 0
  %2075 = vmatpush1.bf16.msra.mxu0 %v1455
  %2076 = vmatprep.subr.bf16.mxu0 0
  %2077 = vmatpush1.bf16.msra.mxu0 %v1456
  %2078 = vmatprep.subr.bf16.mxu0 0
  %2079 = vmatpush1.bf16.msra.mxu0 %v1457
  %2080 = vmatprep.subr.bf16.mxu0 0
  %2081 = vmatpush1.bf16.msra.mxu0 %v1458
  %2082 = vmatprep.subr.bf16.mxu0 0
  %2083 = vmatpush1.bf16.msra.mxu0 %v1459
  %2084 = vmatprep.subr.bf16.mxu0 0
  %2085 = vmatpush1.bf16.msra.mxu0 %v1460
  %2086 = vmatprep.subr.bf16.mxu0 0
  %2087 = vmatpush1.bf16.msra.mxu0 %v1461
  %2088 = vmatprep.subr.bf16.mxu0 0
  %2089 = vmatpush1.bf16.msra.mxu0 %v1462
  %2090 = vmatprep.subr.bf16.mxu0 0
  %2091 = vmatpush1.bf16.msra.mxu0 %v1463
  %2092 = vmatprep.mubr.bf16.mxu0 %v490
  %2093 = vmatmul.mubr.bf16.gmra.mrb[0].mxu0 %v489
  %v2094 = vpop.f32.mrb[0].mxu0
  %v2095 = vadd.f32 %v2055, %v2094
  %v2096 = vpop.f32.mrb[0].mxu0
  %v2097 = vpop.f32.mrb[0].mxu0
  %v2098 = vpop.f32.mrb[0].mxu0
  %2099 = vdwg.mxu0
  %2100 = vmatprep.subr.bf16.mxu0 0
  %2101 = vmatpush1.bf16.msra.mxu0 %v1464
  %2102 = vmatprep.subr.bf16.mxu0 0
  %2103 = vmatpush1.bf16.msra.mxu0 %v1465
  %2104 = vmatprep.subr.bf16.mxu0 0
  %2105 = vmatpush1.bf16.msra.mxu0 %v1466
  %2106 = vmatprep.subr.bf16.mxu0 0
  %2107 = vmatpush1.bf16.msra.mxu0 %v1467
  %2108 = vmatprep.subr.bf16.mxu0 0
  %2109 = vmatpush1.bf16.msra.mxu0 %v1468
  %2110 = vmatprep.subr.bf16.mxu0 0
  %2111 = vmatpush1.bf16.msra.mxu0 %v1469
  %2112 = vmatprep.subr.bf16.mxu0 0
  %2113 = vmatpush1.bf16.msra.mxu0 %v1470
  %2114 = vmatprep.subr.bf16.mxu0 0
  %2115 = vmatpush1.bf16.msra.mxu0 %v1471
  %2116 = vmatprep.subr.bf16.mxu0 0
  %2117 = vmatpush1.bf16.msra.mxu0 %v1472
  %2118 = vmatprep.subr.bf16.mxu0 0
  %2119 = vmatpush1.bf16.msra.mxu0 %v1473
  %2120 = vmatprep.subr.bf16.mxu0 0
  %2121 = vmatpush1.bf16.msra.mxu0 %v1474
  %2122 = vmatprep.subr.bf16.mxu0 0
  %2123 = vmatpush1.bf16.msra.mxu0 %v1475
  %2124 = vmatprep.subr.bf16.mxu0 0
  %2125 = vmatpush1.bf16.msra.mxu0 %v1476
  %2126 = vmatprep.subr.bf16.mxu0 0
  %2127 = vmatpush1.bf16.msra.mxu0 %v1477
  %2128 = vmatprep.subr.bf16.mxu0 0
  %2129 = vmatpush1.bf16.msra.mxu0 %v1478
  %2130 = vmatprep.subr.bf16.mxu0 0
  %2131 = vmatpush1.bf16.msra.mxu0 %v1479
  %2132 = vmatprep.mubr.bf16.mxu0 %v492
  %2133 = vmatmul.mubr.bf16.gmra.mrb[0].mxu0 %v491
  %v2134 = vpop.f32.mrb[0].mxu0
  %v2135 = vadd.f32 %v2095, %v2134
  %v2136 = vpop.f32.mrb[0].mxu0
  %v2137 = vpop.f32.mrb[0].mxu0
  %v2138 = vpop.f32.mrb[0].mxu0
  %2139 = vdwg.mxu0
  %2140 = vmatprep.subr.bf16.mxu0 0
  %2141 = vmatpush1.bf16.msra.mxu0 %v1480
  %2142 = vmatprep.subr.bf16.mxu0 0
  %2143 = vmatpush1.bf16.msra.mxu0 %v1481
  %2144 = vmatprep.subr.bf16.mxu0 0
  %2145 = vmatpush1.bf16.msra.mxu0 %v1482
  %2146 = vmatprep.subr.bf16.mxu0 0
  %2147 = vmatpush1.bf16.msra.mxu0 %v1483
  %2148 = vmatprep.subr.bf16.mxu0 0
  %2149 = vmatpush1.bf16.msra.mxu0 %v1484
  %2150 = vmatprep.subr.bf16.mxu0 0
  %2151 = vmatpush1.bf16.msra.mxu0 %v1485
  %2152 = vmatprep.subr.bf16.mxu0 0
  %2153 = vmatpush1.bf16.msra.mxu0 %v1486
  %2154 = vmatprep.subr.bf16.mxu0 0
  %2155 = vmatpush1.bf16.msra.mxu0 %v1487
  %2156 = vmatprep.subr.bf16.mxu0 0
  %2157 = vmatpush1.bf16.msra.mxu0 %v1488
  %2158 = vmatprep.subr.bf16.mxu0 0
  %2159 = vmatpush1.bf16.msra.mxu0 %v1489
  %2160 = vmatprep.subr.bf16.mxu0 0
  %2161 = vmatpush1.bf16.msra.mxu0 %v1490
  %2162 = vmatprep.subr.bf16.mxu0 0
  %2163 = vmatpush1.bf16.msra.mxu0 %v1491
  %2164 = vmatprep.subr.bf16.mxu0 0
  %2165 = vmatpush1.bf16.msra.mxu0 %v1492
  %2166 = vmatprep.subr.bf16.mxu0 0
  %2167 = vmatpush1.bf16.msra.mxu0 %v1493
  %2168 = vmatprep.subr.bf16.mxu0 0
  %2169 = vmatpush1.bf16.msra.mxu0 %v1494
  %2170 = vmatprep.subr.bf16.mxu0 0
  %2171 = vmatpush1.bf16.msra.mxu0 %v1495
  %2172 = vmatprep.mubr.bf16.mxu0 %v494
  %2173 = vmatmul.mubr.bf16.gmra.mrb[0].mxu0 %v493
  %v2174 = vpop.f32.mrb[0].mxu0
  %v2175 = vadd.f32 %v2135, %v2174
  %v2176 = vpop.f32.mrb[0].mxu0
  %v2177 = vpop.f32.mrb[0].mxu0
  %v2178 = vpop.f32.mrb[0].mxu0
  %2179 = vdwg.mxu0
  %2180 = vmatprep.subr.bf16.mxu0 0
  %2181 = vmatpush1.bf16.msra.mxu0 %v1496
  %2182 = vmatprep.subr.bf16.mxu0 0
  %2183 = vmatpush1.bf16.msra.mxu0 %v1497
  %2184 = vmatprep.subr.bf16.mxu0 0
  %2185 = vmatpush1.bf16.msra.mxu0 %v1498
  %2186 = vmatprep.subr.bf16.mxu0 0
  %2187 = vmatpush1.bf16.msra.mxu0 %v1499
  %2188 = vmatprep.subr.bf16.mxu0 0
  %2189 = vmatpush1.bf16.msra.mxu0 0
  %2190 = vmatprep.subr.bf16.mxu0 0
  %2191 = vmatpush1.bf16.msra.mxu0 0
  %2192 = vmatprep.subr.bf16.mxu0 0
  %2193 = vmatpush1.bf16.msra.mxu0 0
  %2194 = vmatprep.subr.bf16.mxu0 0
  %2195 = vmatpush1.bf16.msra.mxu0 0
  %2196 = vmatprep.subr.bf16.mxu0 0
  %2197 = vmatpush1.bf16.msra.mxu0 0
  %2198 = vmatprep.subr.bf16.mxu0 0
  %2199 = vmatpush1.bf16.msra.mxu0 0
  %2200 = vmatprep.subr.bf16.mxu0 0
  %2201 = vmatpush1.bf16.msra.mxu0 0
  %2202 = vmatprep.subr.bf16.mxu0 0
  %2203 = vmatpush1.bf16.msra.mxu0 0
  %2204 = vmatprep.subr.bf16.mxu0 0
  %2205 = vmatpush1.bf16.msra.mxu0 0
  %2206 = vmatprep.subr.bf16.mxu0 0
  %2207 = vmatpush1.bf16.msra.mxu0 0
  %2208 = vmatprep.subr.bf16.mxu0 0
  %2209 = vmatpush1.bf16.msra.mxu0 0
  %2210 = vmatprep.subr.bf16.mxu0 0
  %2211 = vmatpush1.bf16.msra.mxu0 0
  %2212 = vmatprep.mubr.bf16.mxu0 0
  %2213 = vmatmul.mubr.bf16.gmra.mrb[0].mxu0 %v1698
  %v2214 = vpop.f32.mrb[0].mxu0
  %v2215 = vadd.f32 %v2175, %v2214
  %v2216 = vpop.f32.mrb[0].mxu0
  %v2217 = vpop.f32.mrb[0].mxu0
  %v2218 = vpop.f32.mrb[0].mxu0
  %2219 = vdwg.mxu0
  %v2220 = vmax.f32 %v2215, 0.0
  %v2221 = vpack.c.bf16 %v2220, %v2220
  %v2222 = vld [vmem:[%s3] sm:$0xf]
  %v2223 = vld [vmem:[%s3 + $0x4] sm:$0xf]
  %v2224 = vld [vmem:[%s3 + $0x8] sm:$0xf]
  %v2225 = vld [vmem:[%s3 + $0xc] sm:$0xf]
  %v2226 = vld [vmem:[%s3 + $0x10] sm:$0xf]
  %v2227 = vld [vmem:[%s3 + $0x14] sm:$0xf]
  %v2228 = vld [vmem:[%s3 + $0x18] sm:$0xf]
  %v2229 = vld [vmem:[%s3 + $0x1c] sm:$0xf]
  %v2230 = vld [vmem:[%s3 + $0x20] sm:$0xf]
  %v2231 = vld [vmem:[%s3 + $0x24] sm:$0xf]
  %v2232 = vld [vmem:[%s3 + $0x28] sm:$0xf]
  %v2233 = vld [vmem:[%s3 + $0x2c] sm:$0xf]
  %v2234 = vld [vmem:[%s3 + $0x30] sm:$0xf]
  %v2235 = vld [vmem:[%s3 + $0x34] sm:$0xf]
  %v2236 = vld [vmem:[%s3 + $0x38] sm:$0xf]
  %v2237 = vld [vmem:[%s3 + $0x3c] sm:$0xf]
  %v2238 = vld [vmem:[%s4] sm:$0x1]
  %v2240 = vlaneseq
  %v2241 = vshrl.u32 %v2240, 7
  %v2242 = vsub.s32 0, %v2241
  %v2243 = vrot.slane %v2238, %v2242
  %v2261 = vunpack.c.l.b16 %v2222
  %v2262 = vunpack.c.l.b16 %v2223
  %v2263 = vunpack.c.l.b16 %v2224
  %v2264 = vunpack.c.l.b16 %v2225
  %v2265 = vunpack.c.l.b16 %v2226
  %v2266 = vunpack.c.l.b16 %v2227
  %v2267 = vunpack.c.l.b16 %v2228
  %v2268 = vunpack.c.l.b16 %v2229
  %v2269 = vunpack.c.l.b16 %v2230
  %v2270 = vunpack.c.l.b16 %v2231
  %v2271 = vunpack.c.l.b16 %v2232
  %v2272 = vunpack.c.l.b16 %v2233
  %v2273 = vunpack.c.l.b16 %v2234
  %v2274 = vunpack.c.l.b16 %v2235
  %v2275 = vunpack.c.l.b16 %v2236
  %v2276 = vunpack.c.l.b16 %v2237
  %v2277 = vpack.c.b16 %v2262, %v2261
  %v2278 = vpack.c.b16 %v2264, %v2263
  %v2279 = vpack.c.b16 %v2266, %v2265
  %v2280 = vpack.c.b16 %v2268, %v2267
  %v2281 = vpack.c.b16 %v2270, %v2269
  %v2282 = vpack.c.b16 %v2272, %v2271
  %v2283 = vpack.c.b16 %v2274, %v2273
  %v2284 = vpack.c.b16 %v2276, %v2275
  %2293 = vmatprep.subr.bf16.mxu0 0
  %2294 = vmatpush1.bf16.msra.mxu0 %v2277
  %2295 = vmatprep.subr.bf16.mxu0 0
  %2296 = vmatpush1.bf16.msra.mxu0 %v2278
  %2297 = vmatprep.subr.bf16.mxu0 0
  %2298 = vmatpush1.bf16.msra.mxu0 %v2279
  %2299 = vmatprep.subr.bf16.mxu0 0
  %2300 = vmatpush1.bf16.msra.mxu0 %v2280
  %2301 = vmatprep.subr.bf16.mxu0 0
  %2302 = vmatpush1.bf16.msra.mxu0 %v2281
  %2303 = vmatprep.subr.bf16.mxu0 0
  %2304 = vmatpush1.bf16.msra.mxu0 %v2282
  %2305 = vmatprep.subr.bf16.mxu0 0
  %2306 = vmatpush1.bf16.msra.mxu0 %v2283
  %2307 = vmatprep.subr.bf16.mxu0 0
  %2308 = vmatpush1.bf16.msra.mxu0 %v2284
  %2309 = vmatprep.subr.bf16.mxu0 0
  %2310 = vmatpush1.bf16.msra.mxu0 0
  %2311 = vmatprep.subr.bf16.mxu0 0
  %2312 = vmatpush1.bf16.msra.mxu0 0
  %2313 = vmatprep.subr.bf16.mxu0 0
  %2314 = vmatpush1.bf16.msra.mxu0 0
  %2315 = vmatprep.subr.bf16.mxu0 0
  %2316 = vmatpush1.bf16.msra.mxu0 0
  %2317 = vmatprep.subr.bf16.mxu0 0
  %2318 = vmatpush1.bf16.msra.mxu0 0
  %2319 = vmatprep.subr.bf16.mxu0 0
  %2320 = vmatpush1.bf16.msra.mxu0 0
  %2321 = vmatprep.subr.bf16.mxu0 0
  %2322 = vmatpush1.bf16.msra.mxu0 0
  %2323 = vmatprep.subr.bf16.mxu0 0
  %2324 = vmatpush1.bf16.msra.mxu0 0
  %2325 = vmatprep.mubr.bf16.mxu0 0
  %2326 = vmatmul.mubr.bf16.gmra.mrb[0].mxu0 %v2221
  %v2327 = vpop.f32.mrb[0].mxu0
  %v2328 = vadd.f32 %v2243, %v2327
  %v2329 = vpop.f32.mrb[0].mxu0
  %v2330 = vpop.f32.mrb[0].mxu0
  %v2331 = vpop.f32.mrb[0].mxu0
  %2332 = vdwg.mxu0
  %2333 = vst [vmem:[%s5] sm:$0xff] %v2328
  // Predicated region
  $region22: #{simple_cnn_forward.5} parent=0 // pred_check
    _
  $region23: #{simple_cnn_forward.5} parent=0 // pred_check_branch
    %2335 = sbr.rel (0) target = $region25
  $region24: #{simple_cnn_forward.5} parent=0 // pred_region
    _
  $region25: #{simple_cnn_forward.5} parent=0 // pred_fallthru
    _
  // Predicated region
  $region26: #{simple_cnn_forward.5} parent=0 // pred_check
    _
  $region27: #{simple_cnn_forward.5} parent=0 // pred_check_branch
    %2337 = sbr.rel (0) target = $region29
  $region28: #{simple_cnn_forward.5} parent=0 // pred_region
    _
  $region29: #{simple_cnn_forward.5} parent=0 // pred_fallthru
    _

</llo_original>
